<compile_context>
chip_gen: v5e
topology: v5e:2x2
jax: 0.10.0
libtpu: 0.0.40
codegen_flags: <defaults>
</compile_context>

<pallas_src>
import math

import jax
import jax.numpy as jnp
from jax.experimental import pallas as pl
from jax.experimental.pallas import tpu as pltpu

LEAKY_SLOPE = 0.01   # PyTorch nn.LeakyReLU default negative_slope
KSIZE = 11
PAD = (KSIZE - 1) // 2
HALO = 8             # sublane-aligned halo (>= PAD); interior writes start at row 8


def _leaky(x):
    # max(x, a*x) == LeakyReLU(x) for 0 < a < 1 (pure VPU, no compare+select)
    return jnp.maximum(x, LEAKY_SLOPE * x)


def _make_conv_attn_kernel(G, B, S, C, emit_weight):
    """Kernel over one chunk of G segments.

    Per chunk: 6x 'same' Conv1d (k=11) as K accumulating matmuls per layer,
    time-softmax, attention-weighted stats, and the estRT_2 MLP.  Outputs are
    lane-dense (segment*batch rows on the lane axis).  With emit_weight=True
    (G must be 1) the softmax weights of the single segment are also emitted.
    """
    if emit_weight:
        assert G == 1
    nseq = G * B
    M = nseq * S

    def kernel(seg_ref,
               w0, b0, w1, b1, w2, b2, w3, b3, w4, b4, w5, b5,
               r2w0, r2b0, r2w1, r2b1, r2w2, r2b2,
               *refs):
        if emit_weight:
            stat_ref, t60_ref, weight_ref, pad_ref = refs
        else:
            stat_ref, t60_ref, pad_ref = refs

        ws = (w0, w1, w2, w3, w4, w5)
        bs = (b0, b1, b2, b3, b4, b5)

        # Zero the halo rows EVERY grid step: under a megacore 'parallel'
        # split core 1 never executes program 0, so a one-time init guard
        # would leave its scratch uninitialised.
        zero = jnp.zeros((nseq, HALO, pad_ref.shape[-1]), pad_ref.dtype)
        pad_ref[:, :HALO, :] = zero
        pad_ref[:, HALO + S:, :] = zero

        # Layer-0 input: bf16 activations into the sublane-aligned interior.
        pad_ref[:, HALO:HALO + S, :C] = seg_ref[...].reshape(nseq, S, C)

        h = None
        for li in range(6):
            cin = ws[li].shape[1]
            cout = ws[li].shape[2]
            # 'same' conv = K accumulating matmuls over shifted windows of the
            # zero-haloed slab (no im2col patches, no lane-shift concat).
            acc = jnp.zeros((M, cout), jnp.float32)
            for k in range(KSIZE):
                r0 = HALO - PAD + k
                win = pad_ref[:, r0:r0 + S, :cin]             # (nseq, S, cin) bf16
                acc = acc + jnp.dot(win.reshape(M, cin), ws[li][k],
                                    preferred_element_type=jnp.float32)
            y = acc + bs[li][...]                             # (M, cout) f32
            if li < 5:
                y = _leaky(y)
                # Next layer's input goes straight back into the slab (bf16),
                # so no full-width f32 activation stays live across layers.
                pad_ref[:, HALO:HALO + S, :cout] = (
                    y.astype(pad_ref.dtype).reshape(nseq, S, cout))
            else:
                h = y.reshape(nseq, S, cout)                  # (nseq, S, C) f32

        # Softmax over time (== nn.Softmax(dim=2) on the NCW tensor).
        m = jnp.max(h, axis=1, keepdims=True)
        e = jnp.exp(h - m)
        denom = jnp.sum(e, axis=1, keepdims=True)
        w_att = e * (1.0 / denom)                             # exact, tiny divide

        # stat = sum_t(weight * DR); DR upcast to f32 for the accumulation.
        x_f32 = seg_ref[...].reshape(nseq, S, C).astype(jnp.float32)
        stat = jnp.sum(w_att * x_f32, axis=1)                 # (nseq, C) f32

        # estRT_2 head folded in (per-segment T60), f32 params.
        hh = _leaky(jnp.dot(stat, r2w0[...],
                            preferred_element_type=jnp.float32) + r2b0[...])
        hh = _leaky(jnp.dot(hh, r2w1[...],
                            preferred_element_type=jnp.float32) + r2b1[...])
        t60 = jnp.dot(hh, r2w2[...],
                      preferred_element_type=jnp.float32) + r2b2[...]   # (nseq, 1)

        # Lane-dense stores: segment*batch rows on the lane axis.
        stat_ref[0] = stat.T                                  # (C, nseq)
        t60_ref[0] = t60.T                                    # (1, nseq)
        if emit_weight:
            weight_ref[...] = w_att                           # (B, S, C) f32

    return kernel


def _vmem_budget_bytes():
    """~70% of the physical per-core VMEM (generation-aware)."""
    cap = None
    try:
        cap = int(pltpu.get_tpu_info().vmem_capacity_bytes)
    except Exception:
        cap = None
    if not cap or cap <= 0:
        cap = 64 * 1024 * 1024    # conservative fallback, safe on every generation
    return int(cap * 0.70)


def _step_vmem_bytes(G, B, S, C, conv_dims, fc_dim):
    """Rough per-grid-step VMEM footprint estimate used to bound G."""
    nseq = G * B
    M = nseq * S
    max_cin = max(ci for ci, _ in conv_dims)
    max_cout = max(co for _, co in conv_dims)
    seg_in = 2 * nseq * S * C * 2                                    # bf16, 2x buffered
    weights = 2 * sum(KSIZE * ci * co * 2 + co * 4 for ci, co in conv_dims)
    heads = 2 * 4 * (C * fc_dim + fc_dim * fc_dim + fc_dim * 1 + 3 * fc_dim + 1)
    slab = nseq * (S + 2 * HALO) * max_cin * 2                       # bf16 scratch
    temps = 3 * M * max_cout * 4                                     # f32 acc/activations
    outs = 2 * 4 * (nseq * (C + 1))
    return seg_in + weights + heads + slab + temps + outs


def _pick_G(n_main, B, S, C, conv_dims, fc_dim, budget):
    # Target >= 512 matmul rows per grid step (fills the 256-wide MXU and
    # amortises per-step overhead), bounded by the VMEM budget and keeping
    # >= 2 chunks so a v7x megacore split stays balanced.
    G = max(1, min(n_main, -(-512 // (B * S))))
    if n_main >= 2:
        G = min(G, -(-n_main // 2))
    while G > 1 and _step_vmem_bytes(G, B, S, C, conv_dims, fc_dim) > budget:
        G -= 1
    return max(G, 1)


def rt_est_sa_forward(DR, segment_size, params, segments_per_step=None):
    """Pallas implementation of RT_est_SA.forward(DR, SegmentSize)."""
    B, T, C = DR.shape
    overlap = segment_size // 10

    segs = []
    if T > segment_size:
        step = segment_size - overlap
        n_iter = int((T - overlap) / step) + 1
        for i in range(n_iter):
            if i == 0:
                segs.append(DR[:, :segment_size, :])
            elif i < n_iter - 1:
                segs.append(DR[:, i * step:i * step + segment_size, :])
            else:
                segs.append(DR[:, -segment_size:, :])
    else:
        n_iter = 1
        segs.append(DR)
    S = segs[0].shape[1]   # NOTE: S a multiple of 8 keeps in-kernel reshapes free.

    # Conv weights stay (K, cin, cout) bf16 (grouped layers are dense
    # block-diagonal); biases and head params stay f32.
    conv_w = [w.astype(jnp.bfloat16) for (w, _) in params["conv"]]
    conv_b = [b.astype(jnp.float32) for (_, b) in params["conv"]]
    conv_dims = [(w.shape[1], w.shape[2]) for w in conv_w]
    max_cin = max(ci for ci, _ in conv_dims)
    fc_dim = params["rt2"][0][0].shape[1]

    const_params = []
    for w, b in zip(conv_w, conv_b):
        const_params += [w, b]
    for (w, b) in params["rt2"]:
        const_params += [w.astype(jnp.float32), b.astype(jnp.float32)]

    const_specs = [pl.BlockSpec(p.shape, lambda c, n=p.ndim: (0,) * n)
                   for p in const_params]

    budget = _vmem_budget_bytes()

    # ---- main call: segments 0 .. n_iter-2, G segments per grid step -------
    n_main = n_iter - 1
    stat_main = t60_main = None
    if n_main > 0:
        if segments_per_step is None:
            G = _pick_G(n_main, B, S, C, conv_dims, fc_dim, budget)
        else:
            G = max(1, min(n_main, int(segments_per_step)))
        n_chunks = -(-n_main // G)
        n_pad = n_chunks * G
        main_segs = segs[:n_main] + [segs[n_main - 1]] * (n_pad - n_main)
        seg_main = jnp.stack(main_segs, axis=0).astype(jnp.bfloat16)  # (n_pad,B,S,C)

        kernel = _make_conv_attn_kernel(G, B, S, C, emit_weight=False)
        stat_t, t60_t = pl.pallas_call(
            kernel,
            grid=(n_chunks,),
            in_specs=[pl.BlockSpec((G, B, S, C), lambda c: (c, 0, 0, 0))]
                     + const_specs,
            out_specs=(
                pl.BlockSpec((1, C, G * B), lambda c: (c, 0, 0)),
                pl.BlockSpec((1, 1, G * B), lambda c: (c, 0, 0)),
            ),
            out_shape=(
                jax.ShapeDtypeStruct((n_chunks, C, G * B), jnp.float32),
                jax.ShapeDtypeStruct((n_chunks, 1, G * B), jnp.float32),
            ),
            scratch_shapes=[pltpu.VMEM((G * B, S + 2 * HALO, max_cin),
                                       jnp.bfloat16)],
            compiler_params=pltpu.CompilerParams(
                dimension_semantics=("parallel",),
                vmem_limit_bytes=budget),
        )(seg_main, *const_params)

        stat_main = (stat_t.transpose(0, 2, 1)
                     .reshape(n_chunks * G * B, C)[: n_main * B]
                     .reshape(n_main, B, C))
        t60_main = (t60_t.reshape(n_chunks * G * B)[: n_main * B]
                    .reshape(n_main, B))

    # ---- last segment: its stat/T60 plus the returned softmax weights ------
    seg_last = segs[-1][None].astype(jnp.bfloat16)                  # (1, B, S, C)
    kernel_w = _make_conv_attn_kernel(1, B, S, C, emit_weight=True)
    stat_l, t60_l, weight = pl.pallas_call(
        kernel_w,
        grid=(1,),
        in_specs=[pl.BlockSpec((1, B, S, C), lambda c: (0, 0, 0, 0))]
                 + const_specs,
        out_specs=(
            pl.BlockSpec((1, C, B), lambda c: (0, 0, 0)),
            pl.BlockSpec((1, 1, B), lambda c: (0, 0, 0)),
            pl.BlockSpec((B, S, C), lambda c: (0, 0, 0)),
        ),
        out_shape=(
            jax.ShapeDtypeStruct((1, C, B), jnp.float32),
            jax.ShapeDtypeStruct((1, 1, B), jnp.float32),
            jax.ShapeDtypeStruct((B, S, C), jnp.float32),
        ),
        scratch_shapes=[pltpu.VMEM((B, S + 2 * HALO, max_cin), jnp.bfloat16)],
        compiler_params=pltpu.CompilerParams(
            dimension_semantics=("arbitrary",),
            vmem_limit_bytes=budget),
    )(seg_last, *const_params)

    stat_last = stat_l[0].T[None]                                   # (1, B, C)
    t60_last = t60_l[0]                                             # (1, B)

    if n_main > 0:
        stat_all = jnp.concatenate([stat_main, stat_last], axis=0)  # (n_iter,B,C)
        t60_all = jnp.concatenate([t60_main, t60_last], axis=0)     # (n_iter,B)
    else:
        stat_all, t60_all = stat_last, t60_last

    # mean over segments + estRT_1: tiny, plain XLA (no epilogue pallas_call).
    stat_mean = jnp.mean(stat_all, axis=0)                          # (B, C)
    (w0, b0), (w1, b1), (w2, b2) = params["rt1"]
    hh = _leaky(stat_mean @ w0 + b0)
    hh = _leaky(hh @ w1 + b1)
    T60 = hh @ w2 + b2                                              # (B, 1)

    # torch.cat of per-segment (B, 1) heads along dim=1 -> (B, n_iter)
    T60_SA = t60_all.T
    return T60, T60_SA, weight, stat_mean


def init_params(key, num_channels, fc_dim):
    """Deterministic synthetic parameters with the module's shapes."""
    C, F = num_channels, fc_dim
    keys = jax.random.split(key, 24)
    ki = 0

    # (cin, cout, groups) for the 6 Conv1d layers of est_weight
    conv_cfg = [(C, 2 * C, C), (2 * C, 4 * C, C), (4 * C, 8 * C, C),
                (8 * C, 4 * C, 1), (4 * C, 2 * C, 1), (2 * C, C, 1)]
    conv = []
    for cin, cout, g in conv_cfg:
        fan_in = (cin // g) * KSIZE
        bound = 1.0 / math.sqrt(fan_in)
        w = jax.random.uniform(keys[ki], (KSIZE, cin, cout), jnp.float32,
                               -bound, bound)
        ki += 1
        if g > 1:
            # block-diagonal mask reproduces grouped-conv connectivity
            mask = jnp.kron(jnp.eye(g, dtype=jnp.float32),
                            jnp.ones((cin // g, cout // g), jnp.float32))
            w = w * mask[None]
        b = jax.random.uniform(keys[ki], (1, cout), jnp.float32, -bound, bound)
        ki += 1
        conv.append((w, b))

    def mlp():
        nonlocal ki
        layers = []
        for din, dout in [(C, F), (F, F), (F, 1)]:
            bound = 1.0 / math.sqrt(din)
            w = jax.random.uniform(keys[ki], (din, dout), jnp.float32,
                                   -bound, bound)
            ki += 1
            b = jax.random.uniform(keys[ki], (1, dout), jnp.float32,
                                   -bound, bound)
            ki += 1
            layers.append((w, b))
        return layers

    rt1 = mlp()
    rt2 = mlp()
    return {"conv": conv, "rt1": rt1, "rt2": rt2}


if __name__ == "__main__":
    key = jax.random.PRNGKey(0)
    k_dr, k_p = jax.random.split(key)
    B, T, C, F = 2, 30, 4, 32
    segment_size = 16                    # -> overlap=1, step=15, 2 segments

    DR = jax.random.normal(k_dr, (B, T, C), dtype=jnp.float32)
    params = init_params(k_p, C, F)

    outs = rt_est_sa_forward(DR, segment_size, params)
    outs = jax.block_until_ready(outs)
    T60, T60_SA, weight, stat_mean = outs
    assert T60.shape == (B, 1)
    assert T60_SA.shape == (B, 2)
    assert weight.shape == (B, segment_size, C)
    assert stat_mean.shape == (B, C)
    print("KERNEL_OK")
</pallas_src>

<mosaic_0001>
module attributes {stable_mosaic.version = 11 : i64} {
  func.func @kernel(%arg0: i32, %arg1: memref<1x2x16x4xbf16, #tpu.memory_space<vmem>>, %arg2: memref<11x4x8xbf16, #tpu.memory_space<vmem>>, %arg3: memref<1x8xf32, #tpu.memory_space<vmem>>, %arg4: memref<11x8x16xbf16, #tpu.memory_space<vmem>>, %arg5: memref<1x16xf32, #tpu.memory_space<vmem>>, %arg6: memref<11x16x32xbf16, #tpu.memory_space<vmem>>, %arg7: memref<1x32xf32, #tpu.memory_space<vmem>>, %arg8: memref<11x32x16xbf16, #tpu.memory_space<vmem>>, %arg9: memref<1x16xf32, #tpu.memory_space<vmem>>, %arg10: memref<11x16x8xbf16, #tpu.memory_space<vmem>>, %arg11: memref<1x8xf32, #tpu.memory_space<vmem>>, %arg12: memref<11x8x4xbf16, #tpu.memory_space<vmem>>, %arg13: memref<1x4xf32, #tpu.memory_space<vmem>>, %arg14: memref<4x32xf32, #tpu.memory_space<vmem>>, %arg15: memref<1x32xf32, #tpu.memory_space<vmem>>, %arg16: memref<32x32xf32, #tpu.memory_space<vmem>>, %arg17: memref<1x32xf32, #tpu.memory_space<vmem>>, %arg18: memref<32x1xf32, #tpu.memory_space<vmem>>, %arg19: memref<1x1xf32, #tpu.memory_space<vmem>>, %arg20: memref<1x4x2xf32, #tpu.memory_space<vmem>>, %arg21: memref<1x1x2xf32, #tpu.memory_space<vmem>>, %arg22: memref<2x32x32xbf16, #tpu.memory_space<vmem>>) attributes {dimension_semantics = [#tpu.dimension_semantics<parallel>], iteration_bounds = array<i64: 1>, scalar_prefetch = 0 : i64, scratch_operands = 1 : i64, tpu.core_type = #tpu.core_type<tc>, window_params = [{transform_indices = @transform_0, window_bounds = array<i64: 1, 2, 16, 4>}, {pipeline_mode = #tpu.pipeline_mode<synchronous>, transform_indices = @transform_1, window_bounds = array<i64: 11, 4, 8>}, {pipeline_mode = #tpu.pipeline_mode<synchronous>, transform_indices = @transform_2, window_bounds = array<i64: 1, 8>}, {pipeline_mode = #tpu.pipeline_mode<synchronous>, transform_indices = @transform_3, window_bounds = array<i64: 11, 8, 16>}, {pipeline_mode = #tpu.pipeline_mode<synchronous>, transform_indices = @transform_4, window_bounds = array<i64: 1, 16>}, {pipeline_mode = #tpu.pipeline_mode<synchronous>, transform_indices = @transform_5, window_bounds = array<i64: 11, 16, 32>}, {pipeline_mode = #tpu.pipeline_mode<synchronous>, transform_indices = @transform_6, window_bounds = array<i64: 1, 32>}, {pipeline_mode = #tpu.pipeline_mode<synchronous>, transform_indices = @transform_7, window_bounds = array<i64: 11, 32, 16>}, {pipeline_mode = #tpu.pipeline_mode<synchronous>, transform_indices = @transform_8, window_bounds = array<i64: 1, 16>}, {pipeline_mode = #tpu.pipeline_mode<synchronous>, transform_indices = @transform_9, window_bounds = array<i64: 11, 16, 8>}, {pipeline_mode = #tpu.pipeline_mode<synchronous>, transform_indices = @transform_10, window_bounds = array<i64: 1, 8>}, {pipeline_mode = #tpu.pipeline_mode<synchronous>, transform_indices = @transform_11, window_bounds = array<i64: 11, 8, 4>}, {pipeline_mode = #tpu.pipeline_mode<synchronous>, transform_indices = @transform_12, window_bounds = array<i64: 1, 4>}, {pipeline_mode = #tpu.pipeline_mode<synchronous>, transform_indices = @transform_13, window_bounds = array<i64: 4, 32>}, {pipeline_mode = #tpu.pipeline_mode<synchronous>, transform_indices = @transform_14, window_bounds = array<i64: 1, 32>}, {pipeline_mode = #tpu.pipeline_mode<synchronous>, transform_indices = @transform_15, window_bounds = array<i64: 32, 32>}, {pipeline_mode = #tpu.pipeline_mode<synchronous>, transform_indices = @transform_16, window_bounds = array<i64: 1, 32>}, {pipeline_mode = #tpu.pipeline_mode<synchronous>, transform_indices = @transform_17, window_bounds = array<i64: 32, 1>}, {pipeline_mode = #tpu.pipeline_mode<synchronous>, transform_indices = @transform_18, window_bounds = array<i64: 1, 1>}, {transform_indices = @transform_19, window_bounds = array<i64: 1, 4, 2>}, {transform_indices = @transform_20, window_bounds = array<i64: 1, 1, 2>}]} {
    %cst = arith.constant 0.000000e+00 : bf16
    %0 = vector.broadcast %cst : bf16 to vector<2x8x32xbf16>
    %c0 = arith.constant 0 : index
    %c0_0 = arith.constant 0 : index
    %c0_1 = arith.constant 0 : index
    %1 = vector.load %arg22[%c0, %c0_0, %c0_1] : memref<2x32x32xbf16, #tpu.memory_space<vmem>>, vector<2x8x32xbf16>
    tpu.vector_store %arg22[%c0, %c0_0, %c0_1], %0 {strides = array<i32>} : memref<2x32x32xbf16, #tpu.memory_space<vmem>>, vector<2x8x32xbf16>,
    %c0_2 = arith.constant 0 : index
    %c24 = arith.constant 24 : index
    %c0_3 = arith.constant 0 : index
    %2 = vector.load %arg22[%c0_2, %c24, %c0_3] : memref<2x32x32xbf16, #tpu.memory_space<vmem>>, vector<2x8x32xbf16>
    tpu.vector_store %arg22[%c0_2, %c24, %c0_3], %0 {strides = array<i32>} : memref<2x32x32xbf16, #tpu.memory_space<vmem>>, vector<2x8x32xbf16>,
    %c0_4 = arith.constant 0 : index
    %c0_5 = arith.constant 0 : index
    %c0_6 = arith.constant 0 : index
    %c0_7 = arith.constant 0 : index
    %3 = vector.load %arg1[%c0_4, %c0_5, %c0_6, %c0_7] : memref<1x2x16x4xbf16, #tpu.memory_space<vmem>>, vector<1x2x16x4xbf16>
    %4 = vector.shape_cast %3 : vector<1x2x16x4xbf16> to vector<2x16x4xbf16>
    %c0_8 = arith.constant 0 : index
    %c8 = arith.constant 8 : index
    %c0_9 = arith.constant 0 : index
    %5 = vector.load %arg22[%c0_8, %c8, %c0_9] : memref<2x32x32xbf16, #tpu.memory_space<vmem>>, vector<2x16x4xbf16>
    tpu.vector_store %arg22[%c0_8, %c8, %c0_9], %4 {strides = array<i32>} : memref<2x32x32xbf16, #tpu.memory_space<vmem>>, vector<2x16x4xbf16>,
    %cst_10 = arith.constant 0.000000e+00 : f32
    %6 = vector.broadcast %cst_10 : f32 to vector<32x8xf32>
    %c0_11 = arith.constant 0 : index
    %c3 = arith.constant 3 : index
    %c0_12 = arith.constant 0 : index
    %7 = vector.load %arg22[%c0_11, %c3, %c0_12] : memref<2x32x32xbf16, #tpu.memory_space<vmem>>, vector<2x16x4xbf16>
    %8 = vector.shape_cast %7 : vector<2x16x4xbf16> to vector<32x4xbf16>
    %c0_13 = arith.constant 0 : index
    %c0_14 = arith.constant 0 : index
    %c0_15 = arith.constant 0 : index
    %9 = vector.load %arg2[%c0_13, %c0_14, %c0_15] : memref<11x4x8xbf16, #tpu.memory_space<vmem>>, vector<1x4x8xbf16>
    %10 = vector.shape_cast %9 : vector<1x4x8xbf16> to vector<4x8xbf16>
    %cst_16 = arith.constant dense<0.000000e+00> : vector<32x8xf32>
    %11 = tpu.matmul %8, %10, %cst_16 {dimension_numbers = #tpu.dot_dimension_numbers<[1], [0], [0], [1], [0, 0, 1, 1], [], []>} : vector<32x4xbf16>, vector<4x8xbf16>, vector<32x8xf32> -> vector<32x8xf32>
    %12 = arith.addf %6, %11 : vector<32x8xf32>
    %c0_17 = arith.constant 0 : index
    %c4 = arith.constant 4 : index
    %c0_18 = arith.constant 0 : index
    %13 = vector.load %arg22[%c0_17, %c4, %c0_18] : memref<2x32x32xbf16, #tpu.memory_space<vmem>>, vector<2x16x4xbf16>
    %14 = vector.shape_cast %13 : vector<2x16x4xbf16> to vector<32x4xbf16>
    %c1 = arith.constant 1 : index
    %c0_19 = arith.constant 0 : index
    %c0_20 = arith.constant 0 : index
    %15 = vector.load %arg2[%c1, %c0_19, %c0_20] : memref<11x4x8xbf16, #tpu.memory_space<vmem>>, vector<1x4x8xbf16>
    %16 = vector.shape_cast %15 : vector<1x4x8xbf16> to vector<4x8xbf16>
    %cst_21 = arith.constant dense<0.000000e+00> : vector<32x8xf32>
    %17 = tpu.matmul %14, %16, %cst_21 {dimension_numbers = #tpu.dot_dimension_numbers<[1], [0], [0], [1], [0, 0, 1, 1], [], []>} : vector<32x4xbf16>, vector<4x8xbf16>, vector<32x8xf32> -> vector<32x8xf32>
    %18 = arith.addf %12, %17 : vector<32x8xf32>
    %c0_22 = arith.constant 0 : index
    %c5 = arith.constant 5 : index
    %c0_23 = arith.constant 0 : index
    %19 = vector.load %arg22[%c0_22, %c5, %c0_23] : memref<2x32x32xbf16, #tpu.memory_space<vmem>>, vector<2x16x4xbf16>
    %20 = vector.shape_cast %19 : vector<2x16x4xbf16> to vector<32x4xbf16>
    %c2 = arith.constant 2 : index
    %c0_24 = arith.constant 0 : index
    %c0_25 = arith.constant 0 : index
    %21 = vector.load %arg2[%c2, %c0_24, %c0_25] : memref<11x4x8xbf16, #tpu.memory_space<vmem>>, vector<1x4x8xbf16>
    %22 = vector.shape_cast %21 : vector<1x4x8xbf16> to vector<4x8xbf16>
    %cst_26 = arith.constant dense<0.000000e+00> : vector<32x8xf32>
    %23 = tpu.matmul %20, %22, %cst_26 {dimension_numbers = #tpu.dot_dimension_numbers<[1], [0], [0], [1], [0, 0, 1, 1], [], []>} : vector<32x4xbf16>, vector<4x8xbf16>, vector<32x8xf32> -> vector<32x8xf32>
    %24 = arith.addf %18, %23 : vector<32x8xf32>
    %c0_27 = arith.constant 0 : index
    %c6 = arith.constant 6 : index
    %c0_28 = arith.constant 0 : index
    %25 = vector.load %arg22[%c0_27, %c6, %c0_28] : memref<2x32x32xbf16, #tpu.memory_space<vmem>>, vector<2x16x4xbf16>
    %26 = vector.shape_cast %25 : vector<2x16x4xbf16> to vector<32x4xbf16>
    %c3_29 = arith.constant 3 : index
    %c0_30 = arith.constant 0 : index
    %c0_31 = arith.constant 0 : index
    %27 = vector.load %arg2[%c3_29, %c0_30, %c0_31] : memref<11x4x8xbf16, #tpu.memory_space<vmem>>, vector<1x4x8xbf16>
    %28 = vector.shape_cast %27 : vector<1x4x8xbf16> to vector<4x8xbf16>
    %cst_32 = arith.constant dense<0.000000e+00> : vector<32x8xf32>
    %29 = tpu.matmul %26, %28, %cst_32 {dimension_numbers = #tpu.dot_dimension_numbers<[1], [0], [0], [1], [0, 0, 1, 1], [], []>} : vector<32x4xbf16>, vector<4x8xbf16>, vector<32x8xf32> -> vector<32x8xf32>
    %30 = arith.addf %24, %29 : vector<32x8xf32>
    %c0_33 = arith.constant 0 : index
    %c7 = arith.constant 7 : index
    %c0_34 = arith.constant 0 : index
    %31 = vector.load %arg22[%c0_33, %c7, %c0_34] : memref<2x32x32xbf16, #tpu.memory_space<vmem>>, vector<2x16x4xbf16>
    %32 = vector.shape_cast %31 : vector<2x16x4xbf16> to vector<32x4xbf16>
    %c4_35 = arith.constant 4 : index
    %c0_36 = arith.constant 0 : index
    %c0_37 = arith.constant 0 : index
    %33 = vector.load %arg2[%c4_35, %c0_36, %c0_37] : memref<11x4x8xbf16, #tpu.memory_space<vmem>>, vector<1x4x8xbf16>
    %34 = vector.shape_cast %33 : vector<1x4x8xbf16> to vector<4x8xbf16>
    %cst_38 = arith.constant dense<0.000000e+00> : vector<32x8xf32>
    %35 = tpu.matmul %32, %34, %cst_38 {dimension_numbers = #tpu.dot_dimension_numbers<[1], [0], [0], [1], [0, 0, 1, 1], [], []>} : vector<32x4xbf16>, vector<4x8xbf16>, vector<32x8xf32> -> vector<32x8xf32>
    %36 = arith.addf %30, %35 : vector<32x8xf32>
    %c0_39 = arith.constant 0 : index
    %c8_40 = arith.constant 8 : index
    %c0_41 = arith.constant 0 : index
    %37 = vector.load %arg22[%c0_39, %c8_40, %c0_41] : memref<2x32x32xbf16, #tpu.memory_space<vmem>>, vector<2x16x4xbf16>
    %38 = vector.shape_cast %37 : vector<2x16x4xbf16> to vector<32x4xbf16>
    %c5_42 = arith.constant 5 : index
    %c0_43 = arith.constant 0 : index
    %c0_44 = arith.constant 0 : index
    %39 = vector.load %arg2[%c5_42, %c0_43, %c0_44] : memref<11x4x8xbf16, #tpu.memory_space<vmem>>, vector<1x4x8xbf16>
    %40 = vector.shape_cast %39 : vector<1x4x8xbf16> to vector<4x8xbf16>
    %cst_45 = arith.constant dense<0.000000e+00> : vector<32x8xf32>
    %41 = tpu.matmul %38, %40, %cst_45 {dimension_numbers = #tpu.dot_dimension_numbers<[1], [0], [0], [1], [0, 0, 1, 1], [], []>} : vector<32x4xbf16>, vector<4x8xbf16>, vector<32x8xf32> -> vector<32x8xf32>
    %42 = arith.addf %36, %41 : vector<32x8xf32>
    %c0_46 = arith.constant 0 : index
    %c9 = arith.constant 9 : index
    %c0_47 = arith.constant 0 : index
    %43 = vector.load %arg22[%c0_46, %c9, %c0_47] : memref<2x32x32xbf16, #tpu.memory_space<vmem>>, vector<2x16x4xbf16>
    %44 = vector.shape_cast %43 : vector<2x16x4xbf16> to vector<32x4xbf16>
    %c6_48 = arith.constant 6 : index
    %c0_49 = arith.constant 0 : index
    %c0_50 = arith.constant 0 : index
    %45 = vector.load %arg2[%c6_48, %c0_49, %c0_50] : memref<11x4x8xbf16, #tpu.memory_space<vmem>>, vector<1x4x8xbf16>
    %46 = vector.shape_cast %45 : vector<1x4x8xbf16> to vector<4x8xbf16>
    %cst_51 = arith.constant dense<0.000000e+00> : vector<32x8xf32>
    %47 = tpu.matmul %44, %46, %cst_51 {dimension_numbers = #tpu.dot_dimension_numbers<[1], [0], [0], [1], [0, 0, 1, 1], [], []>} : vector<32x4xbf16>, vector<4x8xbf16>, vector<32x8xf32> -> vector<32x8xf32>
    %48 = arith.addf %42, %47 : vector<32x8xf32>
    %c0_52 = arith.constant 0 : index
    %c10 = arith.constant 10 : index
    %c0_53 = arith.constant 0 : index
    %49 = vector.load %arg22[%c0_52, %c10, %c0_53] : memref<2x32x32xbf16, #tpu.memory_space<vmem>>, vector<2x16x4xbf16>
    %50 = vector.shape_cast %49 : vector<2x16x4xbf16> to vector<32x4xbf16>
    %c7_54 = arith.constant 7 : index
    %c0_55 = arith.constant 0 : index
    %c0_56 = arith.constant 0 : index
    %51 = vector.load %arg2[%c7_54, %c0_55, %c0_56] : memref<11x4x8xbf16, #tpu.memory_space<vmem>>, vector<1x4x8xbf16>
    %52 = vector.shape_cast %51 : vector<1x4x8xbf16> to vector<4x8xbf16>
    %cst_57 = arith.constant dense<0.000000e+00> : vector<32x8xf32>
    %53 = tpu.matmul %50, %52, %cst_57 {dimension_numbers = #tpu.dot_dimension_numbers<[1], [0], [0], [1], [0, 0, 1, 1], [], []>} : vector<32x4xbf16>, vector<4x8xbf16>, vector<32x8xf32> -> vector<32x8xf32>
    %54 = arith.addf %48, %53 : vector<32x8xf32>
    %c0_58 = arith.constant 0 : index
    %c11 = arith.constant 11 : index
    %c0_59 = arith.constant 0 : index
    %55 = vector.load %arg22[%c0_58, %c11, %c0_59] : memref<2x32x32xbf16, #tpu.memory_space<vmem>>, vector<2x16x4xbf16>
    %56 = vector.shape_cast %55 : vector<2x16x4xbf16> to vector<32x4xbf16>
    %c8_60 = arith.constant 8 : index
    %c0_61 = arith.constant 0 : index
    %c0_62 = arith.constant 0 : index
    %57 = vector.load %arg2[%c8_60, %c0_61, %c0_62] : memref<11x4x8xbf16, #tpu.memory_space<vmem>>, vector<1x4x8xbf16>
    %58 = vector.shape_cast %57 : vector<1x4x8xbf16> to vector<4x8xbf16>
    %cst_63 = arith.constant dense<0.000000e+00> : vector<32x8xf32>
    %59 = tpu.matmul %56, %58, %cst_63 {dimension_numbers = #tpu.dot_dimension_numbers<[1], [0], [0], [1], [0, 0, 1, 1], [], []>} : vector<32x4xbf16>, vector<4x8xbf16>, vector<32x8xf32> -> vector<32x8xf32>
    %60 = arith.addf %54, %59 : vector<32x8xf32>
    %c0_64 = arith.constant 0 : index
    %c12 = arith.constant 12 : index
    %c0_65 = arith.constant 0 : index
    %61 = vector.load %arg22[%c0_64, %c12, %c0_65] : memref<2x32x32xbf16, #tpu.memory_space<vmem>>, vector<2x16x4xbf16>
    %62 = vector.shape_cast %61 : vector<2x16x4xbf16> to vector<32x4xbf16>
    %c9_66 = arith.constant 9 : index
    %c0_67 = arith.constant 0 : index
    %c0_68 = arith.constant 0 : index
    %63 = vector.load %arg2[%c9_66, %c0_67, %c0_68] : memref<11x4x8xbf16, #tpu.memory_space<vmem>>, vector<1x4x8xbf16>
    %64 = vector.shape_cast %63 : vector<1x4x8xbf16> to vector<4x8xbf16>
    %cst_69 = arith.constant dense<0.000000e+00> : vector<32x8xf32>
    %65 = tpu.matmul %62, %64, %cst_69 {dimension_numbers = #tpu.dot_dimension_numbers<[1], [0], [0], [1], [0, 0, 1, 1], [], []>} : vector<32x4xbf16>, vector<4x8xbf16>, vector<32x8xf32> -> vector<32x8xf32>
    %66 = arith.addf %60, %65 : vector<32x8xf32>
    %c0_70 = arith.constant 0 : index
    %c13 = arith.constant 13 : index
    %c0_71 = arith.constant 0 : index
    %67 = vector.load %arg22[%c0_70, %c13, %c0_71] : memref<2x32x32xbf16, #tpu.memory_space<vmem>>, vector<2x16x4xbf16>
    %68 = vector.shape_cast %67 : vector<2x16x4xbf16> to vector<32x4xbf16>
    %c10_72 = arith.constant 10 : index
    %c0_73 = arith.constant 0 : index
    %c0_74 = arith.constant 0 : index
    %69 = vector.load %arg2[%c10_72, %c0_73, %c0_74] : memref<11x4x8xbf16, #tpu.memory_space<vmem>>, vector<1x4x8xbf16>
    %70 = vector.shape_cast %69 : vector<1x4x8xbf16> to vector<4x8xbf16>
    %cst_75 = arith.constant dense<0.000000e+00> : vector<32x8xf32>
    %71 = tpu.matmul %68, %70, %cst_75 {dimension_numbers = #tpu.dot_dimension_numbers<[1], [0], [0], [1], [0, 0, 1, 1], [], []>} : vector<32x4xbf16>, vector<4x8xbf16>, vector<32x8xf32> -> vector<32x8xf32>
    %72 = arith.addf %66, %71 : vector<32x8xf32>
    %c0_76 = arith.constant 0 : index
    %c0_77 = arith.constant 0 : index
    %73 = vector.load %arg3[%c0_76, %c0_77] : memref<1x8xf32, #tpu.memory_space<vmem>>, vector<1x8xf32>
    %74 = vector.broadcast %73 : vector<1x8xf32> to vector<32x8xf32>
    %75 = arith.addf %72, %74 : vector<32x8xf32>
    %cst_78 = arith.constant 0.00999999977 : f32
    %76 = vector.broadcast %cst_78 : f32 to vector<32x8xf32>
    %77 = arith.mulf %76, %75 : vector<32x8xf32>
    %78 = arith.maximumf %75, %77 : vector<32x8xf32>
    %79 = arith.truncf %78 : vector<32x8xf32> to vector<32x8xbf16>
    %80 = vector.shape_cast %79 : vector<32x8xbf16> to vector<2x16x8xbf16>
    %c0_79 = arith.constant 0 : index
    %c8_80 = arith.constant 8 : index
    %c0_81 = arith.constant 0 : index
    %81 = vector.load %arg22[%c0_79, %c8_80, %c0_81] : memref<2x32x32xbf16, #tpu.memory_space<vmem>>, vector<2x16x8xbf16>
    tpu.vector_store %arg22[%c0_79, %c8_80, %c0_81], %80 {strides = array<i32>} : memref<2x32x32xbf16, #tpu.memory_space<vmem>>, vector<2x16x8xbf16>,
    %cst_82 = arith.constant 0.000000e+00 : f32
    %82 = vector.broadcast %cst_82 : f32 to vector<32x16xf32>
    %c0_83 = arith.constant 0 : index
    %c3_84 = arith.constant 3 : index
    %c0_85 = arith.constant 0 : index
    %83 = vector.load %arg22[%c0_83, %c3_84, %c0_85] : memref<2x32x32xbf16, #tpu.memory_space<vmem>>, vector<2x16x8xbf16>
    %84 = vector.shape_cast %83 : vector<2x16x8xbf16> to vector<32x8xbf16>
    %c0_86 = arith.constant 0 : index
    %c0_87 = arith.constant 0 : index
    %c0_88 = arith.constant 0 : index
    %85 = vector.load %arg4[%c0_86, %c0_87, %c0_88] : memref<11x8x16xbf16, #tpu.memory_space<vmem>>, vector<1x8x16xbf16>
    %86 = vector.shape_cast %85 : vector<1x8x16xbf16> to vector<8x16xbf16>
    %cst_89 = arith.constant dense<0.000000e+00> : vector<32x16xf32>
    %87 = tpu.matmul %84, %86, %cst_89 {dimension_numbers = #tpu.dot_dimension_numbers<[1], [0], [0], [1], [0, 0, 1, 1], [], []>} : vector<32x8xbf16>, vector<8x16xbf16>, vector<32x16xf32> -> vector<32x16xf32>
    %88 = arith.addf %82, %87 : vector<32x16xf32>
    %c0_90 = arith.constant 0 : index
    %c4_91 = arith.constant 4 : index
    %c0_92 = arith.constant 0 : index
    %89 = vector.load %arg22[%c0_90, %c4_91, %c0_92] : memref<2x32x32xbf16, #tpu.memory_space<vmem>>, vector<2x16x8xbf16>
    %90 = vector.shape_cast %89 : vector<2x16x8xbf16> to vector<32x8xbf16>
    %c1_93 = arith.constant 1 : index
    %c0_94 = arith.constant 0 : index
    %c0_95 = arith.constant 0 : index
    %91 = vector.load %arg4[%c1_93, %c0_94, %c0_95] : memref<11x8x16xbf16, #tpu.memory_space<vmem>>, vector<1x8x16xbf16>
    %92 = vector.shape_cast %91 : vector<1x8x16xbf16> to vector<8x16xbf16>
    %cst_96 = arith.constant dense<0.000000e+00> : vector<32x16xf32>
    %93 = tpu.matmul %90, %92, %cst_96 {dimension_numbers = #tpu.dot_dimension_numbers<[1], [0], [0], [1], [0, 0, 1, 1], [], []>} : vector<32x8xbf16>, vector<8x16xbf16>, vector<32x16xf32> -> vector<32x16xf32>
    %94 = arith.addf %88, %93 : vector<32x16xf32>
    %c0_97 = arith.constant 0 : index
    %c5_98 = arith.constant 5 : index
    %c0_99 = arith.constant 0 : index
    %95 = vector.load %arg22[%c0_97, %c5_98, %c0_99] : memref<2x32x32xbf16, #tpu.memory_space<vmem>>, vector<2x16x8xbf16>
    %96 = vector.shape_cast %95 : vector<2x16x8xbf16> to vector<32x8xbf16>
    %c2_100 = arith.constant 2 : index
    %c0_101 = arith.constant 0 : index
    %c0_102 = arith.constant 0 : index
    %97 = vector.load %arg4[%c2_100, %c0_101, %c0_102] : memref<11x8x16xbf16, #tpu.memory_space<vmem>>, vector<1x8x16xbf16>
    %98 = vector.shape_cast %97 : vector<1x8x16xbf16> to vector<8x16xbf16>
    %cst_103 = arith.constant dense<0.000000e+00> : vector<32x16xf32>
    %99 = tpu.matmul %96, %98, %cst_103 {dimension_numbers = #tpu.dot_dimension_numbers<[1], [0], [0], [1], [0, 0, 1, 1], [], []>} : vector<32x8xbf16>, vector<8x16xbf16>, vector<32x16xf32> -> vector<32x16xf32>
    %100 = arith.addf %94, %99 : vector<32x16xf32>
    %c0_104 = arith.constant 0 : index
    %c6_105 = arith.constant 6 : index
    %c0_106 = arith.constant 0 : index
    %101 = vector.load %arg22[%c0_104, %c6_105, %c0_106] : memref<2x32x32xbf16, #tpu.memory_space<vmem>>, vector<2x16x8xbf16>
    %102 = vector.shape_cast %101 : vector<2x16x8xbf16> to vector<32x8xbf16>
    %c3_107 = arith.constant 3 : index
    %c0_108 = arith.constant 0 : index
    %c0_109 = arith.constant 0 : index
    %103 = vector.load %arg4[%c3_107, %c0_108, %c0_109] : memref<11x8x16xbf16, #tpu.memory_space<vmem>>, vector<1x8x16xbf16>
    %104 = vector.shape_cast %103 : vector<1x8x16xbf16> to vector<8x16xbf16>
    %cst_110 = arith.constant dense<0.000000e+00> : vector<32x16xf32>
    %105 = tpu.matmul %102, %104, %cst_110 {dimension_numbers = #tpu.dot_dimension_numbers<[1], [0], [0], [1], [0, 0, 1, 1], [], []>} : vector<32x8xbf16>, vector<8x16xbf16>, vector<32x16xf32> -> vector<32x16xf32>
    %106 = arith.addf %100, %105 : vector<32x16xf32>
    %c0_111 = arith.constant 0 : index
    %c7_112 = arith.constant 7 : index
    %c0_113 = arith.constant 0 : index
    %107 = vector.load %arg22[%c0_111, %c7_112, %c0_113] : memref<2x32x32xbf16, #tpu.memory_space<vmem>>, vector<2x16x8xbf16>
    %108 = vector.shape_cast %107 : vector<2x16x8xbf16> to vector<32x8xbf16>
    %c4_114 = arith.constant 4 : index
    %c0_115 = arith.constant 0 : index
    %c0_116 = arith.constant 0 : index
    %109 = vector.load %arg4[%c4_114, %c0_115, %c0_116] : memref<11x8x16xbf16, #tpu.memory_space<vmem>>, vector<1x8x16xbf16>
    %110 = vector.shape_cast %109 : vector<1x8x16xbf16> to vector<8x16xbf16>
    %cst_117 = arith.constant dense<0.000000e+00> : vector<32x16xf32>
    %111 = tpu.matmul %108, %110, %cst_117 {dimension_numbers = #tpu.dot_dimension_numbers<[1], [0], [0], [1], [0, 0, 1, 1], [], []>} : vector<32x8xbf16>, vector<8x16xbf16>, vector<32x16xf32> -> vector<32x16xf32>
    %112 = arith.addf %106, %111 : vector<32x16xf32>
    %c0_118 = arith.constant 0 : index
    %c8_119 = arith.constant 8 : index
    %c0_120 = arith.constant 0 : index
    %113 = vector.load %arg22[%c0_118, %c8_119, %c0_120] : memref<2x32x32xbf16, #tpu.memory_space<vmem>>, vector<2x16x8xbf16>
    %114 = vector.shape_cast %113 : vector<2x16x8xbf16> to vector<32x8xbf16>
    %c5_121 = arith.constant 5 : index
    %c0_122 = arith.constant 0 : index
    %c0_123 = arith.constant 0 : index
    %115 = vector.load %arg4[%c5_121, %c0_122, %c0_123] : memref<11x8x16xbf16, #tpu.memory_space<vmem>>, vector<1x8x16xbf16>
    %116 = vector.shape_cast %115 : vector<1x8x16xbf16> to vector<8x16xbf16>
    %cst_124 = arith.constant dense<0.000000e+00> : vector<32x16xf32>
    %117 = tpu.matmul %114, %116, %cst_124 {dimension_numbers = #tpu.dot_dimension_numbers<[1], [0], [0], [1], [0, 0, 1, 1], [], []>} : vector<32x8xbf16>, vector<8x16xbf16>, vector<32x16xf32> -> vector<32x16xf32>
    %118 = arith.addf %112, %117 : vector<32x16xf32>
    %c0_125 = arith.constant 0 : index
    %c9_126 = arith.constant 9 : index
    %c0_127 = arith.constant 0 : index
    %119 = vector.load %arg22[%c0_125, %c9_126, %c0_127] : memref<2x32x32xbf16, #tpu.memory_space<vmem>>, vector<2x16x8xbf16>
    %120 = vector.shape_cast %119 : vector<2x16x8xbf16> to vector<32x8xbf16>
    %c6_128 = arith.constant 6 : index
    %c0_129 = arith.constant 0 : index
    %c0_130 = arith.constant 0 : index
    %121 = vector.load %arg4[%c6_128, %c0_129, %c0_130] : memref<11x8x16xbf16, #tpu.memory_space<vmem>>, vector<1x8x16xbf16>
    %122 = vector.shape_cast %121 : vector<1x8x16xbf16> to vector<8x16xbf16>
    %cst_131 = arith.constant dense<0.000000e+00> : vector<32x16xf32>
    %123 = tpu.matmul %120, %122, %cst_131 {dimension_numbers = #tpu.dot_dimension_numbers<[1], [0], [0], [1], [0, 0, 1, 1], [], []>} : vector<32x8xbf16>, vector<8x16xbf16>, vector<32x16xf32> -> vector<32x16xf32>
    %124 = arith.addf %118, %123 : vector<32x16xf32>
    %c0_132 = arith.constant 0 : index
    %c10_133 = arith.constant 10 : index
    %c0_134 = arith.constant 0 : index
    %125 = vector.load %arg22[%c0_132, %c10_133, %c0_134] : memref<2x32x32xbf16, #tpu.memory_space<vmem>>, vector<2x16x8xbf16>
    %126 = vector.shape_cast %125 : vector<2x16x8xbf16> to vector<32x8xbf16>
    %c7_135 = arith.constant 7 : index
    %c0_136 = arith.constant 0 : index
    %c0_137 = arith.constant 0 : index
    %127 = vector.load %arg4[%c7_135, %c0_136, %c0_137] : memref<11x8x16xbf16, #tpu.memory_space<vmem>>, vector<1x8x16xbf16>
    %128 = vector.shape_cast %127 : vector<1x8x16xbf16> to vector<8x16xbf16>
    %cst_138 = arith.constant dense<0.000000e+00> : vector<32x16xf32>
    %129 = tpu.matmul %126, %128, %cst_138 {dimension_numbers = #tpu.dot_dimension_numbers<[1], [0], [0], [1], [0, 0, 1, 1], [], []>} : vector<32x8xbf16>, vector<8x16xbf16>, vector<32x16xf32> -> vector<32x16xf32>
    %130 = arith.addf %124, %129 : vector<32x16xf32>
    %c0_139 = arith.constant 0 : index
    %c11_140 = arith.constant 11 : index
    %c0_141 = arith.constant 0 : index
    %131 = vector.load %arg22[%c0_139, %c11_140, %c0_141] : memref<2x32x32xbf16, #tpu.memory_space<vmem>>, vector<2x16x8xbf16>
    %132 = vector.shape_cast %131 : vector<2x16x8xbf16> to vector<32x8xbf16>
    %c8_142 = arith.constant 8 : index
    %c0_143 = arith.constant 0 : index
    %c0_144 = arith.constant 0 : index
    %133 = vector.load %arg4[%c8_142, %c0_143, %c0_144] : memref<11x8x16xbf16, #tpu.memory_space<vmem>>, vector<1x8x16xbf16>
    %134 = vector.shape_cast %133 : vector<1x8x16xbf16> to vector<8x16xbf16>
    %cst_145 = arith.constant dense<0.000000e+00> : vector<32x16xf32>
    %135 = tpu.matmul %132, %134, %cst_145 {dimension_numbers = #tpu.dot_dimension_numbers<[1], [0], [0], [1], [0, 0, 1, 1], [], []>} : vector<32x8xbf16>, vector<8x16xbf16>, vector<32x16xf32> -> vector<32x16xf32>
    %136 = arith.addf %130, %135 : vector<32x16xf32>
    %c0_146 = arith.constant 0 : index
    %c12_147 = arith.constant 12 : index
    %c0_148 = arith.constant 0 : index
    %137 = vector.load %arg22[%c0_146, %c12_147, %c0_148] : memref<2x32x32xbf16, #tpu.memory_space<vmem>>, vector<2x16x8xbf16>
    %138 = vector.shape_cast %137 : vector<2x16x8xbf16> to vector<32x8xbf16>
    %c9_149 = arith.constant 9 : index
    %c0_150 = arith.constant 0 : index
    %c0_151 = arith.constant 0 : index
    %139 = vector.load %arg4[%c9_149, %c0_150, %c0_151] : memref<11x8x16xbf16, #tpu.memory_space<vmem>>, vector<1x8x16xbf16>
    %140 = vector.shape_cast %139 : vector<1x8x16xbf16> to vector<8x16xbf16>
    %cst_152 = arith.constant dense<0.000000e+00> : vector<32x16xf32>
    %141 = tpu.matmul %138, %140, %cst_152 {dimension_numbers = #tpu.dot_dimension_numbers<[1], [0], [0], [1], [0, 0, 1, 1], [], []>} : vector<32x8xbf16>, vector<8x16xbf16>, vector<32x16xf32> -> vector<32x16xf32>
    %142 = arith.addf %136, %141 : vector<32x16xf32>
    %c0_153 = arith.constant 0 : index
    %c13_154 = arith.constant 13 : index
    %c0_155 = arith.constant 0 : index
    %143 = vector.load %arg22[%c0_153, %c13_154, %c0_155] : memref<2x32x32xbf16, #tpu.memory_space<vmem>>, vector<2x16x8xbf16>
    %144 = vector.shape_cast %143 : vector<2x16x8xbf16> to vector<32x8xbf16>
    %c10_156 = arith.constant 10 : index
    %c0_157 = arith.constant 0 : index
    %c0_158 = arith.constant 0 : index
    %145 = vector.load %arg4[%c10_156, %c0_157, %c0_158] : memref<11x8x16xbf16, #tpu.memory_space<vmem>>, vector<1x8x16xbf16>
    %146 = vector.shape_cast %145 : vector<1x8x16xbf16> to vector<8x16xbf16>
    %cst_159 = arith.constant dense<0.000000e+00> : vector<32x16xf32>
    %147 = tpu.matmul %144, %146, %cst_159 {dimension_numbers = #tpu.dot_dimension_numbers<[1], [0], [0], [1], [0, 0, 1, 1], [], []>} : vector<32x8xbf16>, vector<8x16xbf16>, vector<32x16xf32> -> vector<32x16xf32>
    %148 = arith.addf %142, %147 : vector<32x16xf32>
    %c0_160 = arith.constant 0 : index
    %c0_161 = arith.constant 0 : index
    %149 = vector.load %arg5[%c0_160, %c0_161] : memref<1x16xf32, #tpu.memory_space<vmem>>, vector<1x16xf32>
    %150 = vector.broadcast %149 : vector<1x16xf32> to vector<32x16xf32>
    %151 = arith.addf %148, %150 : vector<32x16xf32>
    %cst_162 = arith.constant 0.00999999977 : f32
    %152 = vector.broadcast %cst_162 : f32 to vector<32x16xf32>
    %153 = arith.mulf %152, %151 : vector<32x16xf32>
    %154 = arith.maximumf %151, %153 : vector<32x16xf32>
    %155 = arith.truncf %154 : vector<32x16xf32> to vector<32x16xbf16>
    %156 = vector.shape_cast %155 : vector<32x16xbf16> to vector<2x16x16xbf16>
    %c0_163 = arith.constant 0 : index
    %c8_164 = arith.constant 8 : index
    %c0_165 = arith.constant 0 : index
    %157 = vector.load %arg22[%c0_163, %c8_164, %c0_165] : memref<2x32x32xbf16, #tpu.memory_space<vmem>>, vector<2x16x16xbf16>
    tpu.vector_store %arg22[%c0_163, %c8_164, %c0_165], %156 {strides = array<i32>} : memref<2x32x32xbf16, #tpu.memory_space<vmem>>, vector<2x16x16xbf16>,
    %cst_166 = arith.constant 0.000000e+00 : f32
    %158 = vector.broadcast %cst_166 : f32 to vector<32x32xf32>
    %c0_167 = arith.constant 0 : index
    %c3_168 = arith.constant 3 : index
    %c0_169 = arith.constant 0 : index
    %159 = vector.load %arg22[%c0_167, %c3_168, %c0_169] : memref<2x32x32xbf16, #tpu.memory_space<vmem>>, vector<2x16x16xbf16>
    %160 = vector.shape_cast %159 : vector<2x16x16xbf16> to vector<32x16xbf16>
    %c0_170 = arith.constant 0 : index
    %c0_171 = arith.constant 0 : index
    %c0_172 = arith.constant 0 : index
    %161 = vector.load %arg6[%c0_170, %c0_171, %c0_172] : memref<11x16x32xbf16, #tpu.memory_space<vmem>>, vector<1x16x32xbf16>
    %162 = vector.shape_cast %161 : vector<1x16x32xbf16> to vector<16x32xbf16>
    %cst_173 = arith.constant dense<0.000000e+00> : vector<32x32xf32>
    %163 = tpu.matmul %160, %162, %cst_173 {dimension_numbers = #tpu.dot_dimension_numbers<[1], [0], [0], [1], [0, 0, 1, 1], [], []>} : vector<32x16xbf16>, vector<16x32xbf16>, vector<32x32xf32> -> vector<32x32xf32>
    %164 = arith.addf %158, %163 : vector<32x32xf32>
    %c0_174 = arith.constant 0 : index
    %c4_175 = arith.constant 4 : index
    %c0_176 = arith.constant 0 : index
    %165 = vector.load %arg22[%c0_174, %c4_175, %c0_176] : memref<2x32x32xbf16, #tpu.memory_space<vmem>>, vector<2x16x16xbf16>
    %166 = vector.shape_cast %165 : vector<2x16x16xbf16> to vector<32x16xbf16>
    %c1_177 = arith.constant 1 : index
    %c0_178 = arith.constant 0 : index
    %c0_179 = arith.constant 0 : index
    %167 = vector.load %arg6[%c1_177, %c0_178, %c0_179] : memref<11x16x32xbf16, #tpu.memory_space<vmem>>, vector<1x16x32xbf16>
    %168 = vector.shape_cast %167 : vector<1x16x32xbf16> to vector<16x32xbf16>
    %cst_180 = arith.constant dense<0.000000e+00> : vector<32x32xf32>
    %169 = tpu.matmul %166, %168, %cst_180 {dimension_numbers = #tpu.dot_dimension_numbers<[1], [0], [0], [1], [0, 0, 1, 1], [], []>} : vector<32x16xbf16>, vector<16x32xbf16>, vector<32x32xf32> -> vector<32x32xf32>
    %170 = arith.addf %164, %169 : vector<32x32xf32>
    %c0_181 = arith.constant 0 : index
    %c5_182 = arith.constant 5 : index
    %c0_183 = arith.constant 0 : index
    %171 = vector.load %arg22[%c0_181, %c5_182, %c0_183] : memref<2x32x32xbf16, #tpu.memory_space<vmem>>, vector<2x16x16xbf16>
    %172 = vector.shape_cast %171 : vector<2x16x16xbf16> to vector<32x16xbf16>
    %c2_184 = arith.constant 2 : index
    %c0_185 = arith.constant 0 : index
    %c0_186 = arith.constant 0 : index
    %173 = vector.load %arg6[%c2_184, %c0_185, %c0_186] : memref<11x16x32xbf16, #tpu.memory_space<vmem>>, vector<1x16x32xbf16>
    %174 = vector.shape_cast %173 : vector<1x16x32xbf16> to vector<16x32xbf16>
    %cst_187 = arith.constant dense<0.000000e+00> : vector<32x32xf32>
    %175 = tpu.matmul %172, %174, %cst_187 {dimension_numbers = #tpu.dot_dimension_numbers<[1], [0], [0], [1], [0, 0, 1, 1], [], []>} : vector<32x16xbf16>, vector<16x32xbf16>, vector<32x32xf32> -> vector<32x32xf32>
    %176 = arith.addf %170, %175 : vector<32x32xf32>
    %c0_188 = arith.constant 0 : index
    %c6_189 = arith.constant 6 : index
    %c0_190 = arith.constant 0 : index
    %177 = vector.load %arg22[%c0_188, %c6_189, %c0_190] : memref<2x32x32xbf16, #tpu.memory_space<vmem>>, vector<2x16x16xbf16>
    %178 = vector.shape_cast %177 : vector<2x16x16xbf16> to vector<32x16xbf16>
    %c3_191 = arith.constant 3 : index
    %c0_192 = arith.constant 0 : index
    %c0_193 = arith.constant 0 : index
    %179 = vector.load %arg6[%c3_191, %c0_192, %c0_193] : memref<11x16x32xbf16, #tpu.memory_space<vmem>>, vector<1x16x32xbf16>
    %180 = vector.shape_cast %179 : vector<1x16x32xbf16> to vector<16x32xbf16>
    %cst_194 = arith.constant dense<0.000000e+00> : vector<32x32xf32>
    %181 = tpu.matmul %178, %180, %cst_194 {dimension_numbers = #tpu.dot_dimension_numbers<[1], [0], [0], [1], [0, 0, 1, 1], [], []>} : vector<32x16xbf16>, vector<16x32xbf16>, vector<32x32xf32> -> vector<32x32xf32>
    %182 = arith.addf %176, %181 : vector<32x32xf32>
    %c0_195 = arith.constant 0 : index
    %c7_196 = arith.constant 7 : index
    %c0_197 = arith.constant 0 : index
    %183 = vector.load %arg22[%c0_195, %c7_196, %c0_197] : memref<2x32x32xbf16, #tpu.memory_space<vmem>>, vector<2x16x16xbf16>
    %184 = vector.shape_cast %183 : vector<2x16x16xbf16> to vector<32x16xbf16>
    %c4_198 = arith.constant 4 : index
    %c0_199 = arith.constant 0 : index
    %c0_200 = arith.constant 0 : index
    %185 = vector.load %arg6[%c4_198, %c0_199, %c0_200] : memref<11x16x32xbf16, #tpu.memory_space<vmem>>, vector<1x16x32xbf16>
    %186 = vector.shape_cast %185 : vector<1x16x32xbf16> to vector<16x32xbf16>
    %cst_201 = arith.constant dense<0.000000e+00> : vector<32x32xf32>
    %187 = tpu.matmul %184, %186, %cst_201 {dimension_numbers = #tpu.dot_dimension_numbers<[1], [0], [0], [1], [0, 0, 1, 1], [], []>} : vector<32x16xbf16>, vector<16x32xbf16>, vector<32x32xf32> -> vector<32x32xf32>
    %188 = arith.addf %182, %187 : vector<32x32xf32>
    %c0_202 = arith.constant 0 : index
    %c8_203 = arith.constant 8 : index
    %c0_204 = arith.constant 0 : index
    %189 = vector.load %arg22[%c0_202, %c8_203, %c0_204] : memref<2x32x32xbf16, #tpu.memory_space<vmem>>, vector<2x16x16xbf16>
    %190 = vector.shape_cast %189 : vector<2x16x16xbf16> to vector<32x16xbf16>
    %c5_205 = arith.constant 5 : index
    %c0_206 = arith.constant 0 : index
    %c0_207 = arith.constant 0 : index
    %191 = vector.load %arg6[%c5_205, %c0_206, %c0_207] : memref<11x16x32xbf16, #tpu.memory_space<vmem>>, vector<1x16x32xbf16>
    %192 = vector.shape_cast %191 : vector<1x16x32xbf16> to vector<16x32xbf16>
    %cst_208 = arith.constant dense<0.000000e+00> : vector<32x32xf32>
    %193 = tpu.matmul %190, %192, %cst_208 {dimension_numbers = #tpu.dot_dimension_numbers<[1], [0], [0], [1], [0, 0, 1, 1], [], []>} : vector<32x16xbf16>, vector<16x32xbf16>, vector<32x32xf32> -> vector<32x32xf32>
    %194 = arith.addf %188, %193 : vector<32x32xf32>
    %c0_209 = arith.constant 0 : index
    %c9_210 = arith.constant 9 : index
    %c0_211 = arith.constant 0 : index
    %195 = vector.load %arg22[%c0_209, %c9_210, %c0_211] : memref<2x32x32xbf16, #tpu.memory_space<vmem>>, vector<2x16x16xbf16>
    %196 = vector.shape_cast %195 : vector<2x16x16xbf16> to vector<32x16xbf16>
    %c6_212 = arith.constant 6 : index
    %c0_213 = arith.constant 0 : index
    %c0_214 = arith.constant 0 : index
    %197 = vector.load %arg6[%c6_212, %c0_213, %c0_214] : memref<11x16x32xbf16, #tpu.memory_space<vmem>>, vector<1x16x32xbf16>
    %198 = vector.shape_cast %197 : vector<1x16x32xbf16> to vector<16x32xbf16>
    %cst_215 = arith.constant dense<0.000000e+00> : vector<32x32xf32>
    %199 = tpu.matmul %196, %198, %cst_215 {dimension_numbers = #tpu.dot_dimension_numbers<[1], [0], [0], [1], [0, 0, 1, 1], [], []>} : vector<32x16xbf16>, vector<16x32xbf16>, vector<32x32xf32> -> vector<32x32xf32>
    %200 = arith.addf %194, %199 : vector<32x32xf32>
    %c0_216 = arith.constant 0 : index
    %c10_217 = arith.constant 10 : index
    %c0_218 = arith.constant 0 : index
    %201 = vector.load %arg22[%c0_216, %c10_217, %c0_218] : memref<2x32x32xbf16, #tpu.memory_space<vmem>>, vector<2x16x16xbf16>
    %202 = vector.shape_cast %201 : vector<2x16x16xbf16> to vector<32x16xbf16>
    %c7_219 = arith.constant 7 : index
    %c0_220 = arith.constant 0 : index
    %c0_221 = arith.constant 0 : index
    %203 = vector.load %arg6[%c7_219, %c0_220, %c0_221] : memref<11x16x32xbf16, #tpu.memory_space<vmem>>, vector<1x16x32xbf16>
    %204 = vector.shape_cast %203 : vector<1x16x32xbf16> to vector<16x32xbf16>
    %cst_222 = arith.constant dense<0.000000e+00> : vector<32x32xf32>
    %205 = tpu.matmul %202, %204, %cst_222 {dimension_numbers = #tpu.dot_dimension_numbers<[1], [0], [0], [1], [0, 0, 1, 1], [], []>} : vector<32x16xbf16>, vector<16x32xbf16>, vector<32x32xf32> -> vector<32x32xf32>
    %206 = arith.addf %200, %205 : vector<32x32xf32>
    %c0_223 = arith.constant 0 : index
    %c11_224 = arith.constant 11 : index
    %c0_225 = arith.constant 0 : index
    %207 = vector.load %arg22[%c0_223, %c11_224, %c0_225] : memref<2x32x32xbf16, #tpu.memory_space<vmem>>, vector<2x16x16xbf16>
    %208 = vector.shape_cast %207 : vector<2x16x16xbf16> to vector<32x16xbf16>
    %c8_226 = arith.constant 8 : index
    %c0_227 = arith.constant 0 : index
    %c0_228 = arith.constant 0 : index
    %209 = vector.load %arg6[%c8_226, %c0_227, %c0_228] : memref<11x16x32xbf16, #tpu.memory_space<vmem>>, vector<1x16x32xbf16>
    %210 = vector.shape_cast %209 : vector<1x16x32xbf16> to vector<16x32xbf16>
    %cst_229 = arith.constant dense<0.000000e+00> : vector<32x32xf32>
    %211 = tpu.matmul %208, %210, %cst_229 {dimension_numbers = #tpu.dot_dimension_numbers<[1], [0], [0], [1], [0, 0, 1, 1], [], []>} : vector<32x16xbf16>, vector<16x32xbf16>, vector<32x32xf32> -> vector<32x32xf32>
    %212 = arith.addf %206, %211 : vector<32x32xf32>
    %c0_230 = arith.constant 0 : index
    %c12_231 = arith.constant 12 : index
    %c0_232 = arith.constant 0 : index
    %213 = vector.load %arg22[%c0_230, %c12_231, %c0_232] : memref<2x32x32xbf16, #tpu.memory_space<vmem>>, vector<2x16x16xbf16>
    %214 = vector.shape_cast %213 : vector<2x16x16xbf16> to vector<32x16xbf16>
    %c9_233 = arith.constant 9 : index
    %c0_234 = arith.constant 0 : index
    %c0_235 = arith.constant 0 : index
    %215 = vector.load %arg6[%c9_233, %c0_234, %c0_235] : memref<11x16x32xbf16, #tpu.memory_space<vmem>>, vector<1x16x32xbf16>
    %216 = vector.shape_cast %215 : vector<1x16x32xbf16> to vector<16x32xbf16>
    %cst_236 = arith.constant dense<0.000000e+00> : vector<32x32xf32>
    %217 = tpu.matmul %214, %216, %cst_236 {dimension_numbers = #tpu.dot_dimension_numbers<[1], [0], [0], [1], [0, 0, 1, 1], [], []>} : vector<32x16xbf16>, vector<16x32xbf16>, vector<32x32xf32> -> vector<32x32xf32>
    %218 = arith.addf %212, %217 : vector<32x32xf32>
    %c0_237 = arith.constant 0 : index
    %c13_238 = arith.constant 13 : index
    %c0_239 = arith.constant 0 : index
    %219 = vector.load %arg22[%c0_237, %c13_238, %c0_239] : memref<2x32x32xbf16, #tpu.memory_space<vmem>>, vector<2x16x16xbf16>
    %220 = vector.shape_cast %219 : vector<2x16x16xbf16> to vector<32x16xbf16>
    %c10_240 = arith.constant 10 : index
    %c0_241 = arith.constant 0 : index
    %c0_242 = arith.constant 0 : index
    %221 = vector.load %arg6[%c10_240, %c0_241, %c0_242] : memref<11x16x32xbf16, #tpu.memory_space<vmem>>, vector<1x16x32xbf16>
    %222 = vector.shape_cast %221 : vector<1x16x32xbf16> to vector<16x32xbf16>
    %cst_243 = arith.constant dense<0.000000e+00> : vector<32x32xf32>
    %223 = tpu.matmul %220, %222, %cst_243 {dimension_numbers = #tpu.dot_dimension_numbers<[1], [0], [0], [1], [0, 0, 1, 1], [], []>} : vector<32x16xbf16>, vector<16x32xbf16>, vector<32x32xf32> -> vector<32x32xf32>
    %224 = arith.addf %218, %223 : vector<32x32xf32>
    %c0_244 = arith.constant 0 : index
    %c0_245 = arith.constant 0 : index
    %225 = vector.load %arg7[%c0_244, %c0_245] : memref<1x32xf32, #tpu.memory_space<vmem>>, vector<1x32xf32>
    %226 = vector.broadcast %225 : vector<1x32xf32> to vector<32x32xf32>
    %227 = arith.addf %224, %226 : vector<32x32xf32>
    %cst_246 = arith.constant 0.00999999977 : f32
    %228 = vector.broadcast %cst_246 : f32 to vector<32x32xf32>
    %229 = arith.mulf %228, %227 : vector<32x32xf32>
    %230 = arith.maximumf %227, %229 : vector<32x32xf32>
    %231 = arith.truncf %230 : vector<32x32xf32> to vector<32x32xbf16>
    %232 = vector.shape_cast %231 : vector<32x32xbf16> to vector<2x16x32xbf16>
    %c0_247 = arith.constant 0 : index
    %c8_248 = arith.constant 8 : index
    %c0_249 = arith.constant 0 : index
    %233 = vector.load %arg22[%c0_247, %c8_248, %c0_249] : memref<2x32x32xbf16, #tpu.memory_space<vmem>>, vector<2x16x32xbf16>
    tpu.vector_store %arg22[%c0_247, %c8_248, %c0_249], %232 {strides = array<i32>} : memref<2x32x32xbf16, #tpu.memory_space<vmem>>, vector<2x16x32xbf16>,
    %cst_250 = arith.constant 0.000000e+00 : f32
    %234 = vector.broadcast %cst_250 : f32 to vector<32x16xf32>
    %c0_251 = arith.constant 0 : index
    %c3_252 = arith.constant 3 : index
    %c0_253 = arith.constant 0 : index
    %235 = vector.load %arg22[%c0_251, %c3_252, %c0_253] : memref<2x32x32xbf16, #tpu.memory_space<vmem>>, vector<2x16x32xbf16>
    %236 = vector.shape_cast %235 : vector<2x16x32xbf16> to vector<32x32xbf16>
    %c0_254 = arith.constant 0 : index
    %c0_255 = arith.constant 0 : index
    %c0_256 = arith.constant 0 : index
    %237 = vector.load %arg8[%c0_254, %c0_255, %c0_256] : memref<11x32x16xbf16, #tpu.memory_space<vmem>>, vector<1x32x16xbf16>
    %238 = vector.shape_cast %237 : vector<1x32x16xbf16> to vector<32x16xbf16>
    %cst_257 = arith.constant dense<0.000000e+00> : vector<32x16xf32>
    %239 = tpu.matmul %236, %238, %cst_257 {dimension_numbers = #tpu.dot_dimension_numbers<[1], [0], [0], [1], [0, 0, 1, 1], [], []>} : vector<32x32xbf16>, vector<32x16xbf16>, vector<32x16xf32> -> vector<32x16xf32>
    %240 = arith.addf %234, %239 : vector<32x16xf32>
    %c0_258 = arith.constant 0 : index
    %c4_259 = arith.constant 4 : index
    %c0_260 = arith.constant 0 : index
    %241 = vector.load %arg22[%c0_258, %c4_259, %c0_260] : memref<2x32x32xbf16, #tpu.memory_space<vmem>>, vector<2x16x32xbf16>
    %242 = vector.shape_cast %241 : vector<2x16x32xbf16> to vector<32x32xbf16>
    %c1_261 = arith.constant 1 : index
    %c0_262 = arith.constant 0 : index
    %c0_263 = arith.constant 0 : index
    %243 = vector.load %arg8[%c1_261, %c0_262, %c0_263] : memref<11x32x16xbf16, #tpu.memory_space<vmem>>, vector<1x32x16xbf16>
    %244 = vector.shape_cast %243 : vector<1x32x16xbf16> to vector<32x16xbf16>
    %cst_264 = arith.constant dense<0.000000e+00> : vector<32x16xf32>
    %245 = tpu.matmul %242, %244, %cst_264 {dimension_numbers = #tpu.dot_dimension_numbers<[1], [0], [0], [1], [0, 0, 1, 1], [], []>} : vector<32x32xbf16>, vector<32x16xbf16>, vector<32x16xf32> -> vector<32x16xf32>
    %246 = arith.addf %240, %245 : vector<32x16xf32>
    %c0_265 = arith.constant 0 : index
    %c5_266 = arith.constant 5 : index
    %c0_267 = arith.constant 0 : index
    %247 = vector.load %arg22[%c0_265, %c5_266, %c0_267] : memref<2x32x32xbf16, #tpu.memory_space<vmem>>, vector<2x16x32xbf16>
    %248 = vector.shape_cast %247 : vector<2x16x32xbf16> to vector<32x32xbf16>
    %c2_268 = arith.constant 2 : index
    %c0_269 = arith.constant 0 : index
    %c0_270 = arith.constant 0 : index
    %249 = vector.load %arg8[%c2_268, %c0_269, %c0_270] : memref<11x32x16xbf16, #tpu.memory_space<vmem>>, vector<1x32x16xbf16>
    %250 = vector.shape_cast %249 : vector<1x32x16xbf16> to vector<32x16xbf16>
    %cst_271 = arith.constant dense<0.000000e+00> : vector<32x16xf32>
    %251 = tpu.matmul %248, %250, %cst_271 {dimension_numbers = #tpu.dot_dimension_numbers<[1], [0], [0], [1], [0, 0, 1, 1], [], []>} : vector<32x32xbf16>, vector<32x16xbf16>, vector<32x16xf32> -> vector<32x16xf32>
    %252 = arith.addf %246, %251 : vector<32x16xf32>
    %c0_272 = arith.constant 0 : index
    %c6_273 = arith.constant 6 : index
    %c0_274 = arith.constant 0 : index
    %253 = vector.load %arg22[%c0_272, %c6_273, %c0_274] : memref<2x32x32xbf16, #tpu.memory_space<vmem>>, vector<2x16x32xbf16>
    %254 = vector.shape_cast %253 : vector<2x16x32xbf16> to vector<32x32xbf16>
    %c3_275 = arith.constant 3 : index
    %c0_276 = arith.constant 0 : index
    %c0_277 = arith.constant 0 : index
    %255 = vector.load %arg8[%c3_275, %c0_276, %c0_277] : memref<11x32x16xbf16, #tpu.memory_space<vmem>>, vector<1x32x16xbf16>
    %256 = vector.shape_cast %255 : vector<1x32x16xbf16> to vector<32x16xbf16>
    %cst_278 = arith.constant dense<0.000000e+00> : vector<32x16xf32>
    %257 = tpu.matmul %254, %256, %cst_278 {dimension_numbers = #tpu.dot_dimension_numbers<[1], [0], [0], [1], [0, 0, 1, 1], [], []>} : vector<32x32xbf16>, vector<32x16xbf16>, vector<32x16xf32> -> vector<32x16xf32>
    %258 = arith.addf %252, %257 : vector<32x16xf32>
    %c0_279 = arith.constant 0 : index
    %c7_280 = arith.constant 7 : index
    %c0_281 = arith.constant 0 : index
    %259 = vector.load %arg22[%c0_279, %c7_280, %c0_281] : memref<2x32x32xbf16, #tpu.memory_space<vmem>>, vector<2x16x32xbf16>
    %260 = vector.shape_cast %259 : vector<2x16x32xbf16> to vector<32x32xbf16>
    %c4_282 = arith.constant 4 : index
    %c0_283 = arith.constant 0 : index
    %c0_284 = arith.constant 0 : index
    %261 = vector.load %arg8[%c4_282, %c0_283, %c0_284] : memref<11x32x16xbf16, #tpu.memory_space<vmem>>, vector<1x32x16xbf16>
    %262 = vector.shape_cast %261 : vector<1x32x16xbf16> to vector<32x16xbf16>
    %cst_285 = arith.constant dense<0.000000e+00> : vector<32x16xf32>
    %263 = tpu.matmul %260, %262, %cst_285 {dimension_numbers = #tpu.dot_dimension_numbers<[1], [0], [0], [1], [0, 0, 1, 1], [], []>} : vector<32x32xbf16>, vector<32x16xbf16>, vector<32x16xf32> -> vector<32x16xf32>
    %264 = arith.addf %258, %263 : vector<32x16xf32>
    %c0_286 = arith.constant 0 : index
    %c8_287 = arith.constant 8 : index
    %c0_288 = arith.constant 0 : index
    %265 = vector.load %arg22[%c0_286, %c8_287, %c0_288] : memref<2x32x32xbf16, #tpu.memory_space<vmem>>, vector<2x16x32xbf16>
    %266 = vector.shape_cast %265 : vector<2x16x32xbf16> to vector<32x32xbf16>
    %c5_289 = arith.constant 5 : index
    %c0_290 = arith.constant 0 : index
    %c0_291 = arith.constant 0 : index
    %267 = vector.load %arg8[%c5_289, %c0_290, %c0_291] : memref<11x32x16xbf16, #tpu.memory_space<vmem>>, vector<1x32x16xbf16>
    %268 = vector.shape_cast %267 : vector<1x32x16xbf16> to vector<32x16xbf16>
    %cst_292 = arith.constant dense<0.000000e+00> : vector<32x16xf32>
    %269 = tpu.matmul %266, %268, %cst_292 {dimension_numbers = #tpu.dot_dimension_numbers<[1], [0], [0], [1], [0, 0, 1, 1], [], []>} : vector<32x32xbf16>, vector<32x16xbf16>, vector<32x16xf32> -> vector<32x16xf32>
    %270 = arith.addf %264, %269 : vector<32x16xf32>
    %c0_293 = arith.constant 0 : index
    %c9_294 = arith.constant 9 : index
    %c0_295 = arith.constant 0 : index
    %271 = vector.load %arg22[%c0_293, %c9_294, %c0_295] : memref<2x32x32xbf16, #tpu.memory_space<vmem>>, vector<2x16x32xbf16>
    %272 = vector.shape_cast %271 : vector<2x16x32xbf16> to vector<32x32xbf16>
    %c6_296 = arith.constant 6 : index
    %c0_297 = arith.constant 0 : index
    %c0_298 = arith.constant 0 : index
    %273 = vector.load %arg8[%c6_296, %c0_297, %c0_298] : memref<11x32x16xbf16, #tpu.memory_space<vmem>>, vector<1x32x16xbf16>
    %274 = vector.shape_cast %273 : vector<1x32x16xbf16> to vector<32x16xbf16>
    %cst_299 = arith.constant dense<0.000000e+00> : vector<32x16xf32>
    %275 = tpu.matmul %272, %274, %cst_299 {dimension_numbers = #tpu.dot_dimension_numbers<[1], [0], [0], [1], [0, 0, 1, 1], [], []>} : vector<32x32xbf16>, vector<32x16xbf16>, vector<32x16xf32> -> vector<32x16xf32>
    %276 = arith.addf %270, %275 : vector<32x16xf32>
    %c0_300 = arith.constant 0 : index
    %c10_301 = arith.constant 10 : index
    %c0_302 = arith.constant 0 : index
    %277 = vector.load %arg22[%c0_300, %c10_301, %c0_302] : memref<2x32x32xbf16, #tpu.memory_space<vmem>>, vector<2x16x32xbf16>
    %278 = vector.shape_cast %277 : vector<2x16x32xbf16> to vector<32x32xbf16>
    %c7_303 = arith.constant 7 : index
    %c0_304 = arith.constant 0 : index
    %c0_305 = arith.constant 0 : index
    %279 = vector.load %arg8[%c7_303, %c0_304, %c0_305] : memref<11x32x16xbf16, #tpu.memory_space<vmem>>, vector<1x32x16xbf16>
    %280 = vector.shape_cast %279 : vector<1x32x16xbf16> to vector<32x16xbf16>
    %cst_306 = arith.constant dense<0.000000e+00> : vector<32x16xf32>
    %281 = tpu.matmul %278, %280, %cst_306 {dimension_numbers = #tpu.dot_dimension_numbers<[1], [0], [0], [1], [0, 0, 1, 1], [], []>} : vector<32x32xbf16>, vector<32x16xbf16>, vector<32x16xf32> -> vector<32x16xf32>
    %282 = arith.addf %276, %281 : vector<32x16xf32>
    %c0_307 = arith.constant 0 : index
    %c11_308 = arith.constant 11 : index
    %c0_309 = arith.constant 0 : index
    %283 = vector.load %arg22[%c0_307, %c11_308, %c0_309] : memref<2x32x32xbf16, #tpu.memory_space<vmem>>, vector<2x16x32xbf16>
    %284 = vector.shape_cast %283 : vector<2x16x32xbf16> to vector<32x32xbf16>
    %c8_310 = arith.constant 8 : index
    %c0_311 = arith.constant 0 : index
    %c0_312 = arith.constant 0 : index
    %285 = vector.load %arg8[%c8_310, %c0_311, %c0_312] : memref<11x32x16xbf16, #tpu.memory_space<vmem>>, vector<1x32x16xbf16>
    %286 = vector.shape_cast %285 : vector<1x32x16xbf16> to vector<32x16xbf16>
    %cst_313 = arith.constant dense<0.000000e+00> : vector<32x16xf32>
    %287 = tpu.matmul %284, %286, %cst_313 {dimension_numbers = #tpu.dot_dimension_numbers<[1], [0], [0], [1], [0, 0, 1, 1], [], []>} : vector<32x32xbf16>, vector<32x16xbf16>, vector<32x16xf32> -> vector<32x16xf32>
    %288 = arith.addf %282, %287 : vector<32x16xf32>
    %c0_314 = arith.constant 0 : index
    %c12_315 = arith.constant 12 : index
    %c0_316 = arith.constant 0 : index
    %289 = vector.load %arg22[%c0_314, %c12_315, %c0_316] : memref<2x32x32xbf16, #tpu.memory_space<vmem>>, vector<2x16x32xbf16>
    %290 = vector.shape_cast %289 : vector<2x16x32xbf16> to vector<32x32xbf16>
    %c9_317 = arith.constant 9 : index
    %c0_318 = arith.constant 0 : index
    %c0_319 = arith.constant 0 : index
    %291 = vector.load %arg8[%c9_317, %c0_318, %c0_319] : memref<11x32x16xbf16, #tpu.memory_space<vmem>>, vector<1x32x16xbf16>
    %292 = vector.shape_cast %291 : vector<1x32x16xbf16> to vector<32x16xbf16>
    %cst_320 = arith.constant dense<0.000000e+00> : vector<32x16xf32>
    %293 = tpu.matmul %290, %292, %cst_320 {dimension_numbers = #tpu.dot_dimension_numbers<[1], [0], [0], [1], [0, 0, 1, 1], [], []>} : vector<32x32xbf16>, vector<32x16xbf16>, vector<32x16xf32> -> vector<32x16xf32>
    %294 = arith.addf %288, %293 : vector<32x16xf32>
    %c0_321 = arith.constant 0 : index
    %c13_322 = arith.constant 13 : index
    %c0_323 = arith.constant 0 : index
    %295 = vector.load %arg22[%c0_321, %c13_322, %c0_323] : memref<2x32x32xbf16, #tpu.memory_space<vmem>>, vector<2x16x32xbf16>
    %296 = vector.shape_cast %295 : vector<2x16x32xbf16> to vector<32x32xbf16>
    %c10_324 = arith.constant 10 : index
    %c0_325 = arith.constant 0 : index
    %c0_326 = arith.constant 0 : index
    %297 = vector.load %arg8[%c10_324, %c0_325, %c0_326] : memref<11x32x16xbf16, #tpu.memory_space<vmem>>, vector<1x32x16xbf16>
    %298 = vector.shape_cast %297 : vector<1x32x16xbf16> to vector<32x16xbf16>
    %cst_327 = arith.constant dense<0.000000e+00> : vector<32x16xf32>
    %299 = tpu.matmul %296, %298, %cst_327 {dimension_numbers = #tpu.dot_dimension_numbers<[1], [0], [0], [1], [0, 0, 1, 1], [], []>} : vector<32x32xbf16>, vector<32x16xbf16>, vector<32x16xf32> -> vector<32x16xf32>
    %300 = arith.addf %294, %299 : vector<32x16xf32>
    %c0_328 = arith.constant 0 : index
    %c0_329 = arith.constant 0 : index
    %301 = vector.load %arg9[%c0_328, %c0_329] : memref<1x16xf32, #tpu.memory_space<vmem>>, vector<1x16xf32>
    %302 = vector.broadcast %301 : vector<1x16xf32> to vector<32x16xf32>
    %303 = arith.addf %300, %302 : vector<32x16xf32>
    %cst_330 = arith.constant 0.00999999977 : f32
    %304 = vector.broadcast %cst_330 : f32 to vector<32x16xf32>
    %305 = arith.mulf %304, %303 : vector<32x16xf32>
    %306 = arith.maximumf %303, %305 : vector<32x16xf32>
    %307 = arith.truncf %306 : vector<32x16xf32> to vector<32x16xbf16>
    %308 = vector.shape_cast %307 : vector<32x16xbf16> to vector<2x16x16xbf16>
    %c0_331 = arith.constant 0 : index
    %c8_332 = arith.constant 8 : index
    %c0_333 = arith.constant 0 : index
    %309 = vector.load %arg22[%c0_331, %c8_332, %c0_333] : memref<2x32x32xbf16, #tpu.memory_space<vmem>>, vector<2x16x16xbf16>
    tpu.vector_store %arg22[%c0_331, %c8_332, %c0_333], %308 {strides = array<i32>} : memref<2x32x32xbf16, #tpu.memory_space<vmem>>, vector<2x16x16xbf16>,
    %cst_334 = arith.constant 0.000000e+00 : f32
    %310 = vector.broadcast %cst_334 : f32 to vector<32x8xf32>
    %c0_335 = arith.constant 0 : index
    %c3_336 = arith.constant 3 : index
    %c0_337 = arith.constant 0 : index
    %311 = vector.load %arg22[%c0_335, %c3_336, %c0_337] : memref<2x32x32xbf16, #tpu.memory_space<vmem>>, vector<2x16x16xbf16>
    %312 = vector.shape_cast %311 : vector<2x16x16xbf16> to vector<32x16xbf16>
    %c0_338 = arith.constant 0 : index
    %c0_339 = arith.constant 0 : index
    %c0_340 = arith.constant 0 : index
    %313 = vector.load %arg10[%c0_338, %c0_339, %c0_340] : memref<11x16x8xbf16, #tpu.memory_space<vmem>>, vector<1x16x8xbf16>
    %314 = vector.shape_cast %313 : vector<1x16x8xbf16> to vector<16x8xbf16>
    %cst_341 = arith.constant dense<0.000000e+00> : vector<32x8xf32>
    %315 = tpu.matmul %312, %314, %cst_341 {dimension_numbers = #tpu.dot_dimension_numbers<[1], [0], [0], [1], [0, 0, 1, 1], [], []>} : vector<32x16xbf16>, vector<16x8xbf16>, vector<32x8xf32> -> vector<32x8xf32>
    %316 = arith.addf %310, %315 : vector<32x8xf32>
    %c0_342 = arith.constant 0 : index
    %c4_343 = arith.constant 4 : index
    %c0_344 = arith.constant 0 : index
    %317 = vector.load %arg22[%c0_342, %c4_343, %c0_344] : memref<2x32x32xbf16, #tpu.memory_space<vmem>>, vector<2x16x16xbf16>
    %318 = vector.shape_cast %317 : vector<2x16x16xbf16> to vector<32x16xbf16>
    %c1_345 = arith.constant 1 : index
    %c0_346 = arith.constant 0 : index
    %c0_347 = arith.constant 0 : index
    %319 = vector.load %arg10[%c1_345, %c0_346, %c0_347] : memref<11x16x8xbf16, #tpu.memory_space<vmem>>, vector<1x16x8xbf16>
    %320 = vector.shape_cast %319 : vector<1x16x8xbf16> to vector<16x8xbf16>
    %cst_348 = arith.constant dense<0.000000e+00> : vector<32x8xf32>
    %321 = tpu.matmul %318, %320, %cst_348 {dimension_numbers = #tpu.dot_dimension_numbers<[1], [0], [0], [1], [0, 0, 1, 1], [], []>} : vector<32x16xbf16>, vector<16x8xbf16>, vector<32x8xf32> -> vector<32x8xf32>
    %322 = arith.addf %316, %321 : vector<32x8xf32>
    %c0_349 = arith.constant 0 : index
    %c5_350 = arith.constant 5 : index
    %c0_351 = arith.constant 0 : index
    %323 = vector.load %arg22[%c0_349, %c5_350, %c0_351] : memref<2x32x32xbf16, #tpu.memory_space<vmem>>, vector<2x16x16xbf16>
    %324 = vector.shape_cast %323 : vector<2x16x16xbf16> to vector<32x16xbf16>
    %c2_352 = arith.constant 2 : index
    %c0_353 = arith.constant 0 : index
    %c0_354 = arith.constant 0 : index
    %325 = vector.load %arg10[%c2_352, %c0_353, %c0_354] : memref<11x16x8xbf16, #tpu.memory_space<vmem>>, vector<1x16x8xbf16>
    %326 = vector.shape_cast %325 : vector<1x16x8xbf16> to vector<16x8xbf16>
    %cst_355 = arith.constant dense<0.000000e+00> : vector<32x8xf32>
    %327 = tpu.matmul %324, %326, %cst_355 {dimension_numbers = #tpu.dot_dimension_numbers<[1], [0], [0], [1], [0, 0, 1, 1], [], []>} : vector<32x16xbf16>, vector<16x8xbf16>, vector<32x8xf32> -> vector<32x8xf32>
    %328 = arith.addf %322, %327 : vector<32x8xf32>
    %c0_356 = arith.constant 0 : index
    %c6_357 = arith.constant 6 : index
    %c0_358 = arith.constant 0 : index
    %329 = vector.load %arg22[%c0_356, %c6_357, %c0_358] : memref<2x32x32xbf16, #tpu.memory_space<vmem>>, vector<2x16x16xbf16>
    %330 = vector.shape_cast %329 : vector<2x16x16xbf16> to vector<32x16xbf16>
    %c3_359 = arith.constant 3 : index
    %c0_360 = arith.constant 0 : index
    %c0_361 = arith.constant 0 : index
    %331 = vector.load %arg10[%c3_359, %c0_360, %c0_361] : memref<11x16x8xbf16, #tpu.memory_space<vmem>>, vector<1x16x8xbf16>
    %332 = vector.shape_cast %331 : vector<1x16x8xbf16> to vector<16x8xbf16>
    %cst_362 = arith.constant dense<0.000000e+00> : vector<32x8xf32>
    %333 = tpu.matmul %330, %332, %cst_362 {dimension_numbers = #tpu.dot_dimension_numbers<[1], [0], [0], [1], [0, 0, 1, 1], [], []>} : vector<32x16xbf16>, vector<16x8xbf16>, vector<32x8xf32> -> vector<32x8xf32>
    %334 = arith.addf %328, %333 : vector<32x8xf32>
    %c0_363 = arith.constant 0 : index
    %c7_364 = arith.constant 7 : index
    %c0_365 = arith.constant 0 : index
    %335 = vector.load %arg22[%c0_363, %c7_364, %c0_365] : memref<2x32x32xbf16, #tpu.memory_space<vmem>>, vector<2x16x16xbf16>
    %336 = vector.shape_cast %335 : vector<2x16x16xbf16> to vector<32x16xbf16>
    %c4_366 = arith.constant 4 : index
    %c0_367 = arith.constant 0 : index
    %c0_368 = arith.constant 0 : index
    %337 = vector.load %arg10[%c4_366, %c0_367, %c0_368] : memref<11x16x8xbf16, #tpu.memory_space<vmem>>, vector<1x16x8xbf16>
    %338 = vector.shape_cast %337 : vector<1x16x8xbf16> to vector<16x8xbf16>
    %cst_369 = arith.constant dense<0.000000e+00> : vector<32x8xf32>
    %339 = tpu.matmul %336, %338, %cst_369 {dimension_numbers = #tpu.dot_dimension_numbers<[1], [0], [0], [1], [0, 0, 1, 1], [], []>} : vector<32x16xbf16>, vector<16x8xbf16>, vector<32x8xf32> -> vector<32x8xf32>
    %340 = arith.addf %334, %339 : vector<32x8xf32>
    %c0_370 = arith.constant 0 : index
    %c8_371 = arith.constant 8 : index
    %c0_372 = arith.constant 0 : index
    %341 = vector.load %arg22[%c0_370, %c8_371, %c0_372] : memref<2x32x32xbf16, #tpu.memory_space<vmem>>, vector<2x16x16xbf16>
    %342 = vector.shape_cast %341 : vector<2x16x16xbf16> to vector<32x16xbf16>
    %c5_373 = arith.constant 5 : index
    %c0_374 = arith.constant 0 : index
    %c0_375 = arith.constant 0 : index
    %343 = vector.load %arg10[%c5_373, %c0_374, %c0_375] : memref<11x16x8xbf16, #tpu.memory_space<vmem>>, vector<1x16x8xbf16>
    %344 = vector.shape_cast %343 : vector<1x16x8xbf16> to vector<16x8xbf16>
    %cst_376 = arith.constant dense<0.000000e+00> : vector<32x8xf32>
    %345 = tpu.matmul %342, %344, %cst_376 {dimension_numbers = #tpu.dot_dimension_numbers<[1], [0], [0], [1], [0, 0, 1, 1], [], []>} : vector<32x16xbf16>, vector<16x8xbf16>, vector<32x8xf32> -> vector<32x8xf32>
    %346 = arith.addf %340, %345 : vector<32x8xf32>
    %c0_377 = arith.constant 0 : index
    %c9_378 = arith.constant 9 : index
    %c0_379 = arith.constant 0 : index
    %347 = vector.load %arg22[%c0_377, %c9_378, %c0_379] : memref<2x32x32xbf16, #tpu.memory_space<vmem>>, vector<2x16x16xbf16>
    %348 = vector.shape_cast %347 : vector<2x16x16xbf16> to vector<32x16xbf16>
    %c6_380 = arith.constant 6 : index
    %c0_381 = arith.constant 0 : index
    %c0_382 = arith.constant 0 : index
    %349 = vector.load %arg10[%c6_380, %c0_381, %c0_382] : memref<11x16x8xbf16, #tpu.memory_space<vmem>>, vector<1x16x8xbf16>
    %350 = vector.shape_cast %349 : vector<1x16x8xbf16> to vector<16x8xbf16>
    %cst_383 = arith.constant dense<0.000000e+00> : vector<32x8xf32>
    %351 = tpu.matmul %348, %350, %cst_383 {dimension_numbers = #tpu.dot_dimension_numbers<[1], [0], [0], [1], [0, 0, 1, 1], [], []>} : vector<32x16xbf16>, vector<16x8xbf16>, vector<32x8xf32> -> vector<32x8xf32>
    %352 = arith.addf %346, %351 : vector<32x8xf32>
    %c0_384 = arith.constant 0 : index
    %c10_385 = arith.constant 10 : index
    %c0_386 = arith.constant 0 : index
    %353 = vector.load %arg22[%c0_384, %c10_385, %c0_386] : memref<2x32x32xbf16, #tpu.memory_space<vmem>>, vector<2x16x16xbf16>
    %354 = vector.shape_cast %353 : vector<2x16x16xbf16> to vector<32x16xbf16>
    %c7_387 = arith.constant 7 : index
    %c0_388 = arith.constant 0 : index
    %c0_389 = arith.constant 0 : index
    %355 = vector.load %arg10[%c7_387, %c0_388, %c0_389] : memref<11x16x8xbf16, #tpu.memory_space<vmem>>, vector<1x16x8xbf16>
    %356 = vector.shape_cast %355 : vector<1x16x8xbf16> to vector<16x8xbf16>
    %cst_390 = arith.constant dense<0.000000e+00> : vector<32x8xf32>
    %357 = tpu.matmul %354, %356, %cst_390 {dimension_numbers = #tpu.dot_dimension_numbers<[1], [0], [0], [1], [0, 0, 1, 1], [], []>} : vector<32x16xbf16>, vector<16x8xbf16>, vector<32x8xf32> -> vector<32x8xf32>
    %358 = arith.addf %352, %357 : vector<32x8xf32>
    %c0_391 = arith.constant 0 : index
    %c11_392 = arith.constant 11 : index
    %c0_393 = arith.constant 0 : index
    %359 = vector.load %arg22[%c0_391, %c11_392, %c0_393] : memref<2x32x32xbf16, #tpu.memory_space<vmem>>, vector<2x16x16xbf16>
    %360 = vector.shape_cast %359 : vector<2x16x16xbf16> to vector<32x16xbf16>
    %c8_394 = arith.constant 8 : index
    %c0_395 = arith.constant 0 : index
    %c0_396 = arith.constant 0 : index
    %361 = vector.load %arg10[%c8_394, %c0_395, %c0_396] : memref<11x16x8xbf16, #tpu.memory_space<vmem>>, vector<1x16x8xbf16>
    %362 = vector.shape_cast %361 : vector<1x16x8xbf16> to vector<16x8xbf16>
    %cst_397 = arith.constant dense<0.000000e+00> : vector<32x8xf32>
    %363 = tpu.matmul %360, %362, %cst_397 {dimension_numbers = #tpu.dot_dimension_numbers<[1], [0], [0], [1], [0, 0, 1, 1], [], []>} : vector<32x16xbf16>, vector<16x8xbf16>, vector<32x8xf32> -> vector<32x8xf32>
    %364 = arith.addf %358, %363 : vector<32x8xf32>
    %c0_398 = arith.constant 0 : index
    %c12_399 = arith.constant 12 : index
    %c0_400 = arith.constant 0 : index
    %365 = vector.load %arg22[%c0_398, %c12_399, %c0_400] : memref<2x32x32xbf16, #tpu.memory_space<vmem>>, vector<2x16x16xbf16>
    %366 = vector.shape_cast %365 : vector<2x16x16xbf16> to vector<32x16xbf16>
    %c9_401 = arith.constant 9 : index
    %c0_402 = arith.constant 0 : index
    %c0_403 = arith.constant 0 : index
    %367 = vector.load %arg10[%c9_401, %c0_402, %c0_403] : memref<11x16x8xbf16, #tpu.memory_space<vmem>>, vector<1x16x8xbf16>
    %368 = vector.shape_cast %367 : vector<1x16x8xbf16> to vector<16x8xbf16>
    %cst_404 = arith.constant dense<0.000000e+00> : vector<32x8xf32>
    %369 = tpu.matmul %366, %368, %cst_404 {dimension_numbers = #tpu.dot_dimension_numbers<[1], [0], [0], [1], [0, 0, 1, 1], [], []>} : vector<32x16xbf16>, vector<16x8xbf16>, vector<32x8xf32> -> vector<32x8xf32>
    %370 = arith.addf %364, %369 : vector<32x8xf32>
    %c0_405 = arith.constant 0 : index
    %c13_406 = arith.constant 13 : index
    %c0_407 = arith.constant 0 : index
    %371 = vector.load %arg22[%c0_405, %c13_406, %c0_407] : memref<2x32x32xbf16, #tpu.memory_space<vmem>>, vector<2x16x16xbf16>
    %372 = vector.shape_cast %371 : vector<2x16x16xbf16> to vector<32x16xbf16>
    %c10_408 = arith.constant 10 : index
    %c0_409 = arith.constant 0 : index
    %c0_410 = arith.constant 0 : index
    %373 = vector.load %arg10[%c10_408, %c0_409, %c0_410] : memref<11x16x8xbf16, #tpu.memory_space<vmem>>, vector<1x16x8xbf16>
    %374 = vector.shape_cast %373 : vector<1x16x8xbf16> to vector<16x8xbf16>
    %cst_411 = arith.constant dense<0.000000e+00> : vector<32x8xf32>
    %375 = tpu.matmul %372, %374, %cst_411 {dimension_numbers = #tpu.dot_dimension_numbers<[1], [0], [0], [1], [0, 0, 1, 1], [], []>} : vector<32x16xbf16>, vector<16x8xbf16>, vector<32x8xf32> -> vector<32x8xf32>
    %376 = arith.addf %370, %375 : vector<32x8xf32>
    %c0_412 = arith.constant 0 : index
    %c0_413 = arith.constant 0 : index
    %377 = vector.load %arg11[%c0_412, %c0_413] : memref<1x8xf32, #tpu.memory_space<vmem>>, vector<1x8xf32>
    %378 = vector.broadcast %377 : vector<1x8xf32> to vector<32x8xf32>
    %379 = arith.addf %376, %378 : vector<32x8xf32>
    %cst_414 = arith.constant 0.00999999977 : f32
    %380 = vector.broadcast %cst_414 : f32 to vector<32x8xf32>
    %381 = arith.mulf %380, %379 : vector<32x8xf32>
    %382 = arith.maximumf %379, %381 : vector<32x8xf32>
    %383 = arith.truncf %382 : vector<32x8xf32> to vector<32x8xbf16>
    %384 = vector.shape_cast %383 : vector<32x8xbf16> to vector<2x16x8xbf16>
    %c0_415 = arith.constant 0 : index
    %c8_416 = arith.constant 8 : index
    %c0_417 = arith.constant 0 : index
    %385 = vector.load %arg22[%c0_415, %c8_416, %c0_417] : memref<2x32x32xbf16, #tpu.memory_space<vmem>>, vector<2x16x8xbf16>
    tpu.vector_store %arg22[%c0_415, %c8_416, %c0_417], %384 {strides = array<i32>} : memref<2x32x32xbf16, #tpu.memory_space<vmem>>, vector<2x16x8xbf16>,
    %cst_418 = arith.constant 0.000000e+00 : f32
    %386 = vector.broadcast %cst_418 : f32 to vector<32x4xf32>
    %c0_419 = arith.constant 0 : index
    %c3_420 = arith.constant 3 : index
    %c0_421 = arith.constant 0 : index
    %387 = vector.load %arg22[%c0_419, %c3_420, %c0_421] : memref<2x32x32xbf16, #tpu.memory_space<vmem>>, vector<2x16x8xbf16>
    %388 = vector.shape_cast %387 : vector<2x16x8xbf16> to vector<32x8xbf16>
    %c0_422 = arith.constant 0 : index
    %c0_423 = arith.constant 0 : index
    %c0_424 = arith.constant 0 : index
    %389 = vector.load %arg12[%c0_422, %c0_423, %c0_424] : memref<11x8x4xbf16, #tpu.memory_space<vmem>>, vector<1x8x4xbf16>
    %390 = vector.shape_cast %389 : vector<1x8x4xbf16> to vector<8x4xbf16>
    %cst_425 = arith.constant dense<0.000000e+00> : vector<32x4xf32>
    %391 = tpu.matmul %388, %390, %cst_425 {dimension_numbers = #tpu.dot_dimension_numbers<[1], [0], [0], [1], [0, 0, 1, 1], [], []>} : vector<32x8xbf16>, vector<8x4xbf16>, vector<32x4xf32> -> vector<32x4xf32>
    %392 = arith.addf %386, %391 : vector<32x4xf32>
    %c0_426 = arith.constant 0 : index
    %c4_427 = arith.constant 4 : index
    %c0_428 = arith.constant 0 : index
    %393 = vector.load %arg22[%c0_426, %c4_427, %c0_428] : memref<2x32x32xbf16, #tpu.memory_space<vmem>>, vector<2x16x8xbf16>
    %394 = vector.shape_cast %393 : vector<2x16x8xbf16> to vector<32x8xbf16>
    %c1_429 = arith.constant 1 : index
    %c0_430 = arith.constant 0 : index
    %c0_431 = arith.constant 0 : index
    %395 = vector.load %arg12[%c1_429, %c0_430, %c0_431] : memref<11x8x4xbf16, #tpu.memory_space<vmem>>, vector<1x8x4xbf16>
    %396 = vector.shape_cast %395 : vector<1x8x4xbf16> to vector<8x4xbf16>
    %cst_432 = arith.constant dense<0.000000e+00> : vector<32x4xf32>
    %397 = tpu.matmul %394, %396, %cst_432 {dimension_numbers = #tpu.dot_dimension_numbers<[1], [0], [0], [1], [0, 0, 1, 1], [], []>} : vector<32x8xbf16>, vector<8x4xbf16>, vector<32x4xf32> -> vector<32x4xf32>
    %398 = arith.addf %392, %397 : vector<32x4xf32>
    %c0_433 = arith.constant 0 : index
    %c5_434 = arith.constant 5 : index
    %c0_435 = arith.constant 0 : index
    %399 = vector.load %arg22[%c0_433, %c5_434, %c0_435] : memref<2x32x32xbf16, #tpu.memory_space<vmem>>, vector<2x16x8xbf16>
    %400 = vector.shape_cast %399 : vector<2x16x8xbf16> to vector<32x8xbf16>
    %c2_436 = arith.constant 2 : index
    %c0_437 = arith.constant 0 : index
    %c0_438 = arith.constant 0 : index
    %401 = vector.load %arg12[%c2_436, %c0_437, %c0_438] : memref<11x8x4xbf16, #tpu.memory_space<vmem>>, vector<1x8x4xbf16>
    %402 = vector.shape_cast %401 : vector<1x8x4xbf16> to vector<8x4xbf16>
    %cst_439 = arith.constant dense<0.000000e+00> : vector<32x4xf32>
    %403 = tpu.matmul %400, %402, %cst_439 {dimension_numbers = #tpu.dot_dimension_numbers<[1], [0], [0], [1], [0, 0, 1, 1], [], []>} : vector<32x8xbf16>, vector<8x4xbf16>, vector<32x4xf32> -> vector<32x4xf32>
    %404 = arith.addf %398, %403 : vector<32x4xf32>
    %c0_440 = arith.constant 0 : index
    %c6_441 = arith.constant 6 : index
    %c0_442 = arith.constant 0 : index
    %405 = vector.load %arg22[%c0_440, %c6_441, %c0_442] : memref<2x32x32xbf16, #tpu.memory_space<vmem>>, vector<2x16x8xbf16>
    %406 = vector.shape_cast %405 : vector<2x16x8xbf16> to vector<32x8xbf16>
    %c3_443 = arith.constant 3 : index
    %c0_444 = arith.constant 0 : index
    %c0_445 = arith.constant 0 : index
    %407 = vector.load %arg12[%c3_443, %c0_444, %c0_445] : memref<11x8x4xbf16, #tpu.memory_space<vmem>>, vector<1x8x4xbf16>
    %408 = vector.shape_cast %407 : vector<1x8x4xbf16> to vector<8x4xbf16>
    %cst_446 = arith.constant dense<0.000000e+00> : vector<32x4xf32>
    %409 = tpu.matmul %406, %408, %cst_446 {dimension_numbers = #tpu.dot_dimension_numbers<[1], [0], [0], [1], [0, 0, 1, 1], [], []>} : vector<32x8xbf16>, vector<8x4xbf16>, vector<32x4xf32> -> vector<32x4xf32>
    %410 = arith.addf %404, %409 : vector<32x4xf32>
    %c0_447 = arith.constant 0 : index
    %c7_448 = arith.constant 7 : index
    %c0_449 = arith.constant 0 : index
    %411 = vector.load %arg22[%c0_447, %c7_448, %c0_449] : memref<2x32x32xbf16, #tpu.memory_space<vmem>>, vector<2x16x8xbf16>
    %412 = vector.shape_cast %411 : vector<2x16x8xbf16> to vector<32x8xbf16>
    %c4_450 = arith.constant 4 : index
    %c0_451 = arith.constant 0 : index
    %c0_452 = arith.constant 0 : index
    %413 = vector.load %arg12[%c4_450, %c0_451, %c0_452] : memref<11x8x4xbf16, #tpu.memory_space<vmem>>, vector<1x8x4xbf16>
    %414 = vector.shape_cast %413 : vector<1x8x4xbf16> to vector<8x4xbf16>
    %cst_453 = arith.constant dense<0.000000e+00> : vector<32x4xf32>
    %415 = tpu.matmul %412, %414, %cst_453 {dimension_numbers = #tpu.dot_dimension_numbers<[1], [0], [0], [1], [0, 0, 1, 1], [], []>} : vector<32x8xbf16>, vector<8x4xbf16>, vector<32x4xf32> -> vector<32x4xf32>
    %416 = arith.addf %410, %415 : vector<32x4xf32>
    %c0_454 = arith.constant 0 : index
    %c8_455 = arith.constant 8 : index
    %c0_456 = arith.constant 0 : index
    %417 = vector.load %arg22[%c0_454, %c8_455, %c0_456] : memref<2x32x32xbf16, #tpu.memory_space<vmem>>, vector<2x16x8xbf16>
    %418 = vector.shape_cast %417 : vector<2x16x8xbf16> to vector<32x8xbf16>
    %c5_457 = arith.constant 5 : index
    %c0_458 = arith.constant 0 : index
    %c0_459 = arith.constant 0 : index
    %419 = vector.load %arg12[%c5_457, %c0_458, %c0_459] : memref<11x8x4xbf16, #tpu.memory_space<vmem>>, vector<1x8x4xbf16>
    %420 = vector.shape_cast %419 : vector<1x8x4xbf16> to vector<8x4xbf16>
    %cst_460 = arith.constant dense<0.000000e+00> : vector<32x4xf32>
    %421 = tpu.matmul %418, %420, %cst_460 {dimension_numbers = #tpu.dot_dimension_numbers<[1], [0], [0], [1], [0, 0, 1, 1], [], []>} : vector<32x8xbf16>, vector<8x4xbf16>, vector<32x4xf32> -> vector<32x4xf32>
    %422 = arith.addf %416, %421 : vector<32x4xf32>
    %c0_461 = arith.constant 0 : index
    %c9_462 = arith.constant 9 : index
    %c0_463 = arith.constant 0 : index
    %423 = vector.load %arg22[%c0_461, %c9_462, %c0_463] : memref<2x32x32xbf16, #tpu.memory_space<vmem>>, vector<2x16x8xbf16>
    %424 = vector.shape_cast %423 : vector<2x16x8xbf16> to vector<32x8xbf16>
    %c6_464 = arith.constant 6 : index
    %c0_465 = arith.constant 0 : index
    %c0_466 = arith.constant 0 : index
    %425 = vector.load %arg12[%c6_464, %c0_465, %c0_466] : memref<11x8x4xbf16, #tpu.memory_space<vmem>>, vector<1x8x4xbf16>
    %426 = vector.shape_cast %425 : vector<1x8x4xbf16> to vector<8x4xbf16>
    %cst_467 = arith.constant dense<0.000000e+00> : vector<32x4xf32>
    %427 = tpu.matmul %424, %426, %cst_467 {dimension_numbers = #tpu.dot_dimension_numbers<[1], [0], [0], [1], [0, 0, 1, 1], [], []>} : vector<32x8xbf16>, vector<8x4xbf16>, vector<32x4xf32> -> vector<32x4xf32>
    %428 = arith.addf %422, %427 : vector<32x4xf32>
    %c0_468 = arith.constant 0 : index
    %c10_469 = arith.constant 10 : index
    %c0_470 = arith.constant 0 : index
    %429 = vector.load %arg22[%c0_468, %c10_469, %c0_470] : memref<2x32x32xbf16, #tpu.memory_space<vmem>>, vector<2x16x8xbf16>
    %430 = vector.shape_cast %429 : vector<2x16x8xbf16> to vector<32x8xbf16>
    %c7_471 = arith.constant 7 : index
    %c0_472 = arith.constant 0 : index
    %c0_473 = arith.constant 0 : index
    %431 = vector.load %arg12[%c7_471, %c0_472, %c0_473] : memref<11x8x4xbf16, #tpu.memory_space<vmem>>, vector<1x8x4xbf16>
    %432 = vector.shape_cast %431 : vector<1x8x4xbf16> to vector<8x4xbf16>
    %cst_474 = arith.constant dense<0.000000e+00> : vector<32x4xf32>
    %433 = tpu.matmul %430, %432, %cst_474 {dimension_numbers = #tpu.dot_dimension_numbers<[1], [0], [0], [1], [0, 0, 1, 1], [], []>} : vector<32x8xbf16>, vector<8x4xbf16>, vector<32x4xf32> -> vector<32x4xf32>
    %434 = arith.addf %428, %433 : vector<32x4xf32>
    %c0_475 = arith.constant 0 : index
    %c11_476 = arith.constant 11 : index
    %c0_477 = arith.constant 0 : index
    %435 = vector.load %arg22[%c0_475, %c11_476, %c0_477] : memref<2x32x32xbf16, #tpu.memory_space<vmem>>, vector<2x16x8xbf16>
    %436 = vector.shape_cast %435 : vector<2x16x8xbf16> to vector<32x8xbf16>
    %c8_478 = arith.constant 8 : index
    %c0_479 = arith.constant 0 : index
    %c0_480 = arith.constant 0 : index
    %437 = vector.load %arg12[%c8_478, %c0_479, %c0_480] : memref<11x8x4xbf16, #tpu.memory_space<vmem>>, vector<1x8x4xbf16>
    %438 = vector.shape_cast %437 : vector<1x8x4xbf16> to vector<8x4xbf16>
    %cst_481 = arith.constant dense<0.000000e+00> : vector<32x4xf32>
    %439 = tpu.matmul %436, %438, %cst_481 {dimension_numbers = #tpu.dot_dimension_numbers<[1], [0], [0], [1], [0, 0, 1, 1], [], []>} : vector<32x8xbf16>, vector<8x4xbf16>, vector<32x4xf32> -> vector<32x4xf32>
    %440 = arith.addf %434, %439 : vector<32x4xf32>
    %c0_482 = arith.constant 0 : index
    %c12_483 = arith.constant 12 : index
    %c0_484 = arith.constant 0 : index
    %441 = vector.load %arg22[%c0_482, %c12_483, %c0_484] : memref<2x32x32xbf16, #tpu.memory_space<vmem>>, vector<2x16x8xbf16>
    %442 = vector.shape_cast %441 : vector<2x16x8xbf16> to vector<32x8xbf16>
    %c9_485 = arith.constant 9 : index
    %c0_486 = arith.constant 0 : index
    %c0_487 = arith.constant 0 : index
    %443 = vector.load %arg12[%c9_485, %c0_486, %c0_487] : memref<11x8x4xbf16, #tpu.memory_space<vmem>>, vector<1x8x4xbf16>
    %444 = vector.shape_cast %443 : vector<1x8x4xbf16> to vector<8x4xbf16>
    %cst_488 = arith.constant dense<0.000000e+00> : vector<32x4xf32>
    %445 = tpu.matmul %442, %444, %cst_488 {dimension_numbers = #tpu.dot_dimension_numbers<[1], [0], [0], [1], [0, 0, 1, 1], [], []>} : vector<32x8xbf16>, vector<8x4xbf16>, vector<32x4xf32> -> vector<32x4xf32>
    %446 = arith.addf %440, %445 : vector<32x4xf32>
    %c0_489 = arith.constant 0 : index
    %c13_490 = arith.constant 13 : index
    %c0_491 = arith.constant 0 : index
    %447 = vector.load %arg22[%c0_489, %c13_490, %c0_491] : memref<2x32x32xbf16, #tpu.memory_space<vmem>>, vector<2x16x8xbf16>
    %448 = vector.shape_cast %447 : vector<2x16x8xbf16> to vector<32x8xbf16>
    %c10_492 = arith.constant 10 : index
    %c0_493 = arith.constant 0 : index
    %c0_494 = arith.constant 0 : index
    %449 = vector.load %arg12[%c10_492, %c0_493, %c0_494] : memref<11x8x4xbf16, #tpu.memory_space<vmem>>, vector<1x8x4xbf16>
    %450 = vector.shape_cast %449 : vector<1x8x4xbf16> to vector<8x4xbf16>
    %cst_495 = arith.constant dense<0.000000e+00> : vector<32x4xf32>
    %451 = tpu.matmul %448, %450, %cst_495 {dimension_numbers = #tpu.dot_dimension_numbers<[1], [0], [0], [1], [0, 0, 1, 1], [], []>} : vector<32x8xbf16>, vector<8x4xbf16>, vector<32x4xf32> -> vector<32x4xf32>
    %452 = arith.addf %446, %451 : vector<32x4xf32>
    %c0_496 = arith.constant 0 : index
    %c0_497 = arith.constant 0 : index
    %453 = vector.load %arg13[%c0_496, %c0_497] : memref<1x4xf32, #tpu.memory_space<vmem>>, vector<1x4xf32>
    %454 = vector.broadcast %453 : vector<1x4xf32> to vector<32x4xf32>
    %455 = arith.addf %452, %454 : vector<32x4xf32>
    %456 = vector.shape_cast %455 : vector<32x4xf32> to vector<2x16x4xf32>
    %cst_498 = arith.constant dense<0xFF800000> : vector<2x4xf32>
    %457 = vector.multi_reduction <maximumf>, %456, %cst_498 [1] : vector<2x16x4xf32> to vector<2x4xf32>
    %458 = vector.shape_cast %457 : vector<2x4xf32> to vector<2x1x4xf32>
    %459 = vector.broadcast %458 : vector<2x1x4xf32> to vector<2x16x4xf32>
    %460 = arith.subf %456, %459 : vector<2x16x4xf32>
    %461 = math.exp %460 : vector<2x16x4xf32>
    %cst_499 = arith.constant dense<0.000000e+00> : vector<2x4xf32>
    %462 = vector.multi_reduction <add>, %461, %cst_499 [1] : vector<2x16x4xf32> to vector<2x4xf32>
    %463 = vector.shape_cast %462 : vector<2x4xf32> to vector<2x1x4xf32>
    %cst_500 = arith.constant 1.000000e+00 : f32
    %464 = vector.broadcast %cst_500 : f32 to vector<2x1x4xf32>
    %465 = arith.divf %464, %463 : vector<2x1x4xf32>
    %466 = vector.broadcast %465 : vector<2x1x4xf32> to vector<2x16x4xf32>
    %467 = arith.mulf %461, %466 : vector<2x16x4xf32>
    %c0_501 = arith.constant 0 : index
    %c0_502 = arith.constant 0 : index
    %c0_503 = arith.constant 0 : index
    %c0_504 = arith.constant 0 : index
    %468 = vector.load %arg1[%c0_501, %c0_502, %c0_503, %c0_504] : memref<1x2x16x4xbf16, #tpu.memory_space<vmem>>, vector<1x2x16x4xbf16>
    %469 = vector.shape_cast %468 : vector<1x2x16x4xbf16> to vector<2x16x4xbf16>
    %470 = arith.extf %469 : vector<2x16x4xbf16> to vector<2x16x4xf32>
    %471 = arith.mulf %467, %470 : vector<2x16x4xf32>
    %cst_505 = arith.constant dense<0.000000e+00> : vector<2x4xf32>
    %472 = vector.multi_reduction <add>, %471, %cst_505 [1] : vector<2x16x4xf32> to vector<2x4xf32>
    %c0_506 = arith.constant 0 : index
    %c0_507 = arith.constant 0 : index
    %473 = vector.load %arg14[%c0_506, %c0_507] : memref<4x32xf32, #tpu.memory_space<vmem>>, vector<4x32xf32>
    %cst_508 = arith.constant dense<0.000000e+00> : vector<2x32xf32>
    %474 = tpu.matmul %472, %473, %cst_508 {dimension_numbers = #tpu.dot_dimension_numbers<[1], [0], [0], [1], [0, 0, 1, 1], [], []>} : vector<2x4xf32>, vector<4x32xf32>, vector<2x32xf32> -> vector<2x32xf32>
    %c0_509 = arith.constant 0 : index
    %c0_510 = arith.constant 0 : index
    %475 = vector.load %arg15[%c0_509, %c0_510] : memref<1x32xf32, #tpu.memory_space<vmem>>, vector<1x32xf32>
    %476 = vector.broadcast %475 : vector<1x32xf32> to vector<2x32xf32>
    %477 = arith.addf %474, %476 : vector<2x32xf32>
    %cst_511 = arith.constant 0.00999999977 : f32
    %478 = vector.broadcast %cst_511 : f32 to vector<2x32xf32>
    %479 = arith.mulf %478, %477 : vector<2x32xf32>
    %480 = arith.maximumf %477, %479 : vector<2x32xf32>
    %c0_512 = arith.constant 0 : index
    %c0_513 = arith.constant 0 : index
    %481 = vector.load %arg16[%c0_512, %c0_513] : memref<32x32xf32, #tpu.memory_space<vmem>>, vector<32x32xf32>
    %cst_514 = arith.constant dense<0.000000e+00> : vector<2x32xf32>
    %482 = tpu.matmul %480, %481, %cst_514 {dimension_numbers = #tpu.dot_dimension_numbers<[1], [0], [0], [1], [0, 0, 1, 1], [], []>} : vector<2x32xf32>, vector<32x32xf32>, vector<2x32xf32> -> vector<2x32xf32>
    %c0_515 = arith.constant 0 : index
    %c0_516 = arith.constant 0 : index
    %483 = vector.load %arg17[%c0_515, %c0_516] : memref<1x32xf32, #tpu.memory_space<vmem>>, vector<1x32xf32>
    %484 = vector.broadcast %483 : vector<1x32xf32> to vector<2x32xf32>
    %485 = arith.addf %482, %484 : vector<2x32xf32>
    %cst_517 = arith.constant 0.00999999977 : f32
    %486 = vector.broadcast %cst_517 : f32 to vector<2x32xf32>
    %487 = arith.mulf %486, %485 : vector<2x32xf32>
    %488 = arith.maximumf %485, %487 : vector<2x32xf32>
    %c0_518 = arith.constant 0 : index
    %c0_519 = arith.constant 0 : index
    %489 = vector.load %arg18[%c0_518, %c0_519] : memref<32x1xf32, #tpu.memory_space<vmem>>, vector<32x1xf32>
    %cst_520 = arith.constant dense<0.000000e+00> : vector<2x1xf32>
    %490 = tpu.matmul %488, %489, %cst_520 {dimension_numbers = #tpu.dot_dimension_numbers<[1], [0], [0], [1], [0, 0, 1, 1], [], []>} : vector<2x32xf32>, vector<32x1xf32>, vector<2x1xf32> -> vector<2x1xf32>
    %c0_521 = arith.constant 0 : index
    %c0_522 = arith.constant 0 : index
    %491 = vector.load %arg19[%c0_521, %c0_522] : memref<1x1xf32, #tpu.memory_space<vmem>>, vector<1x1xf32>
    %492 = vector.broadcast %491 : vector<1x1xf32> to vector<2x1xf32>
    %493 = arith.addf %490, %492 : vector<2x1xf32>
    %494 = tpu.transpose %472, [1, 0] : vector<2x4xf32> -> vector<4x2xf32>
    %c0_523 = arith.constant 0 : index
    %c0_524 = arith.constant 0 : index
    %c0_525 = arith.constant 0 : index
    %495 = vector.load %arg20[%c0_523, %c0_524, %c0_525] : memref<1x4x2xf32, #tpu.memory_space<vmem>>, vector<1x4x2xf32>
    %496 = vector.shape_cast %495 : vector<1x4x2xf32> to vector<4x2xf32>
    %497 = vector.shape_cast %494 : vector<4x2xf32> to vector<1x4x2xf32>
    tpu.vector_store %arg20[%c0_523, %c0_524, %c0_525], %497 {strides = array<i32>} : memref<1x4x2xf32, #tpu.memory_space<vmem>>, vector<1x4x2xf32>,
    %498 = tpu.transpose %493, [1, 0] : vector<2x1xf32> -> vector<1x2xf32>
    %c0_526 = arith.constant 0 : index
    %c0_527 = arith.constant 0 : index
    %c0_528 = arith.constant 0 : index
    %499 = vector.load %arg21[%c0_526, %c0_527, %c0_528] : memref<1x1x2xf32, #tpu.memory_space<vmem>>, vector<1x1x2xf32>
    %500 = vector.shape_cast %499 : vector<1x1x2xf32> to vector<1x2xf32>
    %501 = vector.shape_cast %498 : vector<1x2xf32> to vector<1x1x2xf32>
    tpu.vector_store %arg21[%c0_526, %c0_527, %c0_528], %501 {strides = array<i32>} : memref<1x1x2xf32, #tpu.memory_space<vmem>>, vector<1x1x2xf32>,
    return
  }
  func.func @transform_0(%arg0: i32) -> (i32, i32, i32, i32) {
    %c0_i32 = arith.constant 0 : i32
    %c0_i32_0 = arith.constant 0 : i32
    %c0_i32_1 = arith.constant 0 : i32
    %c0_i32_2 = arith.constant 0 : i32
    return %arg0, %c0_i32, %c0_i32_0, %c0_i32_1 : i32, i32, i32, i32
  }
  func.func @transform_1(%arg0: i32) -> (i32, i32, i32) {
    %c0_i32 = arith.constant 0 : i32
    %c0_i32_0 = arith.constant 0 : i32
    %c0_i32_1 = arith.constant 0 : i32
    %c0_i32_2 = arith.constant 0 : i32
    return %c0_i32, %c0_i32_0, %c0_i32_1 : i32, i32, i32
  }
  func.func @transform_2(%arg0: i32) -> (i32, i32) {
    %c0_i32 = arith.constant 0 : i32
    %c0_i32_0 = arith.constant 0 : i32
    %c0_i32_1 = arith.constant 0 : i32
    return %c0_i32, %c0_i32_0 : i32, i32
  }
  func.func @transform_3(%arg0: i32) -> (i32, i32, i32) {
    %c0_i32 = arith.constant 0 : i32
    %c0_i32_0 = arith.constant 0 : i32
    %c0_i32_1 = arith.constant 0 : i32
    %c0_i32_2 = arith.constant 0 : i32
    return %c0_i32, %c0_i32_0, %c0_i32_1 : i32, i32, i32
  }
  func.func @transform_4(%arg0: i32) -> (i32, i32) {
    %c0_i32 = arith.constant 0 : i32
    %c0_i32_0 = arith.constant 0 : i32
    %c0_i32_1 = arith.constant 0 : i32
    return %c0_i32, %c0_i32_0 : i32, i32
  }
  func.func @transform_5(%arg0: i32) -> (i32, i32, i32) {
    %c0_i32 = arith.constant 0 : i32
    %c0_i32_0 = arith.constant 0 : i32
    %c0_i32_1 = arith.constant 0 : i32
    %c0_i32_2 = arith.constant 0 : i32
    return %c0_i32, %c0_i32_0, %c0_i32_1 : i32, i32, i32
  }
  func.func @transform_6(%arg0: i32) -> (i32, i32) {
    %c0_i32 = arith.constant 0 : i32
    %c0_i32_0 = arith.constant 0 : i32
    %c0_i32_1 = arith.constant 0 : i32
    return %c0_i32, %c0_i32_0 : i32, i32
  }
  func.func @transform_7(%arg0: i32) -> (i32, i32, i32) {
    %c0_i32 = arith.constant 0 : i32
    %c0_i32_0 = arith.constant 0 : i32
    %c0_i32_1 = arith.constant 0 : i32
    %c0_i32_2 = arith.constant 0 : i32
    return %c0_i32, %c0_i32_0, %c0_i32_1 : i32, i32, i32
  }
  func.func @transform_8(%arg0: i32) -> (i32, i32) {
    %c0_i32 = arith.constant 0 : i32
    %c0_i32_0 = arith.constant 0 : i32
    %c0_i32_1 = arith.constant 0 : i32
    return %c0_i32, %c0_i32_0 : i32, i32
  }
  func.func @transform_9(%arg0: i32) -> (i32, i32, i32) {
    %c0_i32 = arith.constant 0 : i32
    %c0_i32_0 = arith.constant 0 : i32
    %c0_i32_1 = arith.constant 0 : i32
    %c0_i32_2 = arith.constant 0 : i32
    return %c0_i32, %c0_i32_0, %c0_i32_1 : i32, i32, i32
  }
  func.func @transform_10(%arg0: i32) -> (i32, i32) {
    %c0_i32 = arith.constant 0 : i32
    %c0_i32_0 = arith.constant 0 : i32
    %c0_i32_1 = arith.constant 0 : i32
    return %c0_i32, %c0_i32_0 : i32, i32
  }
  func.func @transform_11(%arg0: i32) -> (i32, i32, i32) {
    %c0_i32 = arith.constant 0 : i32
    %c0_i32_0 = arith.constant 0 : i32
    %c0_i32_1 = arith.constant 0 : i32
    %c0_i32_2 = arith.constant 0 : i32
    return %c0_i32, %c0_i32_0, %c0_i32_1 : i32, i32, i32
  }
  func.func @transform_12(%arg0: i32) -> (i32, i32) {
    %c0_i32 = arith.constant 0 : i32
    %c0_i32_0 = arith.constant 0 : i32
    %c0_i32_1 = arith.constant 0 : i32
    return %c0_i32, %c0_i32_0 : i32, i32
  }
  func.func @transform_13(%arg0: i32) -> (i32, i32) {
    %c0_i32 = arith.constant 0 : i32
    %c0_i32_0 = arith.constant 0 : i32
    %c0_i32_1 = arith.constant 0 : i32
    return %c0_i32, %c0_i32_0 : i32, i32
  }
  func.func @transform_14(%arg0: i32) -> (i32, i32) {
    %c0_i32 = arith.constant 0 : i32
    %c0_i32_0 = arith.constant 0 : i32
    %c0_i32_1 = arith.constant 0 : i32
    return %c0_i32, %c0_i32_0 : i32, i32
  }
  func.func @transform_15(%arg0: i32) -> (i32, i32) {
    %c0_i32 = arith.constant 0 : i32
    %c0_i32_0 = arith.constant 0 : i32
    %c0_i32_1 = arith.constant 0 : i32
    return %c0_i32, %c0_i32_0 : i32, i32
  }
  func.func @transform_16(%arg0: i32) -> (i32, i32) {
    %c0_i32 = arith.constant 0 : i32
    %c0_i32_0 = arith.constant 0 : i32
    %c0_i32_1 = arith.constant 0 : i32
    return %c0_i32, %c0_i32_0 : i32, i32
  }
  func.func @transform_17(%arg0: i32) -> (i32, i32) {
    %c0_i32 = arith.constant 0 : i32
    %c0_i32_0 = arith.constant 0 : i32
    %c0_i32_1 = arith.constant 0 : i32
    return %c0_i32, %c0_i32_0 : i32, i32
  }
  func.func @transform_18(%arg0: i32) -> (i32, i32) {
    %c0_i32 = arith.constant 0 : i32
    %c0_i32_0 = arith.constant 0 : i32
    %c0_i32_1 = arith.constant 0 : i32
    return %c0_i32, %c0_i32_0 : i32, i32
  }
  func.func @transform_19(%arg0: i32) -> (i32, i32, i32) {
    %c0_i32 = arith.constant 0 : i32
    %c0_i32_0 = arith.constant 0 : i32
    %c0_i32_1 = arith.constant 0 : i32
    return %arg0, %c0_i32, %c0_i32_0 : i32, i32, i32
  }
  func.func @transform_20(%arg0: i32) -> (i32, i32, i32) {
    %c0_i32 = arith.constant 0 : i32
    %c0_i32_0 = arith.constant 0 : i32
    %c0_i32_1 = arith.constant 0 : i32
    return %arg0, %c0_i32, %c0_i32_0 : i32, i32, i32
  }
}

</mosaic_0001>

<llo_original>
// kernel: tpu_custom_call.1
$region0: #{tpu_custom_call.1}
  #allocation0 [shape = 'u32[]', space=smem, size = 0x4, offset = 0x4, fixed_abs, tag = 'smem constant byte address 0x4 - core index']
  #allocation1 [shape = 'u32[72,128]{1,0:T(1,128)}', space=vmem, size = 0x9000, scoped, tag = 'internal scratch']
  #allocation2 [shape = 'bf16[2,32,32]{2,1,0:T(8,128)(2,1)}', space=vmem, size = 0x4000, scoped, tag = 'scratch operand']
  #allocation3 [shape = 'f32[1,1]{1,0:T(1,128)S(1)}', space=vmem, size = 0x200, scoped, tag = 'scoped memory for tpu_custom_call.1']
  %s0 = inlined_call_operand.vmem [shape: bf16[1,2,16,4], index: 0, kind: input, shape index: {}]
  %s1 = inlined_call_operand.vmem [shape: bf16[11,4,8], index: 1, kind: input, shape index: {}]
  %s2 = inlined_call_operand.vmem [shape: f32[1,8], index: 2, kind: input, shape index: {}]
  %s3 = inlined_call_operand.vmem [shape: bf16[11,8,16], index: 3, kind: input, shape index: {}]
  %s4 = inlined_call_operand.vmem [shape: f32[1,16], index: 4, kind: input, shape index: {}]
  %s5 = inlined_call_operand.vmem [shape: bf16[11,16,32], index: 5, kind: input, shape index: {}]
  %s6 = inlined_call_operand.vmem [shape: f32[1,32], index: 6, kind: input, shape index: {}]
  %s7 = inlined_call_operand.vmem [shape: bf16[11,32,16], index: 7, kind: input, shape index: {}]
  %s8 = inlined_call_operand.vmem [shape: f32[1,16], index: 8, kind: input, shape index: {}]
  %s9 = inlined_call_operand.vmem [shape: bf16[11,16,8], index: 9, kind: input, shape index: {}]
  %s10 = inlined_call_operand.vmem [shape: f32[1,8], index: 10, kind: input, shape index: {}]
  %s11 = inlined_call_operand.vmem [shape: bf16[11,8,4], index: 11, kind: input, shape index: {}]
  %s12 = inlined_call_operand.vmem [shape: f32[1,4], index: 12, kind: input, shape index: {}]
  %s13 = inlined_call_operand.vmem [shape: f32[4,32], index: 13, kind: input, shape index: {}]
  %s14 = inlined_call_operand.vmem [shape: f32[1,32], index: 14, kind: input, shape index: {}]
  %s15 = inlined_call_operand.vmem [shape: f32[32,32], index: 15, kind: input, shape index: {}]
  %s16 = inlined_call_operand.vmem [shape: f32[1,32], index: 16, kind: input, shape index: {}]
  %s17 = inlined_call_operand.vmem [shape: f32[32,1], index: 17, kind: input, shape index: {}]
  %s18 = inlined_call_operand.<no memory space> [shape: f32[1,1], index: 18, kind: input, shape index: {}]
  %s19 = inlined_call_operand.vmem [shape: f32[1,4,2], index: 19, kind: output, shape index: {0}]
  %s20 = inlined_call_operand.hbm [shape: f32[1,1,2], index: 20, kind: output, shape index: {1}]
  %21 = xla_tuple %s19, %s20
  %s22 = sld [smem:[#allocation0]]
  $region94: #{tpu_custom_call.1} parent=0
    _
  %s24 = ssub.s32 1, %s22
  %s25 = scalar_select 0, %s24, %s22
  %v26 = vstv %s18
  %27 = vst [vmem:[#allocation3] sm:$0x1] %v26
  $region1: #{tpu_custom_call.1} parent=0
    #allocation4 [shape = 'u8[512]{0}', space=vmem, size = 0x400, scoped, tag = 'output window, operand 1, single buffered']
    #allocation5 [shape = 's32[1]{0}', space=sflag, size = 0x4, scoped, tag = 'scoped memory for tpu_custom_call.1']
    %28 = vsyncpa [#allocation5], 0
    // Predicated region
    $region2: #{tpu_custom_call.1} parent=1 // pred_check
      _
    $region3: #{tpu_custom_call.1} parent=1 // pred_check_branch
      %30 = sbr.rel (0) target = $region5
    $region4: #{tpu_custom_call.1} parent=1 // pred_region
      _
    $region5: #{tpu_custom_call.1} parent=1 // pred_fallthru
      _
    // Predicated region
    $region6: #{tpu_custom_call.1} parent=1 // pred_check
      _
    $region7: #{tpu_custom_call.1} parent=1 // pred_check_branch
      %32 = sbr.rel (0) target = $region9
    $region8: #{tpu_custom_call.1} parent=1 // pred_region
      _
    $region9: #{tpu_custom_call.1} parent=1 // pred_fallthru
      _
    // Predicated region
    $region10: #{tpu_custom_call.1} parent=1 // pred_check
      _
    $region11: #{tpu_custom_call.1} parent=1 // pred_check_branch
      %34 = sbr.rel (0) target = $region13
    $region12: #{tpu_custom_call.1} parent=1 // pred_region
      _
    $region13: #{tpu_custom_call.1} parent=1 // pred_fallthru
      _
    // Predicated region
    $region14: #{tpu_custom_call.1} parent=1 // pred_check
      _
    $region15: #{tpu_custom_call.1} parent=1 // pred_check_branch
      %36 = sbr.rel (0) target = $region17
    $region16: #{tpu_custom_call.1} parent=1 // pred_region
      _
    $region17: #{tpu_custom_call.1} parent=1 // pred_fallthru
      _
    // Predicated region
    $region18: #{tpu_custom_call.1} parent=1 // pred_check
      _
    $region19: #{tpu_custom_call.1} parent=1 // pred_check_branch
      %38 = sbr.rel (0) target = $region21
    $region20: #{tpu_custom_call.1} parent=1 // pred_region
      _
    $region21: #{tpu_custom_call.1} parent=1 // pred_fallthru
      _
    // Predicated region
    $region22: #{tpu_custom_call.1} parent=1 // pred_check
      _
    $region23: #{tpu_custom_call.1} parent=1 // pred_check_branch
      %40 = sbr.rel (0) target = $region25
    $region24: #{tpu_custom_call.1} parent=1 // pred_region
      _
    $region25: #{tpu_custom_call.1} parent=1 // pred_fallthru
      _
    // Predicated region
    $region26: #{tpu_custom_call.1} parent=1 // pred_check
      _
    $region27: #{tpu_custom_call.1} parent=1 // pred_check_branch
      %42 = sbr.rel (0) target = $region29
    $region28: #{tpu_custom_call.1} parent=1 // pred_region
      _
    $region29: #{tpu_custom_call.1} parent=1 // pred_fallthru
      _
    // Predicated region
    $region30: #{tpu_custom_call.1} parent=1 // pred_check
      _
    $region31: #{tpu_custom_call.1} parent=1 // pred_check_branch
      %44 = sbr.rel (0) target = $region33
    $region32: #{tpu_custom_call.1} parent=1 // pred_region
      _
    $region33: #{tpu_custom_call.1} parent=1 // pred_fallthru
      _
    // Predicated region
    $region34: #{tpu_custom_call.1} parent=1 // pred_check
      _
    $region35: #{tpu_custom_call.1} parent=1 // pred_check_branch
      %46 = sbr.rel (0) target = $region37
    $region36: #{tpu_custom_call.1} parent=1 // pred_region
      _
    $region37: #{tpu_custom_call.1} parent=1 // pred_fallthru
      _
    // Predicated region
    $region38: #{tpu_custom_call.1} parent=1 // pred_check
      _
    $region39: #{tpu_custom_call.1} parent=1 // pred_check_branch
      %48 = sbr.rel (0) target = $region41
    $region40: #{tpu_custom_call.1} parent=1 // pred_region
      _
    $region41: #{tpu_custom_call.1} parent=1 // pred_fallthru
      _
    // Predicated region
    $region42: #{tpu_custom_call.1} parent=1 // pred_check
      _
    $region43: #{tpu_custom_call.1} parent=1 // pred_check_branch
      %50 = sbr.rel (0) target = $region45
    $region44: #{tpu_custom_call.1} parent=1 // pred_region
      _
    $region45: #{tpu_custom_call.1} parent=1 // pred_fallthru
      _
    // Predicated region
    $region46: #{tpu_custom_call.1} parent=1 // pred_check
      _
    $region47: #{tpu_custom_call.1} parent=1 // pred_check_branch
      %52 = sbr.rel (0) target = $region49
    $region48: #{tpu_custom_call.1} parent=1 // pred_region
      _
    $region49: #{tpu_custom_call.1} parent=1 // pred_fallthru
      _
    // Predicated region
    $region50: #{tpu_custom_call.1} parent=1 // pred_check
      _
    $region51: #{tpu_custom_call.1} parent=1 // pred_check_branch
      %54 = sbr.rel (0) target = $region53
    $region52: #{tpu_custom_call.1} parent=1 // pred_region
      _
    $region53: #{tpu_custom_call.1} parent=1 // pred_fallthru
      _
    // Predicated region
    $region54: #{tpu_custom_call.1} parent=1 // pred_check
      _
    $region55: #{tpu_custom_call.1} parent=1 // pred_check_branch
      %56 = sbr.rel (0) target = $region57
    $region56: #{tpu_custom_call.1} parent=1 // pred_region
      _
    $region57: #{tpu_custom_call.1} parent=1 // pred_fallthru
      _
    // Predicated region
    $region58: #{tpu_custom_call.1} parent=1 // pred_check
      _
    $region59: #{tpu_custom_call.1} parent=1 // pred_check_branch
      %58 = sbr.rel (0) target = $region61
    $region60: #{tpu_custom_call.1} parent=1 // pred_region
      _
    $region61: #{tpu_custom_call.1} parent=1 // pred_fallthru
      _
    // Predicated region
    $region62: #{tpu_custom_call.1} parent=1 // pred_check
      _
    $region63: #{tpu_custom_call.1} parent=1 // pred_check_branch
      %60 = sbr.rel (0) target = $region65
    $region64: #{tpu_custom_call.1} parent=1 // pred_region
      _
    $region65: #{tpu_custom_call.1} parent=1 // pred_fallthru
      _
    // Predicated region
    $region66: #{tpu_custom_call.1} parent=1 // pred_check
      _
    $region67: #{tpu_custom_call.1} parent=1 // pred_check_branch
      %62 = sbr.rel (0) target = $region69
    $region68: #{tpu_custom_call.1} parent=1 // pred_region
      _
    $region69: #{tpu_custom_call.1} parent=1 // pred_fallthru
      _
    // Predicated region
    $region70: #{tpu_custom_call.1} parent=1 // pred_check
      _
    $region71: #{tpu_custom_call.1} parent=1 // pred_check_branch
      %64 = sbr.rel (0) target = $region73
    $region72: #{tpu_custom_call.1} parent=1 // pred_region
      _
    $region73: #{tpu_custom_call.1} parent=1 // pred_fallthru
      _
    // Predicated region
    $region74: #{tpu_custom_call.1} parent=1 // pred_check
      _
    $region75: #{tpu_custom_call.1} parent=1 // pred_check_branch
      %66 = sbr.rel (0) target = $region77
    $region76: #{tpu_custom_call.1} parent=1 // pred_region
      _
    $region77: #{tpu_custom_call.1} parent=1 // pred_fallthru
      _
    %vm68 = vcmask 257024
    %69 = vst.msk [vmem:[#allocation2] sm:$0xf] %vm68, 0
    %70 = vst.msk [vmem:[#allocation2 + $0x10] sm:$0xf] %vm68, 0
    %71 = vst.msk [vmem:[#allocation2 + $0xc] sm:$0xf] %vm68, 0
    %72 = vst.msk [vmem:[#allocation2 + $0x1c] sm:$0xf] %vm68, 0
    %v73 = vld [vmem:[%s0] sm:$0xf]
    %v74 = vld [vmem:[%s0 + $0x4] sm:$0xf]
    %v75 = vld [vmem:[%s0 + $0x8] sm:$0xf]
    %v76 = vld [vmem:[%s0 + $0xc] sm:$0xf]
    %vm77 = vcmask 27648
    %78 = vst.msk [vmem:[#allocation2 + $0x4] sm:$0xf] %vm77, %v73
    %79 = vst.msk [vmem:[#allocation2 + $0x8] sm:$0xf] %vm77, %v74
    %80 = vst.msk [vmem:[#allocation2 + $0x14] sm:$0xf] %vm77, %v75
    %81 = vst.msk [vmem:[#allocation2 + $0x18] sm:$0xf] %vm77, %v76
    %v82 = vld [vmem:[#allocation2] sm:$0xe]
    %v83 = vld [vmem:[#allocation2 + $0x4] sm:$0xf]
    %v84 = vld [vmem:[#allocation2 + $0x8] sm:$0x3]
    %v85 = vld [vmem:[#allocation2 + $0x10] sm:$0xe]
    %v86 = vld [vmem:[#allocation2 + $0x14] sm:$0xf]
    %v87 = vld [vmem:[#allocation2 + $0x18] sm:$0x3]
    %vm88 = vsmask.f32 2304
    %vm89 = vsmask.f32 6416
    %vm90 = vmor %vm88, %vm89
    %v92 = vshrl.u32 %v82, 16
    %v94 = vrot.slane %v92, 5
    %v95 = vshll.u32 %v82, 16
    %v97 = vrot.slane %v95, 6
    %v98 = vor.u32 %v94, %v97
    %v99 = vrot.slane %v98, 4
    %v101 = vshrl.u32 %v83, 16
    %v103 = vrot.slane %v101, 5
    %v104 = vshll.u32 %v83, 16
    %v106 = vrot.slane %v104, 6
    %v107 = vor.u32 %v103, %v106
    %v108 = vsel %vm90, %v99, %v107
    %v109 = vrot.slane %v107, 4
    %v111 = vshrl.u32 %v84, 16
    %v113 = vrot.slane %v111, 5
    %v114 = vshll.u32 %v84, 16
    %v116 = vrot.slane %v114, 6
    %v117 = vor.u32 %v113, %v116
    %v118 = vsel %vm90, %v109, %v117
    %v120 = vshrl.u32 %v85, 16
    %v122 = vrot.slane %v120, 5
    %v123 = vshll.u32 %v85, 16
    %v125 = vrot.slane %v123, 6
    %v126 = vor.u32 %v122, %v125
    %v127 = vrot.slane %v126, 4
    %v129 = vshrl.u32 %v86, 16
    %v131 = vrot.slane %v129, 5
    %v132 = vshll.u32 %v86, 16
    %v134 = vrot.slane %v132, 6
    %v135 = vor.u32 %v131, %v134
    %v136 = vsel %vm90, %v127, %v135
    %v137 = vrot.slane %v135, 4
    %v139 = vshrl.u32 %v87, 16
    %v141 = vrot.slane %v139, 5
    %v142 = vshll.u32 %v87, 16
    %v144 = vrot.slane %v142, 6
    %v145 = vor.u32 %v141, %v144
    %v146 = vsel %vm90, %v137, %v145
    %v147 = vld [vmem:[%s1] sm:$0x3]
    %v148 = vld [vmem:[#allocation2] sm:$0xc]
    %v149 = vld [vmem:[#allocation2 + $0x10] sm:$0xc]
    %vm156 = vcmask 1041408
    %vm157 = vcmask 1045508
    %vm158 = vmor %vm156, %vm157
    %v159 = vrot.slane %v148, 6
    %v160 = vrot.slane %v159, 4
    %v161 = vrot.slane %v83, 6
    %v162 = vsel %vm158, %v160, %v161
    %v163 = vrot.slane %v161, 4
    %v164 = vrot.slane %v84, 6
    %v165 = vsel %vm158, %v163, %v164
    %v166 = vrot.slane %v149, 6
    %v167 = vrot.slane %v166, 4
    %v168 = vrot.slane %v86, 6
    %v169 = vsel %vm158, %v167, %v168
    %v170 = vrot.slane %v168, 4
    %v171 = vrot.slane %v87, 6
    %v172 = vsel %vm158, %v170, %v171
    %s173 = scalar_lea.vmem %s1, 2
    %v174 = vld [vmem:[%s173] sm:$0x3]
    %v175 = vunpack.c.l.b16 %v162
    %v176 = vunpack.c.l.b16 %v165
    %v177 = vunpack.c.l.b16 %v169
    %v178 = vunpack.c.l.b16 %v172
    %v179 = vpack.c.b16 %v176, %v175
    %v180 = vpack.c.b16 %v178, %v177
    %vm181 = vcmask 31744
    %v183 = vsel %vm181, %v179, 0
    %v186 = vsel %vm181, %v180, 0
    %vm188 = vcmask 1041408
    %v190 = vsel %vm188, %v174, 0
    %192 = vmatpush.bf16.msra.mxu0 0
    %193 = vmatpush.bf16.msra.mxu0 0
    %194 = vmatpush.bf16.msra.mxu0 0
    %195 = vmatpush.bf16.msra.mxu0 0
    %196 = vmatpush.bf16.msra.mxu0 0
    %197 = vmatpush.bf16.msra.mxu0 0
    %198 = vmatpush.bf16.msra.mxu0 0
    %199 = vmatpush.bf16.msra.mxu0 %v190
    %200 = vmatmul.bf16.gmra.mxu0 %v183
    %v201 = vpop.f32.mrf.mxu0
    %v202 = vadd.f32 0.0, %v201
    %v203 = vpop.f32.mrf.mxu0
    %v204 = vadd.f32 0.0, %v203
    %205 = vmatmul.bf16.gmra.mxu0 %v186
    %v206 = vpop.f32.mrf.mxu0
    %v207 = vadd.f32 0.0, %v206
    %v208 = vpop.f32.mrf.mxu0
    %v209 = vadd.f32 0.0, %v208
    %210 = vdwg.mxu0
    %v211 = vunpack.c.l.b16 %v108
    %v212 = vunpack.c.l.b16 %v118
    %v213 = vunpack.c.l.b16 %v136
    %v214 = vunpack.c.l.b16 %v146
    %v215 = vpack.c.b16 %v212, %v211
    %v216 = vpack.c.b16 %v214, %v213
    %v218 = vsel %vm181, %v215, 0
    %v221 = vsel %vm181, %v216, 0
    %v224 = vsel %vm188, %v147, 0
    %226 = vmatpush.bf16.msra.mxu0 0
    %227 = vmatpush.bf16.msra.mxu0 0
    %228 = vmatpush.bf16.msra.mxu0 0
    %229 = vmatpush.bf16.msra.mxu0 0
    %230 = vmatpush.bf16.msra.mxu0 0
    %231 = vmatpush.bf16.msra.mxu0 0
    %232 = vmatpush.bf16.msra.mxu0 0
    %233 = vmatpush.bf16.msra.mxu0 %v224
    %234 = vmatmul.bf16.gmra.mxu0 %v218
    %v235 = vpop.f32.mrf.mxu0
    %v236 = vadd.f32 %v202, %v235
    %v237 = vpop.f32.mrf.mxu0
    %v238 = vadd.f32 %v204, %v237
    %239 = vmatmul.bf16.gmra.mxu0 %v221
    %v240 = vpop.f32.mrf.mxu0
    %v241 = vadd.f32 %v207, %v240
    %v242 = vpop.f32.mrf.mxu0
    %v243 = vadd.f32 %v209, %v242
    %244 = vdwg.mxu0
    %v245 = vld [vmem:[#allocation2 + $0x8] sm:$0x7]
    %v246 = vld [vmem:[#allocation2 + $0x18] sm:$0x7]
    %vm247 = vsmask.f32 1280
    %vm248 = vsmask.f32 5392
    %vm249 = vmor %vm247, %vm248
    %v251 = vshrl.u32 %v148, 16
    %v253 = vrot.slane %v251, 6
    %v254 = vshll.u32 %v148, 16
    %v256 = vrot.slane %v254, 7
    %v257 = vor.u32 %v253, %v256
    %v258 = vrot.slane %v257, 4
    %v259 = vrot.slane %v101, 6
    %v260 = vrot.slane %v104, 7
    %v261 = vor.u32 %v259, %v260
    %v262 = vsel %vm249, %v258, %v261
    %v263 = vrot.slane %v261, 4
    %v265 = vshrl.u32 %v245, 16
    %v267 = vrot.slane %v265, 6
    %v268 = vshll.u32 %v245, 16
    %v270 = vrot.slane %v268, 7
    %v271 = vor.u32 %v267, %v270
    %v272 = vsel %vm249, %v263, %v271
    %v274 = vshrl.u32 %v149, 16
    %v276 = vrot.slane %v274, 6
    %v277 = vshll.u32 %v149, 16
    %v279 = vrot.slane %v277, 7
    %v280 = vor.u32 %v276, %v279
    %v281 = vrot.slane %v280, 4
    %v282 = vrot.slane %v129, 6
    %v283 = vrot.slane %v132, 7
    %v284 = vor.u32 %v282, %v283
    %v285 = vsel %vm249, %v281, %v284
    %v286 = vrot.slane %v284, 4
    %v288 = vshrl.u32 %v246, 16
    %v290 = vrot.slane %v288, 6
    %v291 = vshll.u32 %v246, 16
    %v293 = vrot.slane %v291, 7
    %v294 = vor.u32 %v290, %v293
    %v295 = vsel %vm249, %v286, %v294
    %s296 = scalar_lea.vmem %s1, 4
    %v297 = vld [vmem:[%s296] sm:$0x3]
    %v298 = vunpack.c.l.b16 %v262
    %v299 = vunpack.c.l.b16 %v272
    %v300 = vunpack.c.l.b16 %v285
    %v301 = vunpack.c.l.b16 %v295
    %v302 = vpack.c.b16 %v299, %v298
    %v303 = vpack.c.b16 %v301, %v300
    %v305 = vsel %vm181, %v302, 0
    %v308 = vsel %vm181, %v303, 0
    %v311 = vsel %vm188, %v297, 0
    %313 = vmatpush.bf16.msra.mxu0 0
    %314 = vmatpush.bf16.msra.mxu0 0
    %315 = vmatpush.bf16.msra.mxu0 0
    %316 = vmatpush.bf16.msra.mxu0 0
    %317 = vmatpush.bf16.msra.mxu0 0
    %318 = vmatpush.bf16.msra.mxu0 0
    %319 = vmatpush.bf16.msra.mxu0 0
    %320 = vmatpush.bf16.msra.mxu0 %v311
    %321 = vmatmul.bf16.gmra.mxu0 %v305
    %v322 = vpop.f32.mrf.mxu0
    %v323 = vadd.f32 0.0, %v322
    %v324 = vpop.f32.mrf.mxu0
    %v325 = vadd.f32 0.0, %v324
    %326 = vmatmul.bf16.gmra.mxu0 %v308
    %v327 = vpop.f32.mrf.mxu0
    %v328 = vadd.f32 0.0, %v327
    %v329 = vpop.f32.mrf.mxu0
    %v330 = vadd.f32 0.0, %v329
    %331 = vdwg.mxu0
    %v332 = vadd.f32 %v236, %v323
    %v333 = vadd.f32 %v238, %v325
    %v334 = vadd.f32 %v241, %v328
    %v335 = vadd.f32 %v243, %v330
    %v336 = vld [vmem:[#allocation2] sm:$0x8]
    %v337 = vld [vmem:[#allocation2 + $0x10] sm:$0x8]
    %vm342 = vcmask 1040384
    %vm343 = vcmask 1044484
    %vm344 = vmor %vm342, %vm343
    %v345 = vrot.slane %v336, 7
    %v346 = vrot.slane %v345, 4
    %v347 = vrot.slane %v83, 7
    %v348 = vsel %vm344, %v346, %v347
    %v349 = vrot.slane %v347, 4
    %v350 = vrot.slane %v245, 7
    %v351 = vsel %vm344, %v349, %v350
    %v352 = vrot.slane %v337, 7
    %v353 = vrot.slane %v352, 4
    %v354 = vrot.slane %v86, 7
    %v355 = vsel %vm344, %v353, %v354
    %v356 = vrot.slane %v354, 4
    %v357 = vrot.slane %v246, 7
    %v358 = vsel %vm344, %v356, %v357
    %s359 = scalar_lea.vmem %s1, 6
    %v360 = vld [vmem:[%s359] sm:$0x3]
    %v361 = vunpack.c.l.b16 %v348
    %v362 = vunpack.c.l.b16 %v351
    %v363 = vunpack.c.l.b16 %v355
    %v364 = vunpack.c.l.b16 %v358
    %v365 = vpack.c.b16 %v362, %v361
    %v366 = vpack.c.b16 %v364, %v363
    %v368 = vsel %vm181, %v365, 0
    %v371 = vsel %vm181, %v366, 0
    %v374 = vsel %vm188, %v360, 0
    %376 = vmatpush.bf16.msra.mxu0 0
    %377 = vmatpush.bf16.msra.mxu0 0
    %378 = vmatpush.bf16.msra.mxu0 0
    %379 = vmatpush.bf16.msra.mxu0 0
    %380 = vmatpush.bf16.msra.mxu0 0
    %381 = vmatpush.bf16.msra.mxu0 0
    %382 = vmatpush.bf16.msra.mxu0 0
    %383 = vmatpush.bf16.msra.mxu0 %v374
    %384 = vmatmul.bf16.gmra.mxu0 %v368
    %v385 = vpop.f32.mrf.mxu0
    %v386 = vadd.f32 0.0, %v385
    %v387 = vpop.f32.mrf.mxu0
    %v388 = vadd.f32 0.0, %v387
    %389 = vmatmul.bf16.gmra.mxu0 %v371
    %v390 = vpop.f32.mrf.mxu0
    %v391 = vadd.f32 0.0, %v390
    %v392 = vpop.f32.mrf.mxu0
    %v393 = vadd.f32 0.0, %v392
    %394 = vdwg.mxu0
    %v395 = vadd.f32 %v332, %v386
    %v396 = vadd.f32 %v333, %v388
    %v397 = vadd.f32 %v334, %v391
    %v398 = vadd.f32 %v335, %v393
    %v399 = vld [vmem:[#allocation2 + $0x8] sm:$0xf]
    %v400 = vld [vmem:[#allocation2 + $0x18] sm:$0xf]
    %vm401 = vsmask.f32 256
    %vm402 = vsmask.f32 4368
    %vm403 = vmor %vm401, %vm402
    %v405 = vshrl.u32 %v336, 16
    %v407 = vrot.slane %v405, 7
    %v408 = vrot.slane %v407, 4
    %v409 = vrot.slane %v101, 7
    %v410 = vor.u32 %v409, %v104
    %v411 = vsel %vm403, %v408, %v410
    %v412 = vrot.slane %v409, 4
    %v414 = vshrl.u32 %v399, 16
    %v416 = vrot.slane %v414, 7
    %v417 = vshll.u32 %v399, 16
    %v419 = vor.u32 %v416, %v417
    %v420 = vsel %vm403, %v412, %v419
    %v422 = vshrl.u32 %v337, 16
    %v424 = vrot.slane %v422, 7
    %v425 = vrot.slane %v424, 4
    %v426 = vrot.slane %v129, 7
    %v427 = vor.u32 %v426, %v132
    %v428 = vsel %vm403, %v425, %v427
    %v429 = vrot.slane %v426, 4
    %v431 = vshrl.u32 %v400, 16
    %v433 = vrot.slane %v431, 7
    %v434 = vshll.u32 %v400, 16
    %v436 = vor.u32 %v433, %v434
    %v437 = vsel %vm403, %v429, %v436
    %s438 = scalar_lea.vmem %s1, 8
    %v439 = vld [vmem:[%s438] sm:$0x3]
    %v440 = vunpack.c.l.b16 %v411
    %v441 = vunpack.c.l.b16 %v420
    %v442 = vunpack.c.l.b16 %v428
    %v443 = vunpack.c.l.b16 %v437
    %v444 = vpack.c.b16 %v441, %v440
    %v445 = vpack.c.b16 %v443, %v442
    %v447 = vsel %vm181, %v444, 0
    %v450 = vsel %vm181, %v445, 0
    %v453 = vsel %vm188, %v439, 0
    %455 = vmatpush.bf16.msra.mxu0 0
    %456 = vmatpush.bf16.msra.mxu0 0
    %457 = vmatpush.bf16.msra.mxu0 0
    %458 = vmatpush.bf16.msra.mxu0 0
    %459 = vmatpush.bf16.msra.mxu0 0
    %460 = vmatpush.bf16.msra.mxu0 0
    %461 = vmatpush.bf16.msra.mxu0 0
    %462 = vmatpush.bf16.msra.mxu0 %v453
    %463 = vmatmul.bf16.gmra.mxu0 %v447
    %v464 = vpop.f32.mrf.mxu0
    %v465 = vadd.f32 0.0, %v464
    %v466 = vpop.f32.mrf.mxu0
    %v467 = vadd.f32 0.0, %v466
    %468 = vmatmul.bf16.gmra.mxu0 %v450
    %v469 = vpop.f32.mrf.mxu0
    %v470 = vadd.f32 0.0, %v469
    %v471 = vpop.f32.mrf.mxu0
    %v472 = vadd.f32 0.0, %v471
    %473 = vdwg.mxu0
    %v474 = vadd.f32 %v395, %v465
    %v475 = vadd.f32 %v396, %v467
    %v476 = vadd.f32 %v397, %v470
    %v477 = vadd.f32 %v398, %v472
    %s478 = scalar_lea.vmem %s1, 10
    %v479 = vld [vmem:[%s478] sm:$0x3]
    %v482 = vunpack.c.l.b16 %v83
    %v483 = vunpack.c.l.b16 %v399
    %v484 = vunpack.c.l.b16 %v86
    %v485 = vunpack.c.l.b16 %v400
    %v486 = vpack.c.b16 %v483, %v482
    %v487 = vpack.c.b16 %v485, %v484
    %v489 = vsel %vm181, %v486, 0
    %v492 = vsel %vm181, %v487, 0
    %v495 = vsel %vm188, %v479, 0
    %497 = vmatpush.bf16.msra.mxu0 0
    %498 = vmatpush.bf16.msra.mxu0 0
    %499 = vmatpush.bf16.msra.mxu0 0
    %500 = vmatpush.bf16.msra.mxu0 0
    %501 = vmatpush.bf16.msra.mxu0 0
    %502 = vmatpush.bf16.msra.mxu0 0
    %503 = vmatpush.bf16.msra.mxu0 0
    %504 = vmatpush.bf16.msra.mxu0 %v495
    %505 = vmatmul.bf16.gmra.mxu0 %v489
    %v506 = vpop.f32.mrf.mxu0
    %v507 = vadd.f32 0.0, %v506
    %v508 = vpop.f32.mrf.mxu0
    %v509 = vadd.f32 0.0, %v508
    %510 = vmatmul.bf16.gmra.mxu0 %v492
    %v511 = vpop.f32.mrf.mxu0
    %v512 = vadd.f32 0.0, %v511
    %v513 = vpop.f32.mrf.mxu0
    %v514 = vadd.f32 0.0, %v513
    %515 = vdwg.mxu0
    %v516 = vadd.f32 %v474, %v507
    %v517 = vadd.f32 %v475, %v509
    %v518 = vadd.f32 %v476, %v512
    %v519 = vadd.f32 %v477, %v514
    %v520 = vld [vmem:[#allocation2 + $0x4] sm:$0xf]
    %v521 = vld [vmem:[#allocation2 + $0x8] sm:$0xf]
    %v522 = vld [vmem:[#allocation2 + $0xc] sm:$0x1]
    %v523 = vld [vmem:[#allocation2 + $0x14] sm:$0xf]
    %v524 = vld [vmem:[#allocation2 + $0x18] sm:$0xf]
    %v525 = vld [vmem:[#allocation2 + $0x1c] sm:$0x1]
    %vm526 = vsmask.f32 3328
    %vm527 = vsmask.f32 7440
    %vm528 = vmor %vm526, %vm527
    %v530 = vshrl.u32 %v520, 16
    %v532 = vrot.slane %v530, 4
    %v533 = vshll.u32 %v520, 16
    %v535 = vrot.slane %v533, 5
    %v536 = vor.u32 %v532, %v535
    %v537 = vrot.slane %v536, 4
    %v539 = vshll.u32 %v521, 16
    %v541 = vrot.slane %v539, 5
    %v542 = vsel %vm528, %v537, %v541
    %v543 = vshrl.u32 %v521, 16
    %v545 = vrot.slane %v543, 4
    %v546 = vor.u32 %v545, %v541
    %v547 = vrot.slane %v546, 4
    %v549 = vshll.u32 %v522, 16
    %v551 = vrot.slane %v549, 5
    %v552 = vsel %vm528, %v547, %v551
    %v554 = vshrl.u32 %v523, 16
    %v556 = vrot.slane %v554, 4
    %v557 = vshll.u32 %v523, 16
    %v559 = vrot.slane %v557, 5
    %v560 = vor.u32 %v556, %v559
    %v561 = vrot.slane %v560, 4
    %v563 = vshll.u32 %v524, 16
    %v565 = vrot.slane %v563, 5
    %v566 = vsel %vm528, %v561, %v565
    %v567 = vshrl.u32 %v524, 16
    %v569 = vrot.slane %v567, 4
    %v570 = vor.u32 %v569, %v565
    %v571 = vrot.slane %v570, 4
    %v573 = vshll.u32 %v525, 16
    %v575 = vrot.slane %v573, 5
    %v576 = vsel %vm528, %v571, %v575
    %s577 = scalar_lea.vmem %s1, 12
    %v578 = vld [vmem:[%s577] sm:$0x3]
    %v579 = vunpack.c.l.b16 %v542
    %v580 = vunpack.c.l.b16 %v552
    %v581 = vunpack.c.l.b16 %v566
    %v582 = vunpack.c.l.b16 %v576
    %v583 = vpack.c.b16 %v580, %v579
    %v584 = vpack.c.b16 %v582, %v581
    %v586 = vsel %vm181, %v583, 0
    %v589 = vsel %vm181, %v584, 0
    %v592 = vsel %vm188, %v578, 0
    %594 = vmatpush.bf16.msra.mxu0 0
    %595 = vmatpush.bf16.msra.mxu0 0
    %596 = vmatpush.bf16.msra.mxu0 0
    %597 = vmatpush.bf16.msra.mxu0 0
    %598 = vmatpush.bf16.msra.mxu0 0
    %599 = vmatpush.bf16.msra.mxu0 0
    %600 = vmatpush.bf16.msra.mxu0 0
    %601 = vmatpush.bf16.msra.mxu0 %v592
    %602 = vmatmul.bf16.gmra.mxu0 %v586
    %v603 = vpop.f32.mrf.mxu0
    %v604 = vadd.f32 0.0, %v603
    %v605 = vpop.f32.mrf.mxu0
    %v606 = vadd.f32 0.0, %v605
    %607 = vmatmul.bf16.gmra.mxu0 %v589
    %v608 = vpop.f32.mrf.mxu0
    %v609 = vadd.f32 0.0, %v608
    %v610 = vpop.f32.mrf.mxu0
    %v611 = vadd.f32 0.0, %v610
    %612 = vdwg.mxu0
    %v613 = vadd.f32 %v516, %v604
    %v614 = vadd.f32 %v517, %v606
    %v615 = vadd.f32 %v518, %v609
    %v616 = vadd.f32 %v519, %v611
    %v617 = vld [vmem:[#allocation2 + $0x4] sm:$0xe]
    %v618 = vld [vmem:[#allocation2 + $0x14] sm:$0xe]
    %vm625 = vcmask 1042432
    %vm626 = vcmask 1046532
    %vm627 = vmor %vm625, %vm626
    %v628 = vrot.slane %v617, 5
    %v629 = vrot.slane %v628, 4
    %v630 = vrot.slane %v521, 5
    %v631 = vsel %vm627, %v629, %v630
    %v632 = vrot.slane %v630, 4
    %v633 = vrot.slane %v522, 5
    %v634 = vsel %vm627, %v632, %v633
    %v635 = vrot.slane %v618, 5
    %v636 = vrot.slane %v635, 4
    %v637 = vrot.slane %v524, 5
    %v638 = vsel %vm627, %v636, %v637
    %v639 = vrot.slane %v637, 4
    %v640 = vrot.slane %v525, 5
    %v641 = vsel %vm627, %v639, %v640
    %s642 = scalar_lea.vmem %s1, 14
    %v643 = vld [vmem:[%s642] sm:$0x3]
    %v644 = vunpack.c.l.b16 %v631
    %v645 = vunpack.c.l.b16 %v634
    %v646 = vunpack.c.l.b16 %v638
    %v647 = vunpack.c.l.b16 %v641
    %v648 = vpack.c.b16 %v645, %v644
    %v649 = vpack.c.b16 %v647, %v646
    %v651 = vsel %vm181, %v648, 0
    %v654 = vsel %vm181, %v649, 0
    %v657 = vsel %vm188, %v643, 0
    %659 = vmatpush.bf16.msra.mxu0 0
    %660 = vmatpush.bf16.msra.mxu0 0
    %661 = vmatpush.bf16.msra.mxu0 0
    %662 = vmatpush.bf16.msra.mxu0 0
    %663 = vmatpush.bf16.msra.mxu0 0
    %664 = vmatpush.bf16.msra.mxu0 0
    %665 = vmatpush.bf16.msra.mxu0 0
    %666 = vmatpush.bf16.msra.mxu0 %v657
    %667 = vmatmul.bf16.gmra.mxu0 %v651
    %v668 = vpop.f32.mrf.mxu0
    %v669 = vadd.f32 0.0, %v668
    %v670 = vpop.f32.mrf.mxu0
    %v671 = vadd.f32 0.0, %v670
    %672 = vmatmul.bf16.gmra.mxu0 %v654
    %v673 = vpop.f32.mrf.mxu0
    %v674 = vadd.f32 0.0, %v673
    %v675 = vpop.f32.mrf.mxu0
    %v676 = vadd.f32 0.0, %v675
    %677 = vdwg.mxu0
    %v678 = vadd.f32 %v613, %v669
    %v679 = vadd.f32 %v614, %v671
    %v680 = vadd.f32 %v615, %v674
    %v681 = vadd.f32 %v616, %v676
    %v682 = vld [vmem:[#allocation2 + $0xc] sm:$0x3]
    %v683 = vld [vmem:[#allocation2 + $0x1c] sm:$0x3]
    %v685 = vshrl.u32 %v617, 16
    %v687 = vrot.slane %v685, 5
    %v688 = vshll.u32 %v617, 16
    %v690 = vrot.slane %v688, 6
    %v691 = vor.u32 %v687, %v690
    %v692 = vrot.slane %v691, 4
    %v693 = vrot.slane %v543, 5
    %v694 = vrot.slane %v539, 6
    %v695 = vor.u32 %v693, %v694
    %v696 = vsel %vm90, %v692, %v695
    %v697 = vrot.slane %v695, 4
    %v699 = vshrl.u32 %v682, 16
    %v701 = vrot.slane %v699, 5
    %v702 = vshll.u32 %v682, 16
    %v704 = vrot.slane %v702, 6
    %v705 = vor.u32 %v701, %v704
    %v706 = vsel %vm90, %v697, %v705
    %v708 = vshrl.u32 %v618, 16
    %v710 = vrot.slane %v708, 5
    %v711 = vshll.u32 %v618, 16
    %v713 = vrot.slane %v711, 6
    %v714 = vor.u32 %v710, %v713
    %v715 = vrot.slane %v714, 4
    %v716 = vrot.slane %v567, 5
    %v717 = vrot.slane %v563, 6
    %v718 = vor.u32 %v716, %v717
    %v719 = vsel %vm90, %v715, %v718
    %v720 = vrot.slane %v718, 4
    %v722 = vshrl.u32 %v683, 16
    %v724 = vrot.slane %v722, 5
    %v725 = vshll.u32 %v683, 16
    %v727 = vrot.slane %v725, 6
    %v728 = vor.u32 %v724, %v727
    %v729 = vsel %vm90, %v720, %v728
    %s730 = scalar_lea.vmem %s1, 16
    %v731 = vld [vmem:[%s730] sm:$0x3]
    %v732 = vunpack.c.l.b16 %v696
    %v733 = vunpack.c.l.b16 %v706
    %v734 = vunpack.c.l.b16 %v719
    %v735 = vunpack.c.l.b16 %v729
    %v736 = vpack.c.b16 %v733, %v732
    %v737 = vpack.c.b16 %v735, %v734
    %v739 = vsel %vm181, %v736, 0
    %v742 = vsel %vm181, %v737, 0
    %v745 = vsel %vm188, %v731, 0
    %747 = vmatpush.bf16.msra.mxu0 0
    %748 = vmatpush.bf16.msra.mxu0 0
    %749 = vmatpush.bf16.msra.mxu0 0
    %750 = vmatpush.bf16.msra.mxu0 0
    %751 = vmatpush.bf16.msra.mxu0 0
    %752 = vmatpush.bf16.msra.mxu0 0
    %753 = vmatpush.bf16.msra.mxu0 0
    %754 = vmatpush.bf16.msra.mxu0 %v745
    %755 = vmatmul.bf16.gmra.mxu0 %v739
    %v756 = vpop.f32.mrf.mxu0
    %v757 = vadd.f32 0.0, %v756
    %v758 = vpop.f32.mrf.mxu0
    %v759 = vadd.f32 0.0, %v758
    %760 = vmatmul.bf16.gmra.mxu0 %v742
    %v761 = vpop.f32.mrf.mxu0
    %v762 = vadd.f32 0.0, %v761
    %v763 = vpop.f32.mrf.mxu0
    %v764 = vadd.f32 0.0, %v763
    %765 = vdwg.mxu0
    %v766 = vadd.f32 %v678, %v757
    %v767 = vadd.f32 %v679, %v759
    %v768 = vadd.f32 %v680, %v762
    %v769 = vadd.f32 %v681, %v764
    %v770 = vld [vmem:[#allocation2 + $0x4] sm:$0xc]
    %v771 = vld [vmem:[#allocation2 + $0x14] sm:$0xc]
    %v776 = vrot.slane %v770, 6
    %v777 = vrot.slane %v776, 4
    %v778 = vrot.slane %v521, 6
    %v779 = vsel %vm158, %v777, %v778
    %v780 = vrot.slane %v778, 4
    %v781 = vrot.slane %v682, 6
    %v782 = vsel %vm158, %v780, %v781
    %v783 = vrot.slane %v771, 6
    %v784 = vrot.slane %v783, 4
    %v785 = vrot.slane %v524, 6
    %v786 = vsel %vm158, %v784, %v785
    %v787 = vrot.slane %v785, 4
    %v788 = vrot.slane %v683, 6
    %v789 = vsel %vm158, %v787, %v788
    %s790 = scalar_lea.vmem %s1, 18
    %v791 = vld [vmem:[%s790] sm:$0x3]
    %v792 = vunpack.c.l.b16 %v779
    %v793 = vunpack.c.l.b16 %v782
    %v794 = vunpack.c.l.b16 %v786
    %v795 = vunpack.c.l.b16 %v789
    %v796 = vpack.c.b16 %v793, %v792
    %v797 = vpack.c.b16 %v795, %v794
    %v799 = vsel %vm181, %v796, 0
    %v802 = vsel %vm181, %v797, 0
    %v805 = vsel %vm188, %v791, 0
    %807 = vmatpush.bf16.msra.mxu0 0
    %808 = vmatpush.bf16.msra.mxu0 0
    %809 = vmatpush.bf16.msra.mxu0 0
    %810 = vmatpush.bf16.msra.mxu0 0
    %811 = vmatpush.bf16.msra.mxu0 0
    %812 = vmatpush.bf16.msra.mxu0 0
    %813 = vmatpush.bf16.msra.mxu0 0
    %814 = vmatpush.bf16.msra.mxu0 %v805
    %815 = vmatmul.bf16.gmra.mxu0 %v799
    %v816 = vpop.f32.mrf.mxu0
    %v817 = vadd.f32 0.0, %v816
    %v818 = vpop.f32.mrf.mxu0
    %v819 = vadd.f32 0.0, %v818
    %820 = vmatmul.bf16.gmra.mxu0 %v802
    %v821 = vpop.f32.mrf.mxu0
    %v822 = vadd.f32 0.0, %v821
    %v823 = vpop.f32.mrf.mxu0
    %v824 = vadd.f32 0.0, %v823
    %825 = vdwg.mxu0
    %v826 = vadd.f32 %v766, %v817
    %v827 = vadd.f32 %v767, %v819
    %v828 = vadd.f32 %v768, %v822
    %v829 = vadd.f32 %v769, %v824
    %v830 = vld [vmem:[#allocation2 + $0xc] sm:$0x7]
    %v831 = vld [vmem:[#allocation2 + $0x1c] sm:$0x7]
    %v833 = vshrl.u32 %v770, 16
    %v835 = vrot.slane %v833, 6
    %v836 = vshll.u32 %v770, 16
    %v838 = vrot.slane %v836, 7
    %v839 = vor.u32 %v835, %v838
    %v840 = vrot.slane %v839, 4
    %v841 = vrot.slane %v543, 6
    %v842 = vrot.slane %v539, 7
    %v843 = vor.u32 %v841, %v842
    %v844 = vsel %vm249, %v840, %v843
    %v845 = vrot.slane %v843, 4
    %v847 = vshrl.u32 %v830, 16
    %v849 = vrot.slane %v847, 6
    %v850 = vshll.u32 %v830, 16
    %v852 = vrot.slane %v850, 7
    %v853 = vor.u32 %v849, %v852
    %v854 = vsel %vm249, %v845, %v853
    %v856 = vshrl.u32 %v771, 16
    %v858 = vrot.slane %v856, 6
    %v859 = vshll.u32 %v771, 16
    %v861 = vrot.slane %v859, 7
    %v862 = vor.u32 %v858, %v861
    %v863 = vrot.slane %v862, 4
    %v864 = vrot.slane %v567, 6
    %v865 = vrot.slane %v563, 7
    %v866 = vor.u32 %v864, %v865
    %v867 = vsel %vm249, %v863, %v866
    %v868 = vrot.slane %v866, 4
    %v870 = vshrl.u32 %v831, 16
    %v872 = vrot.slane %v870, 6
    %v873 = vshll.u32 %v831, 16
    %v875 = vrot.slane %v873, 7
    %v876 = vor.u32 %v872, %v875
    %v877 = vsel %vm249, %v868, %v876
    %s878 = scalar_lea.vmem %s1, 20
    %v879 = vld [vmem:[%s878] sm:$0x3]
    %v880 = vunpack.c.l.b16 %v844
    %v881 = vunpack.c.l.b16 %v854
    %v882 = vunpack.c.l.b16 %v867
    %v883 = vunpack.c.l.b16 %v877
    %v884 = vpack.c.b16 %v881, %v880
    %v885 = vpack.c.b16 %v883, %v882
    %v887 = vsel %vm181, %v884, 0
    %v890 = vsel %vm181, %v885, 0
    %v893 = vsel %vm188, %v879, 0
    %895 = vmatpush.bf16.msra.mxu0 0
    %896 = vmatpush.bf16.msra.mxu0 0
    %897 = vmatpush.bf16.msra.mxu0 0
    %898 = vmatpush.bf16.msra.mxu0 0
    %899 = vmatpush.bf16.msra.mxu0 0
    %900 = vmatpush.bf16.msra.mxu0 0
    %901 = vmatpush.bf16.msra.mxu0 0
    %902 = vmatpush.bf16.msra.mxu0 %v893
    %903 = vmatmul.bf16.gmra.mxu0 %v887
    %v904 = vpop.f32.mrf.mxu0
    %v905 = vadd.f32 0.0, %v904
    %v906 = vpop.f32.mrf.mxu0
    %v907 = vadd.f32 0.0, %v906
    %908 = vmatmul.bf16.gmra.mxu0 %v890
    %v909 = vpop.f32.mrf.mxu0
    %v910 = vadd.f32 0.0, %v909
    %v911 = vpop.f32.mrf.mxu0
    %v912 = vadd.f32 0.0, %v911
    %913 = vdwg.mxu0
    %v914 = vadd.f32 %v826, %v905
    %v915 = vadd.f32 %v827, %v907
    %v916 = vadd.f32 %v828, %v910
    %v917 = vadd.f32 %v829, %v912
    %v918 = vld [vmem:[%s2] sm:$0x1]
    %v920 = vperm.slane %v918, 0
    %v922 = vadd.f32 %v914, %v920
    %v923 = vadd.f32 %v915, %v920
    %v924 = vadd.f32 %v916, %v920
    %v925 = vadd.f32 %v917, %v920
    %v926 = vmul.f32 %v922, 0.01
    %v927 = vmul.f32 %v923, 0.01
    %v928 = vmul.f32 %v924, 0.01
    %v929 = vmul.f32 %v925, 0.01
    %v930 = vmax.f32 %v922, %v926
    %v931 = vmax.f32 %v923, %v927
    %v932 = vmax.f32 %v924, %v928
    %v933 = vmax.f32 %v925, %v929
    %v934 = vpack.c.bf16 %v930, %v930
    %v935 = vpack.c.bf16 %v931, %v931
    %v936 = vpack.c.bf16 %v932, %v932
    %v937 = vpack.c.bf16 %v933, %v933
    %vm938 = vcmask 60416
    %939 = vst.msk [vmem:[#allocation2 + $0x4] sm:$0xf] %vm938, %v934
    %940 = vst.msk [vmem:[#allocation2 + $0x8] sm:$0xf] %vm938, %v935
    %941 = vst.msk [vmem:[#allocation2 + $0x14] sm:$0xf] %vm938, %v936
    %942 = vst.msk [vmem:[#allocation2 + $0x18] sm:$0xf] %vm938, %v937
    %v943 = vld [vmem:[#allocation2] sm:$0xe]
    %v944 = vld [vmem:[#allocation2 + $0x4] sm:$0xf]
    %v945 = vld [vmem:[#allocation2 + $0x8] sm:$0x3]
    %v946 = vld [vmem:[#allocation2 + $0x10] sm:$0xe]
    %v947 = vld [vmem:[#allocation2 + $0x14] sm:$0xf]
    %v948 = vld [vmem:[#allocation2 + $0x18] sm:$0x3]
    %v950 = vshrl.u32 %v943, 16
    %v952 = vrot.slane %v950, 5
    %v953 = vshll.u32 %v943, 16
    %v955 = vrot.slane %v953, 6
    %v956 = vor.u32 %v952, %v955
    %v957 = vrot.slane %v956, 4
    %v959 = vshrl.u32 %v944, 16
    %v961 = vrot.slane %v959, 5
    %v962 = vshll.u32 %v944, 16
    %v964 = vrot.slane %v962, 6
    %v965 = vor.u32 %v961, %v964
    %v966 = vsel %vm90, %v957, %v965
    %v967 = vrot.slane %v965, 4
    %v969 = vshrl.u32 %v945, 16
    %v971 = vrot.slane %v969, 5
    %v972 = vshll.u32 %v945, 16
    %v974 = vrot.slane %v972, 6
    %v975 = vor.u32 %v971, %v974
    %v976 = vsel %vm90, %v967, %v975
    %v978 = vshrl.u32 %v946, 16
    %v980 = vrot.slane %v978, 5
    %v981 = vshll.u32 %v946, 16
    %v983 = vrot.slane %v981, 6
    %v984 = vor.u32 %v980, %v983
    %v985 = vrot.slane %v984, 4
    %v987 = vshrl.u32 %v947, 16
    %v989 = vrot.slane %v987, 5
    %v990 = vshll.u32 %v947, 16
    %v992 = vrot.slane %v990, 6
    %v993 = vor.u32 %v989, %v992
    %v994 = vsel %vm90, %v985, %v993
    %v995 = vrot.slane %v993, 4
    %v997 = vshrl.u32 %v948, 16
    %v999 = vrot.slane %v997, 5
    %v1000 = vshll.u32 %v948, 16
    %v1002 = vrot.slane %v1000, 6
    %v1003 = vor.u32 %v999, %v1002
    %v1004 = vsel %vm90, %v995, %v1003
    %v1005 = vld [vmem:[%s3] sm:$0xf]
    %v1006 = vld [vmem:[#allocation2] sm:$0xc]
    %v1007 = vld [vmem:[#allocation2 + $0x10] sm:$0xc]
    %v1014 = vrot.slane %v1006, 6
    %v1015 = vrot.slane %v1014, 4
    %v1016 = vrot.slane %v944, 6
    %v1017 = vsel %vm158, %v1015, %v1016
    %v1018 = vrot.slane %v1016, 4
    %v1019 = vrot.slane %v945, 6
    %v1020 = vsel %vm158, %v1018, %v1019
    %v1021 = vrot.slane %v1007, 6
    %v1022 = vrot.slane %v1021, 4
    %v1023 = vrot.slane %v947, 6
    %v1024 = vsel %vm158, %v1022, %v1023
    %v1025 = vrot.slane %v1023, 4
    %v1026 = vrot.slane %v948, 6
    %v1027 = vsel %vm158, %v1025, %v1026
    %s1028 = scalar_lea.vmem %s3, 4
    %v1029 = vld [vmem:[%s1028] sm:$0xf]
    %v1030 = vunpack.c.l.b16 %v1017
    %v1031 = vunpack.c.l.b16 %v1020
    %v1032 = vunpack.c.l.b16 %v1024
    %v1033 = vunpack.c.l.b16 %v1027
    %v1034 = vpack.c.b16 %v1031, %v1030
    %v1035 = vpack.c.b16 %v1033, %v1032
    %vm1036 = vcmask 64512
    %v1038 = vsel %vm1036, %v1034, 0
    %v1041 = vsel %vm1036, %v1035, 0
    %vm1043 = vcmask 1043456
    %v1045 = vsel %vm1043, %v1029, 0
    %1047 = vmatpush.bf16.msra.mxu0 0
    %1048 = vmatpush.bf16.msra.mxu0 0
    %1049 = vmatpush.bf16.msra.mxu0 0
    %1050 = vmatpush.bf16.msra.mxu0 0
    %1051 = vmatpush.bf16.msra.mxu0 0
    %1052 = vmatpush.bf16.msra.mxu0 0
    %1053 = vmatpush.bf16.msra.mxu0 0
    %1054 = vmatpush.bf16.msra.mxu0 %v1045
    %1055 = vmatmul.bf16.gmra.mxu0 %v1038
    %v1056 = vpop.f32.mrf.mxu0
    %v1057 = vadd.f32 0.0, %v1056
    %v1058 = vpop.f32.mrf.mxu0
    %v1059 = vadd.f32 0.0, %v1058
    %1060 = vmatmul.bf16.gmra.mxu0 %v1041
    %v1061 = vpop.f32.mrf.mxu0
    %v1062 = vadd.f32 0.0, %v1061
    %v1063 = vpop.f32.mrf.mxu0
    %v1064 = vadd.f32 0.0, %v1063
    %1065 = vdwg.mxu0
    %v1066 = vunpack.c.l.b16 %v966
    %v1067 = vunpack.c.l.b16 %v976
    %v1068 = vunpack.c.l.b16 %v994
    %v1069 = vunpack.c.l.b16 %v1004
    %v1070 = vpack.c.b16 %v1067, %v1066
    %v1071 = vpack.c.b16 %v1069, %v1068
    %v1073 = vsel %vm1036, %v1070, 0
    %v1076 = vsel %vm1036, %v1071, 0
    %v1079 = vsel %vm1043, %v1005, 0
    %1081 = vmatpush.bf16.msra.mxu0 0
    %1082 = vmatpush.bf16.msra.mxu0 0
    %1083 = vmatpush.bf16.msra.mxu0 0
    %1084 = vmatpush.bf16.msra.mxu0 0
    %1085 = vmatpush.bf16.msra.mxu0 0
    %1086 = vmatpush.bf16.msra.mxu0 0
    %1087 = vmatpush.bf16.msra.mxu0 0
    %1088 = vmatpush.bf16.msra.mxu0 %v1079
    %1089 = vmatmul.bf16.gmra.mxu0 %v1073
    %v1090 = vpop.f32.mrf.mxu0
    %v1091 = vadd.f32 %v1057, %v1090
    %v1092 = vpop.f32.mrf.mxu0
    %v1093 = vadd.f32 %v1059, %v1092
    %1094 = vmatmul.bf16.gmra.mxu0 %v1076
    %v1095 = vpop.f32.mrf.mxu0
    %v1096 = vadd.f32 %v1062, %v1095
    %v1097 = vpop.f32.mrf.mxu0
    %v1098 = vadd.f32 %v1064, %v1097
    %1099 = vdwg.mxu0
    %v1100 = vld [vmem:[#allocation2 + $0x8] sm:$0x7]
    %v1101 = vld [vmem:[#allocation2 + $0x18] sm:$0x7]
    %v1103 = vshrl.u32 %v1006, 16
    %v1105 = vrot.slane %v1103, 6
    %v1106 = vshll.u32 %v1006, 16
    %v1108 = vrot.slane %v1106, 7
    %v1109 = vor.u32 %v1105, %v1108
    %v1110 = vrot.slane %v1109, 4
    %v1111 = vrot.slane %v959, 6
    %v1112 = vrot.slane %v962, 7
    %v1113 = vor.u32 %v1111, %v1112
    %v1114 = vsel %vm249, %v1110, %v1113
    %v1115 = vrot.slane %v1113, 4
    %v1117 = vshrl.u32 %v1100, 16
    %v1119 = vrot.slane %v1117, 6
    %v1120 = vshll.u32 %v1100, 16
    %v1122 = vrot.slane %v1120, 7
    %v1123 = vor.u32 %v1119, %v1122
    %v1124 = vsel %vm249, %v1115, %v1123
    %v1126 = vshrl.u32 %v1007, 16
    %v1128 = vrot.slane %v1126, 6
    %v1129 = vshll.u32 %v1007, 16
    %v1131 = vrot.slane %v1129, 7
    %v1132 = vor.u32 %v1128, %v1131
    %v1133 = vrot.slane %v1132, 4
    %v1134 = vrot.slane %v987, 6
    %v1135 = vrot.slane %v990, 7
    %v1136 = vor.u32 %v1134, %v1135
    %v1137 = vsel %vm249, %v1133, %v1136
    %v1138 = vrot.slane %v1136, 4
    %v1140 = vshrl.u32 %v1101, 16
    %v1142 = vrot.slane %v1140, 6
    %v1143 = vshll.u32 %v1101, 16
    %v1145 = vrot.slane %v1143, 7
    %v1146 = vor.u32 %v1142, %v1145
    %v1147 = vsel %vm249, %v1138, %v1146
    %s1148 = scalar_lea.vmem %s3, 8
    %v1149 = vld [vmem:[%s1148] sm:$0xf]
    %v1150 = vunpack.c.l.b16 %v1114
    %v1151 = vunpack.c.l.b16 %v1124
    %v1152 = vunpack.c.l.b16 %v1137
    %v1153 = vunpack.c.l.b16 %v1147
    %v1154 = vpack.c.b16 %v1151, %v1150
    %v1155 = vpack.c.b16 %v1153, %v1152
    %v1157 = vsel %vm1036, %v1154, 0
    %v1160 = vsel %vm1036, %v1155, 0
    %v1163 = vsel %vm1043, %v1149, 0
    %1165 = vmatpush.bf16.msra.mxu0 0
    %1166 = vmatpush.bf16.msra.mxu0 0
    %1167 = vmatpush.bf16.msra.mxu0 0
    %1168 = vmatpush.bf16.msra.mxu0 0
    %1169 = vmatpush.bf16.msra.mxu0 0
    %1170 = vmatpush.bf16.msra.mxu0 0
    %1171 = vmatpush.bf16.msra.mxu0 0
    %1172 = vmatpush.bf16.msra.mxu0 %v1163
    %1173 = vmatmul.bf16.gmra.mxu0 %v1157
    %v1174 = vpop.f32.mrf.mxu0
    %v1175 = vadd.f32 0.0, %v1174
    %v1176 = vpop.f32.mrf.mxu0
    %v1177 = vadd.f32 0.0, %v1176
    %1178 = vmatmul.bf16.gmra.mxu0 %v1160
    %v1179 = vpop.f32.mrf.mxu0
    %v1180 = vadd.f32 0.0, %v1179
    %v1181 = vpop.f32.mrf.mxu0
    %v1182 = vadd.f32 0.0, %v1181
    %1183 = vdwg.mxu0
    %v1184 = vadd.f32 %v1091, %v1175
    %v1185 = vadd.f32 %v1093, %v1177
    %v1186 = vadd.f32 %v1096, %v1180
    %v1187 = vadd.f32 %v1098, %v1182
    %v1188 = vld [vmem:[#allocation2] sm:$0x8]
    %v1189 = vld [vmem:[#allocation2 + $0x10] sm:$0x8]
    %v1194 = vrot.slane %v1188, 7
    %v1195 = vrot.slane %v1194, 4
    %v1196 = vrot.slane %v944, 7
    %v1197 = vsel %vm344, %v1195, %v1196
    %v1198 = vrot.slane %v1196, 4
    %v1199 = vrot.slane %v1100, 7
    %v1200 = vsel %vm344, %v1198, %v1199
    %v1201 = vrot.slane %v1189, 7
    %v1202 = vrot.slane %v1201, 4
    %v1203 = vrot.slane %v947, 7
    %v1204 = vsel %vm344, %v1202, %v1203
    %v1205 = vrot.slane %v1203, 4
    %v1206 = vrot.slane %v1101, 7
    %v1207 = vsel %vm344, %v1205, %v1206
    %s1208 = scalar_lea.vmem %s3, 12
    %v1209 = vld [vmem:[%s1208] sm:$0xf]
    %v1210 = vunpack.c.l.b16 %v1197
    %v1211 = vunpack.c.l.b16 %v1200
    %v1212 = vunpack.c.l.b16 %v1204
    %v1213 = vunpack.c.l.b16 %v1207
    %v1214 = vpack.c.b16 %v1211, %v1210
    %v1215 = vpack.c.b16 %v1213, %v1212
    %v1217 = vsel %vm1036, %v1214, 0
    %v1220 = vsel %vm1036, %v1215, 0
    %v1223 = vsel %vm1043, %v1209, 0
    %1225 = vmatpush.bf16.msra.mxu0 0
    %1226 = vmatpush.bf16.msra.mxu0 0
    %1227 = vmatpush.bf16.msra.mxu0 0
    %1228 = vmatpush.bf16.msra.mxu0 0
    %1229 = vmatpush.bf16.msra.mxu0 0
    %1230 = vmatpush.bf16.msra.mxu0 0
    %1231 = vmatpush.bf16.msra.mxu0 0
    %1232 = vmatpush.bf16.msra.mxu0 %v1223
    %1233 = vmatmul.bf16.gmra.mxu0 %v1217
    %v1234 = vpop.f32.mrf.mxu0
    %v1235 = vadd.f32 0.0, %v1234
    %v1236 = vpop.f32.mrf.mxu0
    %v1237 = vadd.f32 0.0, %v1236
    %1238 = vmatmul.bf16.gmra.mxu0 %v1220
    %v1239 = vpop.f32.mrf.mxu0
    %v1240 = vadd.f32 0.0, %v1239
    %v1241 = vpop.f32.mrf.mxu0
    %v1242 = vadd.f32 0.0, %v1241
    %1243 = vdwg.mxu0
    %v1244 = vadd.f32 %v1184, %v1235
    %v1245 = vadd.f32 %v1185, %v1237
    %v1246 = vadd.f32 %v1186, %v1240
    %v1247 = vadd.f32 %v1187, %v1242
    %v1248 = vld [vmem:[#allocation2 + $0x8] sm:$0xf]
    %v1249 = vld [vmem:[#allocation2 + $0x18] sm:$0xf]
    %v1251 = vshrl.u32 %v1188, 16
    %v1253 = vrot.slane %v1251, 7
    %v1254 = vrot.slane %v1253, 4
    %v1255 = vrot.slane %v959, 7
    %v1256 = vor.u32 %v1255, %v962
    %v1257 = vsel %vm403, %v1254, %v1256
    %v1258 = vrot.slane %v1255, 4
    %v1260 = vshrl.u32 %v1248, 16
    %v1262 = vrot.slane %v1260, 7
    %v1263 = vshll.u32 %v1248, 16
    %v1265 = vor.u32 %v1262, %v1263
    %v1266 = vsel %vm403, %v1258, %v1265
    %v1268 = vshrl.u32 %v1189, 16
    %v1270 = vrot.slane %v1268, 7
    %v1271 = vrot.slane %v1270, 4
    %v1272 = vrot.slane %v987, 7
    %v1273 = vor.u32 %v1272, %v990
    %v1274 = vsel %vm403, %v1271, %v1273
    %v1275 = vrot.slane %v1272, 4
    %v1277 = vshrl.u32 %v1249, 16
    %v1279 = vrot.slane %v1277, 7
    %v1280 = vshll.u32 %v1249, 16
    %v1282 = vor.u32 %v1279, %v1280
    %v1283 = vsel %vm403, %v1275, %v1282
    %s1284 = scalar_lea.vmem %s3, 16
    %v1285 = vld [vmem:[%s1284] sm:$0xf]
    %v1286 = vunpack.c.l.b16 %v1257
    %v1287 = vunpack.c.l.b16 %v1266
    %v1288 = vunpack.c.l.b16 %v1274
    %v1289 = vunpack.c.l.b16 %v1283
    %v1290 = vpack.c.b16 %v1287, %v1286
    %v1291 = vpack.c.b16 %v1289, %v1288
    %v1293 = vsel %vm1036, %v1290, 0
    %v1296 = vsel %vm1036, %v1291, 0
    %v1299 = vsel %vm1043, %v1285, 0
    %1301 = vmatpush.bf16.msra.mxu0 0
    %1302 = vmatpush.bf16.msra.mxu0 0
    %1303 = vmatpush.bf16.msra.mxu0 0
    %1304 = vmatpush.bf16.msra.mxu0 0
    %1305 = vmatpush.bf16.msra.mxu0 0
    %1306 = vmatpush.bf16.msra.mxu0 0
    %1307 = vmatpush.bf16.msra.mxu0 0
    %1308 = vmatpush.bf16.msra.mxu0 %v1299
    %1309 = vmatmul.bf16.gmra.mxu0 %v1293
    %v1310 = vpop.f32.mrf.mxu0
    %v1311 = vadd.f32 0.0, %v1310
    %v1312 = vpop.f32.mrf.mxu0
    %v1313 = vadd.f32 0.0, %v1312
    %1314 = vmatmul.bf16.gmra.mxu0 %v1296
    %v1315 = vpop.f32.mrf.mxu0
    %v1316 = vadd.f32 0.0, %v1315
    %v1317 = vpop.f32.mrf.mxu0
    %v1318 = vadd.f32 0.0, %v1317
    %1319 = vdwg.mxu0
    %v1320 = vadd.f32 %v1244, %v1311
    %v1321 = vadd.f32 %v1245, %v1313
    %v1322 = vadd.f32 %v1246, %v1316
    %v1323 = vadd.f32 %v1247, %v1318
    %s1324 = scalar_lea.vmem %s3, 20
    %v1325 = vld [vmem:[%s1324] sm:$0xf]
    %v1328 = vunpack.c.l.b16 %v944
    %v1329 = vunpack.c.l.b16 %v1248
    %v1330 = vunpack.c.l.b16 %v947
    %v1331 = vunpack.c.l.b16 %v1249
    %v1332 = vpack.c.b16 %v1329, %v1328
    %v1333 = vpack.c.b16 %v1331, %v1330
    %v1335 = vsel %vm1036, %v1332, 0
    %v1338 = vsel %vm1036, %v1333, 0
    %v1341 = vsel %vm1043, %v1325, 0
    %1343 = vmatpush.bf16.msra.mxu0 0
    %1344 = vmatpush.bf16.msra.mxu0 0
    %1345 = vmatpush.bf16.msra.mxu0 0
    %1346 = vmatpush.bf16.msra.mxu0 0
    %1347 = vmatpush.bf16.msra.mxu0 0
    %1348 = vmatpush.bf16.msra.mxu0 0
    %1349 = vmatpush.bf16.msra.mxu0 0
    %1350 = vmatpush.bf16.msra.mxu0 %v1341
    %1351 = vmatmul.bf16.gmra.mxu0 %v1335
    %v1352 = vpop.f32.mrf.mxu0
    %v1353 = vadd.f32 0.0, %v1352
    %v1354 = vpop.f32.mrf.mxu0
    %v1355 = vadd.f32 0.0, %v1354
    %1356 = vmatmul.bf16.gmra.mxu0 %v1338
    %v1357 = vpop.f32.mrf.mxu0
    %v1358 = vadd.f32 0.0, %v1357
    %v1359 = vpop.f32.mrf.mxu0
    %v1360 = vadd.f32 0.0, %v1359
    %1361 = vdwg.mxu0
    %v1362 = vadd.f32 %v1320, %v1353
    %v1363 = vadd.f32 %v1321, %v1355
    %v1364 = vadd.f32 %v1322, %v1358
    %v1365 = vadd.f32 %v1323, %v1360
    %v1366 = vld [vmem:[#allocation2 + $0x4] sm:$0xf]
    %v1367 = vld [vmem:[#allocation2 + $0x8] sm:$0xf]
    %v1368 = vld [vmem:[#allocation2 + $0xc] sm:$0x1]
    %v1369 = vld [vmem:[#allocation2 + $0x14] sm:$0xf]
    %v1370 = vld [vmem:[#allocation2 + $0x18] sm:$0xf]
    %v1371 = vld [vmem:[#allocation2 + $0x1c] sm:$0x1]
    %v1373 = vshrl.u32 %v1366, 16
    %v1375 = vrot.slane %v1373, 4
    %v1376 = vshll.u32 %v1366, 16
    %v1378 = vrot.slane %v1376, 5
    %v1379 = vor.u32 %v1375, %v1378
    %v1380 = vrot.slane %v1379, 4
    %v1382 = vshll.u32 %v1367, 16
    %v1384 = vrot.slane %v1382, 5
    %v1385 = vsel %vm528, %v1380, %v1384
    %v1386 = vshrl.u32 %v1367, 16
    %v1388 = vrot.slane %v1386, 4
    %v1389 = vor.u32 %v1388, %v1384
    %v1390 = vrot.slane %v1389, 4
    %v1392 = vshll.u32 %v1368, 16
    %v1394 = vrot.slane %v1392, 5
    %v1395 = vsel %vm528, %v1390, %v1394
    %v1397 = vshrl.u32 %v1369, 16
    %v1399 = vrot.slane %v1397, 4
    %v1400 = vshll.u32 %v1369, 16
    %v1402 = vrot.slane %v1400, 5
    %v1403 = vor.u32 %v1399, %v1402
    %v1404 = vrot.slane %v1403, 4
    %v1406 = vshll.u32 %v1370, 16
    %v1408 = vrot.slane %v1406, 5
    %v1409 = vsel %vm528, %v1404, %v1408
    %v1410 = vshrl.u32 %v1370, 16
    %v1412 = vrot.slane %v1410, 4
    %v1413 = vor.u32 %v1412, %v1408
    %v1414 = vrot.slane %v1413, 4
    %v1416 = vshll.u32 %v1371, 16
    %v1418 = vrot.slane %v1416, 5
    %v1419 = vsel %vm528, %v1414, %v1418
    %s1420 = scalar_lea.vmem %s3, 24
    %v1421 = vld [vmem:[%s1420] sm:$0xf]
    %v1422 = vunpack.c.l.b16 %v1385
    %v1423 = vunpack.c.l.b16 %v1395
    %v1424 = vunpack.c.l.b16 %v1409
    %v1425 = vunpack.c.l.b16 %v1419
    %v1426 = vpack.c.b16 %v1423, %v1422
    %v1427 = vpack.c.b16 %v1425, %v1424
    %v1429 = vsel %vm1036, %v1426, 0
    %v1432 = vsel %vm1036, %v1427, 0
    %v1435 = vsel %vm1043, %v1421, 0
    %1437 = vmatpush.bf16.msra.mxu0 0
    %1438 = vmatpush.bf16.msra.mxu0 0
    %1439 = vmatpush.bf16.msra.mxu0 0
    %1440 = vmatpush.bf16.msra.mxu0 0
    %1441 = vmatpush.bf16.msra.mxu0 0
    %1442 = vmatpush.bf16.msra.mxu0 0
    %1443 = vmatpush.bf16.msra.mxu0 0
    %1444 = vmatpush.bf16.msra.mxu0 %v1435
    %1445 = vmatmul.bf16.gmra.mxu0 %v1429
    %v1446 = vpop.f32.mrf.mxu0
    %v1447 = vadd.f32 0.0, %v1446
    %v1448 = vpop.f32.mrf.mxu0
    %v1449 = vadd.f32 0.0, %v1448
    %1450 = vmatmul.bf16.gmra.mxu0 %v1432
    %v1451 = vpop.f32.mrf.mxu0
    %v1452 = vadd.f32 0.0, %v1451
    %v1453 = vpop.f32.mrf.mxu0
    %v1454 = vadd.f32 0.0, %v1453
    %1455 = vdwg.mxu0
    %v1456 = vadd.f32 %v1362, %v1447
    %v1457 = vadd.f32 %v1363, %v1449
    %v1458 = vadd.f32 %v1364, %v1452
    %v1459 = vadd.f32 %v1365, %v1454
    %v1460 = vld [vmem:[#allocation2 + $0x4] sm:$0xe]
    %v1461 = vld [vmem:[#allocation2 + $0x14] sm:$0xe]
    %v1468 = vrot.slane %v1460, 5
    %v1469 = vrot.slane %v1468, 4
    %v1470 = vrot.slane %v1367, 5
    %v1471 = vsel %vm627, %v1469, %v1470
    %v1472 = vrot.slane %v1470, 4
    %v1473 = vrot.slane %v1368, 5
    %v1474 = vsel %vm627, %v1472, %v1473
    %v1475 = vrot.slane %v1461, 5
    %v1476 = vrot.slane %v1475, 4
    %v1477 = vrot.slane %v1370, 5
    %v1478 = vsel %vm627, %v1476, %v1477
    %v1479 = vrot.slane %v1477, 4
    %v1480 = vrot.slane %v1371, 5
    %v1481 = vsel %vm627, %v1479, %v1480
    %s1482 = scalar_lea.vmem %s3, 28
    %v1483 = vld [vmem:[%s1482] sm:$0xf]
    %v1484 = vunpack.c.l.b16 %v1471
    %v1485 = vunpack.c.l.b16 %v1474
    %v1486 = vunpack.c.l.b16 %v1478
    %v1487 = vunpack.c.l.b16 %v1481
    %v1488 = vpack.c.b16 %v1485, %v1484
    %v1489 = vpack.c.b16 %v1487, %v1486
    %v1491 = vsel %vm1036, %v1488, 0
    %v1494 = vsel %vm1036, %v1489, 0
    %v1497 = vsel %vm1043, %v1483, 0
    %1499 = vmatpush.bf16.msra.mxu0 0
    %1500 = vmatpush.bf16.msra.mxu0 0
    %1501 = vmatpush.bf16.msra.mxu0 0
    %1502 = vmatpush.bf16.msra.mxu0 0
    %1503 = vmatpush.bf16.msra.mxu0 0
    %1504 = vmatpush.bf16.msra.mxu0 0
    %1505 = vmatpush.bf16.msra.mxu0 0
    %1506 = vmatpush.bf16.msra.mxu0 %v1497
    %1507 = vmatmul.bf16.gmra.mxu0 %v1491
    %v1508 = vpop.f32.mrf.mxu0
    %v1509 = vadd.f32 0.0, %v1508
    %v1510 = vpop.f32.mrf.mxu0
    %v1511 = vadd.f32 0.0, %v1510
    %1512 = vmatmul.bf16.gmra.mxu0 %v1494
    %v1513 = vpop.f32.mrf.mxu0
    %v1514 = vadd.f32 0.0, %v1513
    %v1515 = vpop.f32.mrf.mxu0
    %v1516 = vadd.f32 0.0, %v1515
    %1517 = vdwg.mxu0
    %v1518 = vadd.f32 %v1456, %v1509
    %v1519 = vadd.f32 %v1457, %v1511
    %v1520 = vadd.f32 %v1458, %v1514
    %v1521 = vadd.f32 %v1459, %v1516
    %v1522 = vld [vmem:[#allocation2 + $0xc] sm:$0x3]
    %v1523 = vld [vmem:[#allocation2 + $0x1c] sm:$0x3]
    %v1525 = vshrl.u32 %v1460, 16
    %v1527 = vrot.slane %v1525, 5
    %v1528 = vshll.u32 %v1460, 16
    %v1530 = vrot.slane %v1528, 6
    %v1531 = vor.u32 %v1527, %v1530
    %v1532 = vrot.slane %v1531, 4
    %v1533 = vrot.slane %v1386, 5
    %v1534 = vrot.slane %v1382, 6
    %v1535 = vor.u32 %v1533, %v1534
    %v1536 = vsel %vm90, %v1532, %v1535
    %v1537 = vrot.slane %v1535, 4
    %v1539 = vshrl.u32 %v1522, 16
    %v1541 = vrot.slane %v1539, 5
    %v1542 = vshll.u32 %v1522, 16
    %v1544 = vrot.slane %v1542, 6
    %v1545 = vor.u32 %v1541, %v1544
    %v1546 = vsel %vm90, %v1537, %v1545
    %v1548 = vshrl.u32 %v1461, 16
    %v1550 = vrot.slane %v1548, 5
    %v1551 = vshll.u32 %v1461, 16
    %v1553 = vrot.slane %v1551, 6
    %v1554 = vor.u32 %v1550, %v1553
    %v1555 = vrot.slane %v1554, 4
    %v1556 = vrot.slane %v1410, 5
    %v1557 = vrot.slane %v1406, 6
    %v1558 = vor.u32 %v1556, %v1557
    %v1559 = vsel %vm90, %v1555, %v1558
    %v1560 = vrot.slane %v1558, 4
    %v1562 = vshrl.u32 %v1523, 16
    %v1564 = vrot.slane %v1562, 5
    %v1565 = vshll.u32 %v1523, 16
    %v1567 = vrot.slane %v1565, 6
    %v1568 = vor.u32 %v1564, %v1567
    %v1569 = vsel %vm90, %v1560, %v1568
    %s1570 = scalar_lea.vmem %s3, 32
    %v1571 = vld [vmem:[%s1570] sm:$0xf]
    %v1572 = vunpack.c.l.b16 %v1536
    %v1573 = vunpack.c.l.b16 %v1546
    %v1574 = vunpack.c.l.b16 %v1559
    %v1575 = vunpack.c.l.b16 %v1569
    %v1576 = vpack.c.b16 %v1573, %v1572
    %v1577 = vpack.c.b16 %v1575, %v1574
    %v1579 = vsel %vm1036, %v1576, 0
    %v1582 = vsel %vm1036, %v1577, 0
    %v1585 = vsel %vm1043, %v1571, 0
    %1587 = vmatpush.bf16.msra.mxu0 0
    %1588 = vmatpush.bf16.msra.mxu0 0
    %1589 = vmatpush.bf16.msra.mxu0 0
    %1590 = vmatpush.bf16.msra.mxu0 0
    %1591 = vmatpush.bf16.msra.mxu0 0
    %1592 = vmatpush.bf16.msra.mxu0 0
    %1593 = vmatpush.bf16.msra.mxu0 0
    %1594 = vmatpush.bf16.msra.mxu0 %v1585
    %1595 = vmatmul.bf16.gmra.mxu0 %v1579
    %v1596 = vpop.f32.mrf.mxu0
    %v1597 = vadd.f32 0.0, %v1596
    %v1598 = vpop.f32.mrf.mxu0
    %v1599 = vadd.f32 0.0, %v1598
    %1600 = vmatmul.bf16.gmra.mxu0 %v1582
    %v1601 = vpop.f32.mrf.mxu0
    %v1602 = vadd.f32 0.0, %v1601
    %v1603 = vpop.f32.mrf.mxu0
    %v1604 = vadd.f32 0.0, %v1603
    %1605 = vdwg.mxu0
    %v1606 = vadd.f32 %v1518, %v1597
    %v1607 = vadd.f32 %v1519, %v1599
    %v1608 = vadd.f32 %v1520, %v1602
    %v1609 = vadd.f32 %v1521, %v1604
    %v1610 = vld [vmem:[#allocation2 + $0x4] sm:$0xc]
    %v1611 = vld [vmem:[#allocation2 + $0x14] sm:$0xc]
    %v1616 = vrot.slane %v1610, 6
    %v1617 = vrot.slane %v1616, 4
    %v1618 = vrot.slane %v1367, 6
    %v1619 = vsel %vm158, %v1617, %v1618
    %v1620 = vrot.slane %v1618, 4
    %v1621 = vrot.slane %v1522, 6
    %v1622 = vsel %vm158, %v1620, %v1621
    %v1623 = vrot.slane %v1611, 6
    %v1624 = vrot.slane %v1623, 4
    %v1625 = vrot.slane %v1370, 6
    %v1626 = vsel %vm158, %v1624, %v1625
    %v1627 = vrot.slane %v1625, 4
    %v1628 = vrot.slane %v1523, 6
    %v1629 = vsel %vm158, %v1627, %v1628
    %s1630 = scalar_lea.vmem %s3, 36
    %v1631 = vld [vmem:[%s1630] sm:$0xf]
    %v1632 = vunpack.c.l.b16 %v1619
    %v1633 = vunpack.c.l.b16 %v1622
    %v1634 = vunpack.c.l.b16 %v1626
    %v1635 = vunpack.c.l.b16 %v1629
    %v1636 = vpack.c.b16 %v1633, %v1632
    %v1637 = vpack.c.b16 %v1635, %v1634
    %v1639 = vsel %vm1036, %v1636, 0
    %v1642 = vsel %vm1036, %v1637, 0
    %v1645 = vsel %vm1043, %v1631, 0
    %1647 = vmatpush.bf16.msra.mxu0 0
    %1648 = vmatpush.bf16.msra.mxu0 0
    %1649 = vmatpush.bf16.msra.mxu0 0
    %1650 = vmatpush.bf16.msra.mxu0 0
    %1651 = vmatpush.bf16.msra.mxu0 0
    %1652 = vmatpush.bf16.msra.mxu0 0
    %1653 = vmatpush.bf16.msra.mxu0 0
    %1654 = vmatpush.bf16.msra.mxu0 %v1645
    %1655 = vmatmul.bf16.gmra.mxu0 %v1639
    %v1656 = vpop.f32.mrf.mxu0
    %v1657 = vadd.f32 0.0, %v1656
    %v1658 = vpop.f32.mrf.mxu0
    %v1659 = vadd.f32 0.0, %v1658
    %1660 = vmatmul.bf16.gmra.mxu0 %v1642
    %v1661 = vpop.f32.mrf.mxu0
    %v1662 = vadd.f32 0.0, %v1661
    %v1663 = vpop.f32.mrf.mxu0
    %v1664 = vadd.f32 0.0, %v1663
    %1665 = vdwg.mxu0
    %v1666 = vadd.f32 %v1606, %v1657
    %v1667 = vadd.f32 %v1607, %v1659
    %v1668 = vadd.f32 %v1608, %v1662
    %v1669 = vadd.f32 %v1609, %v1664
    %v1670 = vld [vmem:[#allocation2 + $0xc] sm:$0x7]
    %v1671 = vld [vmem:[#allocation2 + $0x1c] sm:$0x7]
    %v1673 = vshrl.u32 %v1610, 16
    %v1675 = vrot.slane %v1673, 6
    %v1676 = vshll.u32 %v1610, 16
    %v1678 = vrot.slane %v1676, 7
    %v1679 = vor.u32 %v1675, %v1678
    %v1680 = vrot.slane %v1679, 4
    %v1681 = vrot.slane %v1386, 6
    %v1682 = vrot.slane %v1382, 7
    %v1683 = vor.u32 %v1681, %v1682
    %v1684 = vsel %vm249, %v1680, %v1683
    %v1685 = vrot.slane %v1683, 4
    %v1687 = vshrl.u32 %v1670, 16
    %v1689 = vrot.slane %v1687, 6
    %v1690 = vshll.u32 %v1670, 16
    %v1692 = vrot.slane %v1690, 7
    %v1693 = vor.u32 %v1689, %v1692
    %v1694 = vsel %vm249, %v1685, %v1693
    %v1696 = vshrl.u32 %v1611, 16
    %v1698 = vrot.slane %v1696, 6
    %v1699 = vshll.u32 %v1611, 16
    %v1701 = vrot.slane %v1699, 7
    %v1702 = vor.u32 %v1698, %v1701
    %v1703 = vrot.slane %v1702, 4
    %v1704 = vrot.slane %v1410, 6
    %v1705 = vrot.slane %v1406, 7
    %v1706 = vor.u32 %v1704, %v1705
    %v1707 = vsel %vm249, %v1703, %v1706
    %v1708 = vrot.slane %v1706, 4
    %v1710 = vshrl.u32 %v1671, 16
    %v1712 = vrot.slane %v1710, 6
    %v1713 = vshll.u32 %v1671, 16
    %v1715 = vrot.slane %v1713, 7
    %v1716 = vor.u32 %v1712, %v1715
    %v1717 = vsel %vm249, %v1708, %v1716
    %s1718 = scalar_lea.vmem %s3, 40
    %v1719 = vld [vmem:[%s1718] sm:$0xf]
    %v1720 = vunpack.c.l.b16 %v1684
    %v1721 = vunpack.c.l.b16 %v1694
    %v1722 = vunpack.c.l.b16 %v1707
    %v1723 = vunpack.c.l.b16 %v1717
    %v1724 = vpack.c.b16 %v1721, %v1720
    %v1725 = vpack.c.b16 %v1723, %v1722
    %v1727 = vsel %vm1036, %v1724, 0
    %v1730 = vsel %vm1036, %v1725, 0
    %v1733 = vsel %vm1043, %v1719, 0
    %1735 = vmatpush.bf16.msra.mxu0 0
    %1736 = vmatpush.bf16.msra.mxu0 0
    %1737 = vmatpush.bf16.msra.mxu0 0
    %1738 = vmatpush.bf16.msra.mxu0 0
    %1739 = vmatpush.bf16.msra.mxu0 0
    %1740 = vmatpush.bf16.msra.mxu0 0
    %1741 = vmatpush.bf16.msra.mxu0 0
    %1742 = vmatpush.bf16.msra.mxu0 %v1733
    %1743 = vmatmul.bf16.gmra.mxu0 %v1727
    %v1744 = vpop.f32.mrf.mxu0
    %v1745 = vadd.f32 0.0, %v1744
    %v1746 = vpop.f32.mrf.mxu0
    %v1747 = vadd.f32 0.0, %v1746
    %1748 = vmatmul.bf16.gmra.mxu0 %v1730
    %v1749 = vpop.f32.mrf.mxu0
    %v1750 = vadd.f32 0.0, %v1749
    %v1751 = vpop.f32.mrf.mxu0
    %v1752 = vadd.f32 0.0, %v1751
    %1753 = vdwg.mxu0
    %v1754 = vadd.f32 %v1666, %v1745
    %v1755 = vadd.f32 %v1667, %v1747
    %v1756 = vadd.f32 %v1668, %v1750
    %v1757 = vadd.f32 %v1669, %v1752
    %v1758 = vld [vmem:[%s4] sm:$0x1]
    %v1760 = vperm.slane %v1758, 0
    %v1762 = vadd.f32 %v1754, %v1760
    %v1763 = vadd.f32 %v1755, %v1760
    %v1764 = vadd.f32 %v1756, %v1760
    %v1765 = vadd.f32 %v1757, %v1760
    %v1766 = vmul.f32 %v1762, 0.01
    %v1767 = vmul.f32 %v1763, 0.01
    %v1768 = vmul.f32 %v1764, 0.01
    %v1769 = vmul.f32 %v1765, 0.01
    %v1770 = vmax.f32 %v1762, %v1766
    %v1771 = vmax.f32 %v1763, %v1767
    %v1772 = vmax.f32 %v1764, %v1768
    %v1773 = vmax.f32 %v1765, %v1769
    %v1774 = vpack.c.bf16 %v1770, %v1770
    %v1775 = vpack.c.bf16 %v1771, %v1771
    %v1776 = vpack.c.bf16 %v1772, %v1772
    %v1777 = vpack.c.bf16 %v1773, %v1773
    %vm1778 = vcmask 125952
    %1779 = vst.msk [vmem:[#allocation2 + $0x4] sm:$0xf] %vm1778, %v1774
    %1780 = vst.msk [vmem:[#allocation2 + $0x8] sm:$0xf] %vm1778, %v1775
    %1781 = vst.msk [vmem:[#allocation2 + $0x14] sm:$0xf] %vm1778, %v1776
    %1782 = vst.msk [vmem:[#allocation2 + $0x18] sm:$0xf] %vm1778, %v1777
    %v1783 = vld [vmem:[#allocation2] sm:$0xe]
    %v1784 = vld [vmem:[#allocation2 + $0x4] sm:$0xf]
    %v1785 = vld [vmem:[#allocation2 + $0x8] sm:$0x3]
    %v1786 = vld [vmem:[#allocation2 + $0x10] sm:$0xe]
    %v1787 = vld [vmem:[#allocation2 + $0x14] sm:$0xf]
    %v1788 = vld [vmem:[#allocation2 + $0x18] sm:$0x3]
    %v1790 = vshrl.u32 %v1783, 16
    %v1792 = vrot.slane %v1790, 5
    %v1793 = vshll.u32 %v1783, 16
    %v1795 = vrot.slane %v1793, 6
    %v1796 = vor.u32 %v1792, %v1795
    %v1797 = vrot.slane %v1796, 4
    %v1799 = vshrl.u32 %v1784, 16
    %v1801 = vrot.slane %v1799, 5
    %v1802 = vshll.u32 %v1784, 16
    %v1804 = vrot.slane %v1802, 6
    %v1805 = vor.u32 %v1801, %v1804
    %v1806 = vsel %vm90, %v1797, %v1805
    %v1807 = vrot.slane %v1805, 4
    %v1809 = vshrl.u32 %v1785, 16
    %v1811 = vrot.slane %v1809, 5
    %v1812 = vshll.u32 %v1785, 16
    %v1814 = vrot.slane %v1812, 6
    %v1815 = vor.u32 %v1811, %v1814
    %v1816 = vsel %vm90, %v1807, %v1815
    %v1818 = vshrl.u32 %v1786, 16
    %v1820 = vrot.slane %v1818, 5
    %v1821 = vshll.u32 %v1786, 16
    %v1823 = vrot.slane %v1821, 6
    %v1824 = vor.u32 %v1820, %v1823
    %v1825 = vrot.slane %v1824, 4
    %v1827 = vshrl.u32 %v1787, 16
    %v1829 = vrot.slane %v1827, 5
    %v1830 = vshll.u32 %v1787, 16
    %v1832 = vrot.slane %v1830, 6
    %v1833 = vor.u32 %v1829, %v1832
    %v1834 = vsel %vm90, %v1825, %v1833
    %v1835 = vrot.slane %v1833, 4
    %v1837 = vshrl.u32 %v1788, 16
    %v1839 = vrot.slane %v1837, 5
    %v1840 = vshll.u32 %v1788, 16
    %v1842 = vrot.slane %v1840, 6
    %v1843 = vor.u32 %v1839, %v1842
    %v1844 = vsel %vm90, %v1835, %v1843
    %v1845 = vld [vmem:[%s5] sm:$0xf]
    %v1846 = vld [vmem:[%s5 + $0x4] sm:$0xf]
    %v1847 = vld [vmem:[#allocation2] sm:$0xc]
    %v1848 = vld [vmem:[#allocation2 + $0x10] sm:$0xc]
    %v1855 = vrot.slane %v1847, 6
    %v1856 = vrot.slane %v1855, 4
    %v1857 = vrot.slane %v1784, 6
    %v1858 = vsel %vm158, %v1856, %v1857
    %v1859 = vrot.slane %v1857, 4
    %v1860 = vrot.slane %v1785, 6
    %v1861 = vsel %vm158, %v1859, %v1860
    %v1862 = vrot.slane %v1848, 6
    %v1863 = vrot.slane %v1862, 4
    %v1864 = vrot.slane %v1787, 6
    %v1865 = vsel %vm158, %v1863, %v1864
    %v1866 = vrot.slane %v1864, 4
    %v1867 = vrot.slane %v1788, 6
    %v1868 = vsel %vm158, %v1866, %v1867
    %s1869 = scalar_lea.vmem %s5, 8
    %v1870 = vld [vmem:[%s1869] sm:$0xf]
    %v1871 = vld [vmem:[%s1869 + $0x4] sm:$0xf]
    %v1872 = vunpack.c.l.b16 %v1858
    %v1873 = vunpack.c.l.b16 %v1861
    %v1874 = vunpack.c.l.b16 %v1865
    %v1875 = vunpack.c.l.b16 %v1868
    %v1876 = vpack.c.b16 %v1873, %v1872
    %v1877 = vpack.c.b16 %v1875, %v1874
    %v1880 = vunpack.c.l.b16 %v1870
    %v1881 = vunpack.c.l.b16 %v1871
    %v1882 = vpack.c.b16 %v1881, %v1880
    %vm1884 = vcmask 130048
    %v1886 = vsel %vm1884, %v1876, 0
    %v1889 = vsel %vm1884, %v1877, 0
    %1891 = vmatpush.bf16.msra.mxu0 0
    %1892 = vmatpush.bf16.msra.mxu0 0
    %1893 = vmatpush.bf16.msra.mxu0 0
    %1894 = vmatpush.bf16.msra.mxu0 0
    %1895 = vmatpush.bf16.msra.mxu0 0
    %1896 = vmatpush.bf16.msra.mxu0 0
    %1897 = vmatpush.bf16.msra.mxu0 0
    %1898 = vmatpush.bf16.msra.mxu0 %v1882
    %1899 = vmatmul.bf16.gmra.mxu0 %v1886
    %v1900 = vpop.f32.mrf.mxu0
    %v1901 = vadd.f32 0.0, %v1900
    %v1902 = vpop.f32.mrf.mxu0
    %v1903 = vadd.f32 0.0, %v1902
    %1904 = vmatmul.bf16.gmra.mxu0 %v1889
    %v1905 = vpop.f32.mrf.mxu0
    %v1906 = vadd.f32 0.0, %v1905
    %v1907 = vpop.f32.mrf.mxu0
    %v1908 = vadd.f32 0.0, %v1907
    %1909 = vdwg.mxu0
    %v1910 = vunpack.c.l.b16 %v1806
    %v1911 = vunpack.c.l.b16 %v1816
    %v1912 = vunpack.c.l.b16 %v1834
    %v1913 = vunpack.c.l.b16 %v1844
    %v1914 = vpack.c.b16 %v1911, %v1910
    %v1915 = vpack.c.b16 %v1913, %v1912
    %v1918 = vunpack.c.l.b16 %v1845
    %v1919 = vunpack.c.l.b16 %v1846
    %v1920 = vpack.c.b16 %v1919, %v1918
    %v1923 = vsel %vm1884, %v1914, 0
    %v1926 = vsel %vm1884, %v1915, 0
    %1928 = vmatpush.bf16.msra.mxu0 0
    %1929 = vmatpush.bf16.msra.mxu0 0
    %1930 = vmatpush.bf16.msra.mxu0 0
    %1931 = vmatpush.bf16.msra.mxu0 0
    %1932 = vmatpush.bf16.msra.mxu0 0
    %1933 = vmatpush.bf16.msra.mxu0 0
    %1934 = vmatpush.bf16.msra.mxu0 0
    %1935 = vmatpush.bf16.msra.mxu0 %v1920
    %1936 = vmatmul.bf16.gmra.mxu0 %v1923
    %v1937 = vpop.f32.mrf.mxu0
    %v1938 = vadd.f32 %v1901, %v1937
    %v1939 = vpop.f32.mrf.mxu0
    %v1940 = vadd.f32 %v1903, %v1939
    %1941 = vmatmul.bf16.gmra.mxu0 %v1926
    %v1942 = vpop.f32.mrf.mxu0
    %v1943 = vadd.f32 %v1906, %v1942
    %v1944 = vpop.f32.mrf.mxu0
    %v1945 = vadd.f32 %v1908, %v1944
    %1946 = vdwg.mxu0
    %v1947 = vld [vmem:[#allocation2 + $0x8] sm:$0x7]
    %v1948 = vld [vmem:[#allocation2 + $0x18] sm:$0x7]
    %v1950 = vshrl.u32 %v1847, 16
    %v1952 = vrot.slane %v1950, 6
    %v1953 = vshll.u32 %v1847, 16
    %v1955 = vrot.slane %v1953, 7
    %v1956 = vor.u32 %v1952, %v1955
    %v1957 = vrot.slane %v1956, 4
    %v1958 = vrot.slane %v1799, 6
    %v1959 = vrot.slane %v1802, 7
    %v1960 = vor.u32 %v1958, %v1959
    %v1961 = vsel %vm249, %v1957, %v1960
    %v1962 = vrot.slane %v1960, 4
    %v1964 = vshrl.u32 %v1947, 16
    %v1966 = vrot.slane %v1964, 6
    %v1967 = vshll.u32 %v1947, 16
    %v1969 = vrot.slane %v1967, 7
    %v1970 = vor.u32 %v1966, %v1969
    %v1971 = vsel %vm249, %v1962, %v1970
    %v1973 = vshrl.u32 %v1848, 16
    %v1975 = vrot.slane %v1973, 6
    %v1976 = vshll.u32 %v1848, 16
    %v1978 = vrot.slane %v1976, 7
    %v1979 = vor.u32 %v1975, %v1978
    %v1980 = vrot.slane %v1979, 4
    %v1981 = vrot.slane %v1827, 6
    %v1982 = vrot.slane %v1830, 7
    %v1983 = vor.u32 %v1981, %v1982
    %v1984 = vsel %vm249, %v1980, %v1983
    %v1985 = vrot.slane %v1983, 4
    %v1987 = vshrl.u32 %v1948, 16
    %v1989 = vrot.slane %v1987, 6
    %v1990 = vshll.u32 %v1948, 16
    %v1992 = vrot.slane %v1990, 7
    %v1993 = vor.u32 %v1989, %v1992
    %v1994 = vsel %vm249, %v1985, %v1993
    %s1995 = scalar_lea.vmem %s5, 16
    %v1996 = vld [vmem:[%s1995] sm:$0xf]
    %v1997 = vld [vmem:[%s1995 + $0x4] sm:$0xf]
    %v1998 = vunpack.c.l.b16 %v1961
    %v1999 = vunpack.c.l.b16 %v1971
    %v2000 = vunpack.c.l.b16 %v1984
    %v2001 = vunpack.c.l.b16 %v1994
    %v2002 = vpack.c.b16 %v1999, %v1998
    %v2003 = vpack.c.b16 %v2001, %v2000
    %v2006 = vunpack.c.l.b16 %v1996
    %v2007 = vunpack.c.l.b16 %v1997
    %v2008 = vpack.c.b16 %v2007, %v2006
    %v2011 = vsel %vm1884, %v2002, 0
    %v2014 = vsel %vm1884, %v2003, 0
    %2016 = vmatpush.bf16.msra.mxu0 0
    %2017 = vmatpush.bf16.msra.mxu0 0
    %2018 = vmatpush.bf16.msra.mxu0 0
    %2019 = vmatpush.bf16.msra.mxu0 0
    %2020 = vmatpush.bf16.msra.mxu0 0
    %2021 = vmatpush.bf16.msra.mxu0 0
    %2022 = vmatpush.bf16.msra.mxu0 0
    %2023 = vmatpush.bf16.msra.mxu0 %v2008
    %2024 = vmatmul.bf16.gmra.mxu0 %v2011
    %v2025 = vpop.f32.mrf.mxu0
    %v2026 = vadd.f32 0.0, %v2025
    %v2027 = vpop.f32.mrf.mxu0
    %v2028 = vadd.f32 0.0, %v2027
    %2029 = vmatmul.bf16.gmra.mxu0 %v2014
    %v2030 = vpop.f32.mrf.mxu0
    %v2031 = vadd.f32 0.0, %v2030
    %v2032 = vpop.f32.mrf.mxu0
    %v2033 = vadd.f32 0.0, %v2032
    %2034 = vdwg.mxu0
    %v2035 = vadd.f32 %v1938, %v2026
    %v2036 = vadd.f32 %v1940, %v2028
    %v2037 = vadd.f32 %v1943, %v2031
    %v2038 = vadd.f32 %v1945, %v2033
    %v2039 = vld [vmem:[#allocation2] sm:$0x8]
    %v2040 = vld [vmem:[#allocation2 + $0x10] sm:$0x8]
    %v2045 = vrot.slane %v2039, 7
    %v2046 = vrot.slane %v2045, 4
    %v2047 = vrot.slane %v1784, 7
    %v2048 = vsel %vm344, %v2046, %v2047
    %v2049 = vrot.slane %v2047, 4
    %v2050 = vrot.slane %v1947, 7
    %v2051 = vsel %vm344, %v2049, %v2050
    %v2052 = vrot.slane %v2040, 7
    %v2053 = vrot.slane %v2052, 4
    %v2054 = vrot.slane %v1787, 7
    %v2055 = vsel %vm344, %v2053, %v2054
    %v2056 = vrot.slane %v2054, 4
    %v2057 = vrot.slane %v1948, 7
    %v2058 = vsel %vm344, %v2056, %v2057
    %s2059 = scalar_lea.vmem %s5, 24
    %v2060 = vld [vmem:[%s2059] sm:$0xf]
    %v2061 = vld [vmem:[%s2059 + $0x4] sm:$0xf]
    %v2062 = vunpack.c.l.b16 %v2048
    %v2063 = vunpack.c.l.b16 %v2051
    %v2064 = vunpack.c.l.b16 %v2055
    %v2065 = vunpack.c.l.b16 %v2058
    %v2066 = vpack.c.b16 %v2063, %v2062
    %v2067 = vpack.c.b16 %v2065, %v2064
    %v2070 = vunpack.c.l.b16 %v2060
    %v2071 = vunpack.c.l.b16 %v2061
    %v2072 = vpack.c.b16 %v2071, %v2070
    %v2075 = vsel %vm1884, %v2066, 0
    %v2078 = vsel %vm1884, %v2067, 0
    %2080 = vmatpush.bf16.msra.mxu0 0
    %2081 = vmatpush.bf16.msra.mxu0 0
    %2082 = vmatpush.bf16.msra.mxu0 0
    %2083 = vmatpush.bf16.msra.mxu0 0
    %2084 = vmatpush.bf16.msra.mxu0 0
    %2085 = vmatpush.bf16.msra.mxu0 0
    %2086 = vmatpush.bf16.msra.mxu0 0
    %2087 = vmatpush.bf16.msra.mxu0 %v2072
    %2088 = vmatmul.bf16.gmra.mxu0 %v2075
    %v2089 = vpop.f32.mrf.mxu0
    %v2090 = vadd.f32 0.0, %v2089
    %v2091 = vpop.f32.mrf.mxu0
    %v2092 = vadd.f32 0.0, %v2091
    %2093 = vmatmul.bf16.gmra.mxu0 %v2078
    %v2094 = vpop.f32.mrf.mxu0
    %v2095 = vadd.f32 0.0, %v2094
    %v2096 = vpop.f32.mrf.mxu0
    %v2097 = vadd.f32 0.0, %v2096
    %2098 = vdwg.mxu0
    %v2099 = vadd.f32 %v2035, %v2090
    %v2100 = vadd.f32 %v2036, %v2092
    %v2101 = vadd.f32 %v2037, %v2095
    %v2102 = vadd.f32 %v2038, %v2097
    %v2103 = vld [vmem:[#allocation2 + $0x8] sm:$0xf]
    %v2104 = vld [vmem:[#allocation2 + $0x18] sm:$0xf]
    %v2106 = vshrl.u32 %v2039, 16
    %v2108 = vrot.slane %v2106, 7
    %v2109 = vrot.slane %v2108, 4
    %v2110 = vrot.slane %v1799, 7
    %v2111 = vor.u32 %v2110, %v1802
    %v2112 = vsel %vm403, %v2109, %v2111
    %v2113 = vrot.slane %v2110, 4
    %v2115 = vshrl.u32 %v2103, 16
    %v2117 = vrot.slane %v2115, 7
    %v2118 = vshll.u32 %v2103, 16
    %v2120 = vor.u32 %v2117, %v2118
    %v2121 = vsel %vm403, %v2113, %v2120
    %v2123 = vshrl.u32 %v2040, 16
    %v2125 = vrot.slane %v2123, 7
    %v2126 = vrot.slane %v2125, 4
    %v2127 = vrot.slane %v1827, 7
    %v2128 = vor.u32 %v2127, %v1830
    %v2129 = vsel %vm403, %v2126, %v2128
    %v2130 = vrot.slane %v2127, 4
    %v2132 = vshrl.u32 %v2104, 16
    %v2134 = vrot.slane %v2132, 7
    %v2135 = vshll.u32 %v2104, 16
    %v2137 = vor.u32 %v2134, %v2135
    %v2138 = vsel %vm403, %v2130, %v2137
    %s2139 = scalar_lea.vmem %s5, 32
    %v2140 = vld [vmem:[%s2139] sm:$0xf]
    %v2141 = vld [vmem:[%s2139 + $0x4] sm:$0xf]
    %v2142 = vunpack.c.l.b16 %v2112
    %v2143 = vunpack.c.l.b16 %v2121
    %v2144 = vunpack.c.l.b16 %v2129
    %v2145 = vunpack.c.l.b16 %v2138
    %v2146 = vpack.c.b16 %v2143, %v2142
    %v2147 = vpack.c.b16 %v2145, %v2144
    %v2150 = vunpack.c.l.b16 %v2140
    %v2151 = vunpack.c.l.b16 %v2141
    %v2152 = vpack.c.b16 %v2151, %v2150
    %v2155 = vsel %vm1884, %v2146, 0
    %v2158 = vsel %vm1884, %v2147, 0
    %2160 = vmatpush.bf16.msra.mxu0 0
    %2161 = vmatpush.bf16.msra.mxu0 0
    %2162 = vmatpush.bf16.msra.mxu0 0
    %2163 = vmatpush.bf16.msra.mxu0 0
    %2164 = vmatpush.bf16.msra.mxu0 0
    %2165 = vmatpush.bf16.msra.mxu0 0
    %2166 = vmatpush.bf16.msra.mxu0 0
    %2167 = vmatpush.bf16.msra.mxu0 %v2152
    %2168 = vmatmul.bf16.gmra.mxu0 %v2155
    %v2169 = vpop.f32.mrf.mxu0
    %v2170 = vadd.f32 0.0, %v2169
    %v2171 = vpop.f32.mrf.mxu0
    %v2172 = vadd.f32 0.0, %v2171
    %2173 = vmatmul.bf16.gmra.mxu0 %v2158
    %v2174 = vpop.f32.mrf.mxu0
    %v2175 = vadd.f32 0.0, %v2174
    %v2176 = vpop.f32.mrf.mxu0
    %v2177 = vadd.f32 0.0, %v2176
    %2178 = vdwg.mxu0
    %v2179 = vadd.f32 %v2099, %v2170
    %v2180 = vadd.f32 %v2100, %v2172
    %v2181 = vadd.f32 %v2101, %v2175
    %v2182 = vadd.f32 %v2102, %v2177
    %s2183 = scalar_lea.vmem %s5, 40
    %v2184 = vld [vmem:[%s2183] sm:$0xf]
    %v2185 = vld [vmem:[%s2183 + $0x4] sm:$0xf]
    %v2188 = vunpack.c.l.b16 %v1784
    %v2189 = vunpack.c.l.b16 %v2103
    %v2190 = vunpack.c.l.b16 %v1787
    %v2191 = vunpack.c.l.b16 %v2104
    %v2192 = vpack.c.b16 %v2189, %v2188
    %v2193 = vpack.c.b16 %v2191, %v2190
    %v2196 = vunpack.c.l.b16 %v2184
    %v2197 = vunpack.c.l.b16 %v2185
    %v2198 = vpack.c.b16 %v2197, %v2196
    %v2201 = vsel %vm1884, %v2192, 0
    %v2204 = vsel %vm1884, %v2193, 0
    %2206 = vmatpush.bf16.msra.mxu0 0
    %2207 = vmatpush.bf16.msra.mxu0 0
    %2208 = vmatpush.bf16.msra.mxu0 0
    %2209 = vmatpush.bf16.msra.mxu0 0
    %2210 = vmatpush.bf16.msra.mxu0 0
    %2211 = vmatpush.bf16.msra.mxu0 0
    %2212 = vmatpush.bf16.msra.mxu0 0
    %2213 = vmatpush.bf16.msra.mxu0 %v2198
    %2214 = vmatmul.bf16.gmra.mxu0 %v2201
    %v2215 = vpop.f32.mrf.mxu0
    %v2216 = vadd.f32 0.0, %v2215
    %v2217 = vpop.f32.mrf.mxu0
    %v2218 = vadd.f32 0.0, %v2217
    %2219 = vmatmul.bf16.gmra.mxu0 %v2204
    %v2220 = vpop.f32.mrf.mxu0
    %v2221 = vadd.f32 0.0, %v2220
    %v2222 = vpop.f32.mrf.mxu0
    %v2223 = vadd.f32 0.0, %v2222
    %2224 = vdwg.mxu0
    %v2225 = vadd.f32 %v2179, %v2216
    %v2226 = vadd.f32 %v2180, %v2218
    %v2227 = vadd.f32 %v2181, %v2221
    %v2228 = vadd.f32 %v2182, %v2223
    %v2229 = vld [vmem:[#allocation2 + $0x4] sm:$0xf]
    %v2230 = vld [vmem:[#allocation2 + $0x8] sm:$0xf]
    %v2231 = vld [vmem:[#allocation2 + $0xc] sm:$0x1]
    %v2232 = vld [vmem:[#allocation2 + $0x14] sm:$0xf]
    %v2233 = vld [vmem:[#allocation2 + $0x18] sm:$0xf]
    %v2234 = vld [vmem:[#allocation2 + $0x1c] sm:$0x1]
    %v2236 = vshrl.u32 %v2229, 16
    %v2238 = vrot.slane %v2236, 4
    %v2239 = vshll.u32 %v2229, 16
    %v2241 = vrot.slane %v2239, 5
    %v2242 = vor.u32 %v2238, %v2241
    %v2243 = vrot.slane %v2242, 4
    %v2245 = vshll.u32 %v2230, 16
    %v2247 = vrot.slane %v2245, 5
    %v2248 = vsel %vm528, %v2243, %v2247
    %v2249 = vshrl.u32 %v2230, 16
    %v2251 = vrot.slane %v2249, 4
    %v2252 = vor.u32 %v2251, %v2247
    %v2253 = vrot.slane %v2252, 4
    %v2255 = vshll.u32 %v2231, 16
    %v2257 = vrot.slane %v2255, 5
    %v2258 = vsel %vm528, %v2253, %v2257
    %v2260 = vshrl.u32 %v2232, 16
    %v2262 = vrot.slane %v2260, 4
    %v2263 = vshll.u32 %v2232, 16
    %v2265 = vrot.slane %v2263, 5
    %v2266 = vor.u32 %v2262, %v2265
    %v2267 = vrot.slane %v2266, 4
    %v2269 = vshll.u32 %v2233, 16
    %v2271 = vrot.slane %v2269, 5
    %v2272 = vsel %vm528, %v2267, %v2271
    %v2273 = vshrl.u32 %v2233, 16
    %v2275 = vrot.slane %v2273, 4
    %v2276 = vor.u32 %v2275, %v2271
    %v2277 = vrot.slane %v2276, 4
    %v2279 = vshll.u32 %v2234, 16
    %v2281 = vrot.slane %v2279, 5
    %v2282 = vsel %vm528, %v2277, %v2281
    %s2283 = scalar_lea.vmem %s5, 48
    %v2284 = vld [vmem:[%s2283] sm:$0xf]
    %v2285 = vld [vmem:[%s2283 + $0x4] sm:$0xf]
    %v2286 = vunpack.c.l.b16 %v2248
    %v2287 = vunpack.c.l.b16 %v2258
    %v2288 = vunpack.c.l.b16 %v2272
    %v2289 = vunpack.c.l.b16 %v2282
    %v2290 = vpack.c.b16 %v2287, %v2286
    %v2291 = vpack.c.b16 %v2289, %v2288
    %v2294 = vunpack.c.l.b16 %v2284
    %v2295 = vunpack.c.l.b16 %v2285
    %v2296 = vpack.c.b16 %v2295, %v2294
    %v2299 = vsel %vm1884, %v2290, 0
    %v2302 = vsel %vm1884, %v2291, 0
    %2304 = vmatpush.bf16.msra.mxu0 0
    %2305 = vmatpush.bf16.msra.mxu0 0
    %2306 = vmatpush.bf16.msra.mxu0 0
    %2307 = vmatpush.bf16.msra.mxu0 0
    %2308 = vmatpush.bf16.msra.mxu0 0
    %2309 = vmatpush.bf16.msra.mxu0 0
    %2310 = vmatpush.bf16.msra.mxu0 0
    %2311 = vmatpush.bf16.msra.mxu0 %v2296
    %2312 = vmatmul.bf16.gmra.mxu0 %v2299
    %v2313 = vpop.f32.mrf.mxu0
    %v2314 = vadd.f32 0.0, %v2313
    %v2315 = vpop.f32.mrf.mxu0
    %v2316 = vadd.f32 0.0, %v2315
    %2317 = vmatmul.bf16.gmra.mxu0 %v2302
    %v2318 = vpop.f32.mrf.mxu0
    %v2319 = vadd.f32 0.0, %v2318
    %v2320 = vpop.f32.mrf.mxu0
    %v2321 = vadd.f32 0.0, %v2320
    %2322 = vdwg.mxu0
    %v2323 = vadd.f32 %v2225, %v2314
    %v2324 = vadd.f32 %v2226, %v2316
    %v2325 = vadd.f32 %v2227, %v2319
    %v2326 = vadd.f32 %v2228, %v2321
    %v2327 = vld [vmem:[#allocation2 + $0x4] sm:$0xe]
    %v2328 = vld [vmem:[#allocation2 + $0x14] sm:$0xe]
    %v2335 = vrot.slane %v2327, 5
    %v2336 = vrot.slane %v2335, 4
    %v2337 = vrot.slane %v2230, 5
    %v2338 = vsel %vm627, %v2336, %v2337
    %v2339 = vrot.slane %v2337, 4
    %v2340 = vrot.slane %v2231, 5
    %v2341 = vsel %vm627, %v2339, %v2340
    %v2342 = vrot.slane %v2328, 5
    %v2343 = vrot.slane %v2342, 4
    %v2344 = vrot.slane %v2233, 5
    %v2345 = vsel %vm627, %v2343, %v2344
    %v2346 = vrot.slane %v2344, 4
    %v2347 = vrot.slane %v2234, 5
    %v2348 = vsel %vm627, %v2346, %v2347
    %s2349 = scalar_lea.vmem %s5, 56
    %v2350 = vld [vmem:[%s2349] sm:$0xf]
    %v2351 = vld [vmem:[%s2349 + $0x4] sm:$0xf]
    %v2352 = vunpack.c.l.b16 %v2338
    %v2353 = vunpack.c.l.b16 %v2341
    %v2354 = vunpack.c.l.b16 %v2345
    %v2355 = vunpack.c.l.b16 %v2348
    %v2356 = vpack.c.b16 %v2353, %v2352
    %v2357 = vpack.c.b16 %v2355, %v2354
    %v2360 = vunpack.c.l.b16 %v2350
    %v2361 = vunpack.c.l.b16 %v2351
    %v2362 = vpack.c.b16 %v2361, %v2360
    %v2365 = vsel %vm1884, %v2356, 0
    %v2368 = vsel %vm1884, %v2357, 0
    %2370 = vmatpush.bf16.msra.mxu0 0
    %2371 = vmatpush.bf16.msra.mxu0 0
    %2372 = vmatpush.bf16.msra.mxu0 0
    %2373 = vmatpush.bf16.msra.mxu0 0
    %2374 = vmatpush.bf16.msra.mxu0 0
    %2375 = vmatpush.bf16.msra.mxu0 0
    %2376 = vmatpush.bf16.msra.mxu0 0
    %2377 = vmatpush.bf16.msra.mxu0 %v2362
    %2378 = vmatmul.bf16.gmra.mxu0 %v2365
    %v2379 = vpop.f32.mrf.mxu0
    %v2380 = vadd.f32 0.0, %v2379
    %v2381 = vpop.f32.mrf.mxu0
    %v2382 = vadd.f32 0.0, %v2381
    %2383 = vmatmul.bf16.gmra.mxu0 %v2368
    %v2384 = vpop.f32.mrf.mxu0
    %v2385 = vadd.f32 0.0, %v2384
    %v2386 = vpop.f32.mrf.mxu0
    %v2387 = vadd.f32 0.0, %v2386
    %2388 = vdwg.mxu0
    %v2389 = vadd.f32 %v2323, %v2380
    %v2390 = vadd.f32 %v2324, %v2382
    %v2391 = vadd.f32 %v2325, %v2385
    %v2392 = vadd.f32 %v2326, %v2387
    %v2393 = vld [vmem:[#allocation2 + $0xc] sm:$0x3]
    %v2394 = vld [vmem:[#allocation2 + $0x1c] sm:$0x3]
    %v2396 = vshrl.u32 %v2327, 16
    %v2398 = vrot.slane %v2396, 5
    %v2399 = vshll.u32 %v2327, 16
    %v2401 = vrot.slane %v2399, 6
    %v2402 = vor.u32 %v2398, %v2401
    %v2403 = vrot.slane %v2402, 4
    %v2404 = vrot.slane %v2249, 5
    %v2405 = vrot.slane %v2245, 6
    %v2406 = vor.u32 %v2404, %v2405
    %v2407 = vsel %vm90, %v2403, %v2406
    %v2408 = vrot.slane %v2406, 4
    %v2410 = vshrl.u32 %v2393, 16
    %v2412 = vrot.slane %v2410, 5
    %v2413 = vshll.u32 %v2393, 16
    %v2415 = vrot.slane %v2413, 6
    %v2416 = vor.u32 %v2412, %v2415
    %v2417 = vsel %vm90, %v2408, %v2416
    %v2419 = vshrl.u32 %v2328, 16
    %v2421 = vrot.slane %v2419, 5
    %v2422 = vshll.u32 %v2328, 16
    %v2424 = vrot.slane %v2422, 6
    %v2425 = vor.u32 %v2421, %v2424
    %v2426 = vrot.slane %v2425, 4
    %v2427 = vrot.slane %v2273, 5
    %v2428 = vrot.slane %v2269, 6
    %v2429 = vor.u32 %v2427, %v2428
    %v2430 = vsel %vm90, %v2426, %v2429
    %v2431 = vrot.slane %v2429, 4
    %v2433 = vshrl.u32 %v2394, 16
    %v2435 = vrot.slane %v2433, 5
    %v2436 = vshll.u32 %v2394, 16
    %v2438 = vrot.slane %v2436, 6
    %v2439 = vor.u32 %v2435, %v2438
    %v2440 = vsel %vm90, %v2431, %v2439
    %s2441 = scalar_lea.vmem %s5, 64
    %v2442 = vld [vmem:[%s2441] sm:$0xf]
    %v2443 = vld [vmem:[%s2441 + $0x4] sm:$0xf]
    %v2444 = vunpack.c.l.b16 %v2407
    %v2445 = vunpack.c.l.b16 %v2417
    %v2446 = vunpack.c.l.b16 %v2430
    %v2447 = vunpack.c.l.b16 %v2440
    %v2448 = vpack.c.b16 %v2445, %v2444
    %v2449 = vpack.c.b16 %v2447, %v2446
    %v2452 = vunpack.c.l.b16 %v2442
    %v2453 = vunpack.c.l.b16 %v2443
    %v2454 = vpack.c.b16 %v2453, %v2452
    %v2457 = vsel %vm1884, %v2448, 0
    %v2460 = vsel %vm1884, %v2449, 0
    %2462 = vmatpush.bf16.msra.mxu0 0
    %2463 = vmatpush.bf16.msra.mxu0 0
    %2464 = vmatpush.bf16.msra.mxu0 0
    %2465 = vmatpush.bf16.msra.mxu0 0
    %2466 = vmatpush.bf16.msra.mxu0 0
    %2467 = vmatpush.bf16.msra.mxu0 0
    %2468 = vmatpush.bf16.msra.mxu0 0
    %2469 = vmatpush.bf16.msra.mxu0 %v2454
    %2470 = vmatmul.bf16.gmra.mxu0 %v2457
    %v2471 = vpop.f32.mrf.mxu0
    %v2472 = vadd.f32 0.0, %v2471
    %v2473 = vpop.f32.mrf.mxu0
    %v2474 = vadd.f32 0.0, %v2473
    %2475 = vmatmul.bf16.gmra.mxu0 %v2460
    %v2476 = vpop.f32.mrf.mxu0
    %v2477 = vadd.f32 0.0, %v2476
    %v2478 = vpop.f32.mrf.mxu0
    %v2479 = vadd.f32 0.0, %v2478
    %2480 = vdwg.mxu0
    %v2481 = vadd.f32 %v2389, %v2472
    %v2482 = vadd.f32 %v2390, %v2474
    %v2483 = vadd.f32 %v2391, %v2477
    %v2484 = vadd.f32 %v2392, %v2479
    %v2485 = vld [vmem:[#allocation2 + $0x4] sm:$0xc]
    %v2486 = vld [vmem:[#allocation2 + $0x14] sm:$0xc]
    %v2491 = vrot.slane %v2485, 6
    %v2492 = vrot.slane %v2491, 4
    %v2493 = vrot.slane %v2230, 6
    %v2494 = vsel %vm158, %v2492, %v2493
    %v2495 = vrot.slane %v2493, 4
    %v2496 = vrot.slane %v2393, 6
    %v2497 = vsel %vm158, %v2495, %v2496
    %v2498 = vrot.slane %v2486, 6
    %v2499 = vrot.slane %v2498, 4
    %v2500 = vrot.slane %v2233, 6
    %v2501 = vsel %vm158, %v2499, %v2500
    %v2502 = vrot.slane %v2500, 4
    %v2503 = vrot.slane %v2394, 6
    %v2504 = vsel %vm158, %v2502, %v2503
    %s2505 = scalar_lea.vmem %s5, 72
    %v2506 = vld [vmem:[%s2505] sm:$0xf]
    %v2507 = vld [vmem:[%s2505 + $0x4] sm:$0xf]
    %v2508 = vunpack.c.l.b16 %v2494
    %v2509 = vunpack.c.l.b16 %v2497
    %v2510 = vunpack.c.l.b16 %v2501
    %v2511 = vunpack.c.l.b16 %v2504
    %v2512 = vpack.c.b16 %v2509, %v2508
    %v2513 = vpack.c.b16 %v2511, %v2510
    %v2516 = vunpack.c.l.b16 %v2506
    %v2517 = vunpack.c.l.b16 %v2507
    %v2518 = vpack.c.b16 %v2517, %v2516
    %v2521 = vsel %vm1884, %v2512, 0
    %v2524 = vsel %vm1884, %v2513, 0
    %2526 = vmatpush.bf16.msra.mxu0 0
    %2527 = vmatpush.bf16.msra.mxu0 0
    %2528 = vmatpush.bf16.msra.mxu0 0
    %2529 = vmatpush.bf16.msra.mxu0 0
    %2530 = vmatpush.bf16.msra.mxu0 0
    %2531 = vmatpush.bf16.msra.mxu0 0
    %2532 = vmatpush.bf16.msra.mxu0 0
    %2533 = vmatpush.bf16.msra.mxu0 %v2518
    %2534 = vmatmul.bf16.gmra.mxu0 %v2521
    %v2535 = vpop.f32.mrf.mxu0
    %v2536 = vadd.f32 0.0, %v2535
    %v2537 = vpop.f32.mrf.mxu0
    %v2538 = vadd.f32 0.0, %v2537
    %2539 = vmatmul.bf16.gmra.mxu0 %v2524
    %v2540 = vpop.f32.mrf.mxu0
    %v2541 = vadd.f32 0.0, %v2540
    %v2542 = vpop.f32.mrf.mxu0
    %v2543 = vadd.f32 0.0, %v2542
    %2544 = vdwg.mxu0
    %v2545 = vadd.f32 %v2481, %v2536
    %v2546 = vadd.f32 %v2482, %v2538
    %v2547 = vadd.f32 %v2483, %v2541
    %v2548 = vadd.f32 %v2484, %v2543
    %v2549 = vld [vmem:[#allocation2 + $0xc] sm:$0x7]
    %v2550 = vld [vmem:[#allocation2 + $0x1c] sm:$0x7]
    %v2552 = vshrl.u32 %v2485, 16
    %v2554 = vrot.slane %v2552, 6
    %v2555 = vshll.u32 %v2485, 16
    %v2557 = vrot.slane %v2555, 7
    %v2558 = vor.u32 %v2554, %v2557
    %v2559 = vrot.slane %v2558, 4
    %v2560 = vrot.slane %v2249, 6
    %v2561 = vrot.slane %v2245, 7
    %v2562 = vor.u32 %v2560, %v2561
    %v2563 = vsel %vm249, %v2559, %v2562
    %v2564 = vrot.slane %v2562, 4
    %v2566 = vshrl.u32 %v2549, 16
    %v2568 = vrot.slane %v2566, 6
    %v2569 = vshll.u32 %v2549, 16
    %v2571 = vrot.slane %v2569, 7
    %v2572 = vor.u32 %v2568, %v2571
    %v2573 = vsel %vm249, %v2564, %v2572
    %v2575 = vshrl.u32 %v2486, 16
    %v2577 = vrot.slane %v2575, 6
    %v2578 = vshll.u32 %v2486, 16
    %v2580 = vrot.slane %v2578, 7
    %v2581 = vor.u32 %v2577, %v2580
    %v2582 = vrot.slane %v2581, 4
    %v2583 = vrot.slane %v2273, 6
    %v2584 = vrot.slane %v2269, 7
    %v2585 = vor.u32 %v2583, %v2584
    %v2586 = vsel %vm249, %v2582, %v2585
    %v2587 = vrot.slane %v2585, 4
    %v2589 = vshrl.u32 %v2550, 16
    %v2591 = vrot.slane %v2589, 6
    %v2592 = vshll.u32 %v2550, 16
    %v2594 = vrot.slane %v2592, 7
    %v2595 = vor.u32 %v2591, %v2594
    %v2596 = vsel %vm249, %v2587, %v2595
    %s2597 = scalar_lea.vmem %s5, 80
    %v2598 = vld [vmem:[%s2597] sm:$0xf]
    %v2599 = vld [vmem:[%s2597 + $0x4] sm:$0xf]
    %v2600 = vunpack.c.l.b16 %v2563
    %v2601 = vunpack.c.l.b16 %v2573
    %v2602 = vunpack.c.l.b16 %v2586
    %v2603 = vunpack.c.l.b16 %v2596
    %v2604 = vpack.c.b16 %v2601, %v2600
    %v2605 = vpack.c.b16 %v2603, %v2602
    %v2608 = vunpack.c.l.b16 %v2598
    %v2609 = vunpack.c.l.b16 %v2599
    %v2610 = vpack.c.b16 %v2609, %v2608
    %v2613 = vsel %vm1884, %v2604, 0
    %v2616 = vsel %vm1884, %v2605, 0
    %2618 = vmatpush.bf16.msra.mxu0 0
    %2619 = vmatpush.bf16.msra.mxu0 0
    %2620 = vmatpush.bf16.msra.mxu0 0
    %2621 = vmatpush.bf16.msra.mxu0 0
    %2622 = vmatpush.bf16.msra.mxu0 0
    %2623 = vmatpush.bf16.msra.mxu0 0
    %2624 = vmatpush.bf16.msra.mxu0 0
    %2625 = vmatpush.bf16.msra.mxu0 %v2610
    %2626 = vmatmul.bf16.gmra.mxu0 %v2613
    %v2627 = vpop.f32.mrf.mxu0
    %v2628 = vadd.f32 0.0, %v2627
    %v2629 = vpop.f32.mrf.mxu0
    %v2630 = vadd.f32 0.0, %v2629
    %2631 = vmatmul.bf16.gmra.mxu0 %v2616
    %v2632 = vpop.f32.mrf.mxu0
    %v2633 = vadd.f32 0.0, %v2632
    %v2634 = vpop.f32.mrf.mxu0
    %v2635 = vadd.f32 0.0, %v2634
    %2636 = vdwg.mxu0
    %v2637 = vadd.f32 %v2545, %v2628
    %v2638 = vadd.f32 %v2546, %v2630
    %v2639 = vadd.f32 %v2547, %v2633
    %v2640 = vadd.f32 %v2548, %v2635
    %v2641 = vld [vmem:[%s6] sm:$0x1]
    %v2643 = vperm.slane %v2641, 0
    %v2645 = vadd.f32 %v2637, %v2643
    %v2646 = vadd.f32 %v2638, %v2643
    %v2647 = vadd.f32 %v2639, %v2643
    %v2648 = vadd.f32 %v2640, %v2643
    %v2649 = vmul.f32 %v2645, 0.01
    %v2650 = vmul.f32 %v2646, 0.01
    %v2651 = vmul.f32 %v2647, 0.01
    %v2652 = vmul.f32 %v2648, 0.01
    %v2653 = vmax.f32 %v2645, %v2649
    %v2654 = vmax.f32 %v2646, %v2650
    %v2655 = vmax.f32 %v2647, %v2651
    %v2656 = vmax.f32 %v2648, %v2652
    %v2657 = vpack.c.bf16 %v2653, %v2653
    %v2658 = vpack.c.bf16 %v2654, %v2654
    %v2659 = vpack.c.bf16 %v2655, %v2655
    %v2660 = vpack.c.bf16 %v2656, %v2656
    %2661 = vst.msk [vmem:[#allocation2 + $0x4] sm:$0xf] %vm68, %v2657
    %2662 = vst.msk [vmem:[#allocation2 + $0x8] sm:$0xf] %vm68, %v2658
    %2663 = vst.msk [vmem:[#allocation2 + $0x14] sm:$0xf] %vm68, %v2659
    %2664 = vst.msk [vmem:[#allocation2 + $0x18] sm:$0xf] %vm68, %v2660
    %v2665 = vld [vmem:[#allocation2] sm:$0xe]
    %v2666 = vld [vmem:[#allocation2 + $0x4] sm:$0xf]
    %v2667 = vld [vmem:[#allocation2 + $0x8] sm:$0x3]
    %v2668 = vld [vmem:[#allocation2 + $0x10] sm:$0xe]
    %v2669 = vld [vmem:[#allocation2 + $0x14] sm:$0xf]
    %v2670 = vld [vmem:[#allocation2 + $0x18] sm:$0x3]
    %v2672 = vshrl.u32 %v2665, 16
    %v2674 = vrot.slane %v2672, 5
    %v2675 = vshll.u32 %v2665, 16
    %v2677 = vrot.slane %v2675, 6
    %v2678 = vor.u32 %v2674, %v2677
    %v2679 = vrot.slane %v2678, 4
    %v2681 = vshrl.u32 %v2666, 16
    %v2683 = vrot.slane %v2681, 5
    %v2684 = vshll.u32 %v2666, 16
    %v2686 = vrot.slane %v2684, 6
    %v2687 = vor.u32 %v2683, %v2686
    %v2688 = vsel %vm90, %v2679, %v2687
    %v2689 = vrot.slane %v2687, 4
    %v2691 = vshrl.u32 %v2667, 16
    %v2693 = vrot.slane %v2691, 5
    %v2694 = vshll.u32 %v2667, 16
    %v2696 = vrot.slane %v2694, 6
    %v2697 = vor.u32 %v2693, %v2696
    %v2698 = vsel %vm90, %v2689, %v2697
    %v2700 = vshrl.u32 %v2668, 16
    %v2702 = vrot.slane %v2700, 5
    %v2703 = vshll.u32 %v2668, 16
    %v2705 = vrot.slane %v2703, 6
    %v2706 = vor.u32 %v2702, %v2705
    %v2707 = vrot.slane %v2706, 4
    %v2709 = vshrl.u32 %v2669, 16
    %v2711 = vrot.slane %v2709, 5
    %v2712 = vshll.u32 %v2669, 16
    %v2714 = vrot.slane %v2712, 6
    %v2715 = vor.u32 %v2711, %v2714
    %v2716 = vsel %vm90, %v2707, %v2715
    %v2717 = vrot.slane %v2715, 4
    %v2719 = vshrl.u32 %v2670, 16
    %v2721 = vrot.slane %v2719, 5
    %v2722 = vshll.u32 %v2670, 16
    %v2724 = vrot.slane %v2722, 6
    %v2725 = vor.u32 %v2721, %v2724
    %v2726 = vsel %vm90, %v2717, %v2725
    %v2727 = vld [vmem:[%s7] sm:$0xf]
    %v2728 = vld [vmem:[%s7 + $0x4] sm:$0xf]
    %v2729 = vld [vmem:[%s7 + $0x8] sm:$0xf]
    %v2730 = vld [vmem:[%s7 + $0xc] sm:$0xf]
    %v2731 = vld [vmem:[#allocation2] sm:$0xc]
    %v2732 = vld [vmem:[#allocation2 + $0x10] sm:$0xc]
    %v2739 = vrot.slane %v2731, 6
    %v2740 = vrot.slane %v2739, 4
    %v2741 = vrot.slane %v2666, 6
    %v2742 = vsel %vm158, %v2740, %v2741
    %v2743 = vrot.slane %v2741, 4
    %v2744 = vrot.slane %v2667, 6
    %v2745 = vsel %vm158, %v2743, %v2744
    %v2746 = vrot.slane %v2732, 6
    %v2747 = vrot.slane %v2746, 4
    %v2748 = vrot.slane %v2669, 6
    %v2749 = vsel %vm158, %v2747, %v2748
    %v2750 = vrot.slane %v2748, 4
    %v2751 = vrot.slane %v2670, 6
    %v2752 = vsel %vm158, %v2750, %v2751
    %s2753 = scalar_lea.vmem %s7, 16
    %v2754 = vld [vmem:[%s2753] sm:$0xf]
    %v2755 = vld [vmem:[%s2753 + $0x4] sm:$0xf]
    %v2756 = vld [vmem:[%s2753 + $0x8] sm:$0xf]
    %v2757 = vld [vmem:[%s2753 + $0xc] sm:$0xf]
    %v2758 = vunpack.c.l.b16 %v2742
    %v2759 = vunpack.c.l.b16 %v2745
    %v2760 = vunpack.c.l.b16 %v2749
    %v2761 = vunpack.c.l.b16 %v2752
    %v2762 = vpack.c.b16 %v2759, %v2758
    %v2763 = vpack.c.b16 %v2761, %v2760
    %v2768 = vunpack.c.l.b16 %v2754
    %v2769 = vunpack.c.l.b16 %v2755
    %v2770 = vunpack.c.l.b16 %v2756
    %v2771 = vunpack.c.l.b16 %v2757
    %v2772 = vpack.c.b16 %v2769, %v2768
    %v2773 = vpack.c.b16 %v2771, %v2770
    %vm2776 = vcmask 261120
    %v2778 = vsel %vm2776, %v2762, 0
    %v2781 = vsel %vm2776, %v2763, 0
    %2783 = vmatpush.bf16.msra.mxu0 0
    %2784 = vmatpush.bf16.msra.mxu0 0
    %2785 = vmatpush.bf16.msra.mxu0 0
    %2786 = vmatpush.bf16.msra.mxu0 0
    %2787 = vmatpush.bf16.msra.mxu0 0
    %2788 = vmatpush.bf16.msra.mxu0 0
    %2789 = vmatpush.bf16.msra.mxu0 %v2773
    %2790 = vmatpush.bf16.msra.mxu0 %v2772
    %2791 = vmatmul.bf16.gmra.mxu0 %v2778
    %v2792 = vpop.f32.mrf.mxu0
    %v2793 = vadd.f32 0.0, %v2792
    %v2794 = vpop.f32.mrf.mxu0
    %v2795 = vadd.f32 0.0, %v2794
    %2796 = vmatmul.bf16.gmra.mxu0 %v2781
    %v2797 = vpop.f32.mrf.mxu0
    %v2798 = vadd.f32 0.0, %v2797
    %v2799 = vpop.f32.mrf.mxu0
    %v2800 = vadd.f32 0.0, %v2799
    %2801 = vdwg.mxu0
    %v2802 = vunpack.c.l.b16 %v2688
    %v2803 = vunpack.c.l.b16 %v2698
    %v2804 = vunpack.c.l.b16 %v2716
    %v2805 = vunpack.c.l.b16 %v2726
    %v2806 = vpack.c.b16 %v2803, %v2802
    %v2807 = vpack.c.b16 %v2805, %v2804
    %v2812 = vunpack.c.l.b16 %v2727
    %v2813 = vunpack.c.l.b16 %v2728
    %v2814 = vunpack.c.l.b16 %v2729
    %v2815 = vunpack.c.l.b16 %v2730
    %v2816 = vpack.c.b16 %v2813, %v2812
    %v2817 = vpack.c.b16 %v2815, %v2814
    %v2821 = vsel %vm2776, %v2806, 0
    %v2824 = vsel %vm2776, %v2807, 0
    %2826 = vmatpush.bf16.msra.mxu0 0
    %2827 = vmatpush.bf16.msra.mxu0 0
    %2828 = vmatpush.bf16.msra.mxu0 0
    %2829 = vmatpush.bf16.msra.mxu0 0
    %2830 = vmatpush.bf16.msra.mxu0 0
    %2831 = vmatpush.bf16.msra.mxu0 0
    %2832 = vmatpush.bf16.msra.mxu0 %v2817
    %2833 = vmatpush.bf16.msra.mxu0 %v2816
    %2834 = vmatmul.bf16.gmra.mxu0 %v2821
    %v2835 = vpop.f32.mrf.mxu0
    %v2836 = vadd.f32 %v2793, %v2835
    %v2837 = vpop.f32.mrf.mxu0
    %v2838 = vadd.f32 %v2795, %v2837
    %2839 = vmatmul.bf16.gmra.mxu0 %v2824
    %v2840 = vpop.f32.mrf.mxu0
    %v2841 = vadd.f32 %v2798, %v2840
    %v2842 = vpop.f32.mrf.mxu0
    %v2843 = vadd.f32 %v2800, %v2842
    %2844 = vdwg.mxu0
    %v2845 = vld [vmem:[#allocation2 + $0x8] sm:$0x7]
    %v2846 = vld [vmem:[#allocation2 + $0x18] sm:$0x7]
    %v2848 = vshrl.u32 %v2731, 16
    %v2850 = vrot.slane %v2848, 6
    %v2851 = vshll.u32 %v2731, 16
    %v2853 = vrot.slane %v2851, 7
    %v2854 = vor.u32 %v2850, %v2853
    %v2855 = vrot.slane %v2854, 4
    %v2856 = vrot.slane %v2681, 6
    %v2857 = vrot.slane %v2684, 7
    %v2858 = vor.u32 %v2856, %v2857
    %v2859 = vsel %vm249, %v2855, %v2858
    %v2860 = vrot.slane %v2858, 4
    %v2862 = vshrl.u32 %v2845, 16
    %v2864 = vrot.slane %v2862, 6
    %v2865 = vshll.u32 %v2845, 16
    %v2867 = vrot.slane %v2865, 7
    %v2868 = vor.u32 %v2864, %v2867
    %v2869 = vsel %vm249, %v2860, %v2868
    %v2871 = vshrl.u32 %v2732, 16
    %v2873 = vrot.slane %v2871, 6
    %v2874 = vshll.u32 %v2732, 16
    %v2876 = vrot.slane %v2874, 7
    %v2877 = vor.u32 %v2873, %v2876
    %v2878 = vrot.slane %v2877, 4
    %v2879 = vrot.slane %v2709, 6
    %v2880 = vrot.slane %v2712, 7
    %v2881 = vor.u32 %v2879, %v2880
    %v2882 = vsel %vm249, %v2878, %v2881
    %v2883 = vrot.slane %v2881, 4
    %v2885 = vshrl.u32 %v2846, 16
    %v2887 = vrot.slane %v2885, 6
    %v2888 = vshll.u32 %v2846, 16
    %v2890 = vrot.slane %v2888, 7
    %v2891 = vor.u32 %v2887, %v2890
    %v2892 = vsel %vm249, %v2883, %v2891
    %s2893 = scalar_lea.vmem %s7, 32
    %v2894 = vld [vmem:[%s2893] sm:$0xf]
    %v2895 = vld [vmem:[%s2893 + $0x4] sm:$0xf]
    %v2896 = vld [vmem:[%s2893 + $0x8] sm:$0xf]
    %v2897 = vld [vmem:[%s2893 + $0xc] sm:$0xf]
    %v2898 = vunpack.c.l.b16 %v2859
    %v2899 = vunpack.c.l.b16 %v2869
    %v2900 = vunpack.c.l.b16 %v2882
    %v2901 = vunpack.c.l.b16 %v2892
    %v2902 = vpack.c.b16 %v2899, %v2898
    %v2903 = vpack.c.b16 %v2901, %v2900
    %v2908 = vunpack.c.l.b16 %v2894
    %v2909 = vunpack.c.l.b16 %v2895
    %v2910 = vunpack.c.l.b16 %v2896
    %v2911 = vunpack.c.l.b16 %v2897
    %v2912 = vpack.c.b16 %v2909, %v2908
    %v2913 = vpack.c.b16 %v2911, %v2910
    %v2917 = vsel %vm2776, %v2902, 0
    %v2920 = vsel %vm2776, %v2903, 0
    %2922 = vmatpush.bf16.msra.mxu0 0
    %2923 = vmatpush.bf16.msra.mxu0 0
    %2924 = vmatpush.bf16.msra.mxu0 0
    %2925 = vmatpush.bf16.msra.mxu0 0
    %2926 = vmatpush.bf16.msra.mxu0 0
    %2927 = vmatpush.bf16.msra.mxu0 0
    %2928 = vmatpush.bf16.msra.mxu0 %v2913
    %2929 = vmatpush.bf16.msra.mxu0 %v2912
    %2930 = vmatmul.bf16.gmra.mxu0 %v2917
    %v2931 = vpop.f32.mrf.mxu0
    %v2932 = vadd.f32 0.0, %v2931
    %v2933 = vpop.f32.mrf.mxu0
    %v2934 = vadd.f32 0.0, %v2933
    %2935 = vmatmul.bf16.gmra.mxu0 %v2920
    %v2936 = vpop.f32.mrf.mxu0
    %v2937 = vadd.f32 0.0, %v2936
    %v2938 = vpop.f32.mrf.mxu0
    %v2939 = vadd.f32 0.0, %v2938
    %2940 = vdwg.mxu0
    %v2941 = vadd.f32 %v2836, %v2932
    %v2942 = vadd.f32 %v2838, %v2934
    %v2943 = vadd.f32 %v2841, %v2937
    %v2944 = vadd.f32 %v2843, %v2939
    %v2945 = vld [vmem:[#allocation2] sm:$0x8]
    %v2946 = vld [vmem:[#allocation2 + $0x10] sm:$0x8]
    %v2951 = vrot.slane %v2945, 7
    %v2952 = vrot.slane %v2951, 4
    %v2953 = vrot.slane %v2666, 7
    %v2954 = vsel %vm344, %v2952, %v2953
    %v2955 = vrot.slane %v2953, 4
    %v2956 = vrot.slane %v2845, 7
    %v2957 = vsel %vm344, %v2955, %v2956
    %v2958 = vrot.slane %v2946, 7
    %v2959 = vrot.slane %v2958, 4
    %v2960 = vrot.slane %v2669, 7
    %v2961 = vsel %vm344, %v2959, %v2960
    %v2962 = vrot.slane %v2960, 4
    %v2963 = vrot.slane %v2846, 7
    %v2964 = vsel %vm344, %v2962, %v2963
    %s2965 = scalar_lea.vmem %s7, 48
    %v2966 = vld [vmem:[%s2965] sm:$0xf]
    %v2967 = vld [vmem:[%s2965 + $0x4] sm:$0xf]
    %v2968 = vld [vmem:[%s2965 + $0x8] sm:$0xf]
    %v2969 = vld [vmem:[%s2965 + $0xc] sm:$0xf]
    %v2970 = vunpack.c.l.b16 %v2954
    %v2971 = vunpack.c.l.b16 %v2957
    %v2972 = vunpack.c.l.b16 %v2961
    %v2973 = vunpack.c.l.b16 %v2964
    %v2974 = vpack.c.b16 %v2971, %v2970
    %v2975 = vpack.c.b16 %v2973, %v2972
    %v2980 = vunpack.c.l.b16 %v2966
    %v2981 = vunpack.c.l.b16 %v2967
    %v2982 = vunpack.c.l.b16 %v2968
    %v2983 = vunpack.c.l.b16 %v2969
    %v2984 = vpack.c.b16 %v2981, %v2980
    %v2985 = vpack.c.b16 %v2983, %v2982
    %v2989 = vsel %vm2776, %v2974, 0
    %v2992 = vsel %vm2776, %v2975, 0
    %2994 = vmatpush.bf16.msra.mxu0 0
    %2995 = vmatpush.bf16.msra.mxu0 0
    %2996 = vmatpush.bf16.msra.mxu0 0
    %2997 = vmatpush.bf16.msra.mxu0 0
    %2998 = vmatpush.bf16.msra.mxu0 0
    %2999 = vmatpush.bf16.msra.mxu0 0
    %3000 = vmatpush.bf16.msra.mxu0 %v2985
    %3001 = vmatpush.bf16.msra.mxu0 %v2984
    %3002 = vmatmul.bf16.gmra.mxu0 %v2989
    %v3003 = vpop.f32.mrf.mxu0
    %v3004 = vadd.f32 0.0, %v3003
    %v3005 = vpop.f32.mrf.mxu0
    %v3006 = vadd.f32 0.0, %v3005
    %3007 = vmatmul.bf16.gmra.mxu0 %v2992
    %v3008 = vpop.f32.mrf.mxu0
    %v3009 = vadd.f32 0.0, %v3008
    %v3010 = vpop.f32.mrf.mxu0
    %v3011 = vadd.f32 0.0, %v3010
    %3012 = vdwg.mxu0
    %v3013 = vadd.f32 %v2941, %v3004
    %v3014 = vadd.f32 %v2942, %v3006
    %v3015 = vadd.f32 %v2943, %v3009
    %v3016 = vadd.f32 %v2944, %v3011
    %v3017 = vld [vmem:[#allocation2 + $0x8] sm:$0xf]
    %v3018 = vld [vmem:[#allocation2 + $0x18] sm:$0xf]
    %v3020 = vshrl.u32 %v2945, 16
    %v3022 = vrot.slane %v3020, 7
    %v3023 = vrot.slane %v3022, 4
    %v3024 = vrot.slane %v2681, 7
    %v3025 = vor.u32 %v3024, %v2684
    %v3026 = vsel %vm403, %v3023, %v3025
    %v3027 = vrot.slane %v3024, 4
    %v3029 = vshrl.u32 %v3017, 16
    %v3031 = vrot.slane %v3029, 7
    %v3032 = vshll.u32 %v3017, 16
    %v3034 = vor.u32 %v3031, %v3032
    %v3035 = vsel %vm403, %v3027, %v3034
    %v3037 = vshrl.u32 %v2946, 16
    %v3039 = vrot.slane %v3037, 7
    %v3040 = vrot.slane %v3039, 4
    %v3041 = vrot.slane %v2709, 7
    %v3042 = vor.u32 %v3041, %v2712
    %v3043 = vsel %vm403, %v3040, %v3042
    %v3044 = vrot.slane %v3041, 4
    %v3046 = vshrl.u32 %v3018, 16
    %v3048 = vrot.slane %v3046, 7
    %v3049 = vshll.u32 %v3018, 16
    %v3051 = vor.u32 %v3048, %v3049
    %v3052 = vsel %vm403, %v3044, %v3051
    %s3053 = scalar_lea.vmem %s7, 64
    %v3054 = vld [vmem:[%s3053] sm:$0xf]
    %v3055 = vld [vmem:[%s3053 + $0x4] sm:$0xf]
    %v3056 = vld [vmem:[%s3053 + $0x8] sm:$0xf]
    %v3057 = vld [vmem:[%s3053 + $0xc] sm:$0xf]
    %v3058 = vunpack.c.l.b16 %v3026
    %v3059 = vunpack.c.l.b16 %v3035
    %v3060 = vunpack.c.l.b16 %v3043
    %v3061 = vunpack.c.l.b16 %v3052
    %v3062 = vpack.c.b16 %v3059, %v3058
    %v3063 = vpack.c.b16 %v3061, %v3060
    %v3068 = vunpack.c.l.b16 %v3054
    %v3069 = vunpack.c.l.b16 %v3055
    %v3070 = vunpack.c.l.b16 %v3056
    %v3071 = vunpack.c.l.b16 %v3057
    %v3072 = vpack.c.b16 %v3069, %v3068
    %v3073 = vpack.c.b16 %v3071, %v3070
    %v3077 = vsel %vm2776, %v3062, 0
    %v3080 = vsel %vm2776, %v3063, 0
    %3082 = vmatpush.bf16.msra.mxu0 0
    %3083 = vmatpush.bf16.msra.mxu0 0
    %3084 = vmatpush.bf16.msra.mxu0 0
    %3085 = vmatpush.bf16.msra.mxu0 0
    %3086 = vmatpush.bf16.msra.mxu0 0
    %3087 = vmatpush.bf16.msra.mxu0 0
    %3088 = vmatpush.bf16.msra.mxu0 %v3073
    %3089 = vmatpush.bf16.msra.mxu0 %v3072
    %3090 = vmatmul.bf16.gmra.mxu0 %v3077
    %v3091 = vpop.f32.mrf.mxu0
    %v3092 = vadd.f32 0.0, %v3091
    %v3093 = vpop.f32.mrf.mxu0
    %v3094 = vadd.f32 0.0, %v3093
    %3095 = vmatmul.bf16.gmra.mxu0 %v3080
    %v3096 = vpop.f32.mrf.mxu0
    %v3097 = vadd.f32 0.0, %v3096
    %v3098 = vpop.f32.mrf.mxu0
    %v3099 = vadd.f32 0.0, %v3098
    %3100 = vdwg.mxu0
    %v3101 = vadd.f32 %v3013, %v3092
    %v3102 = vadd.f32 %v3014, %v3094
    %v3103 = vadd.f32 %v3015, %v3097
    %v3104 = vadd.f32 %v3016, %v3099
    %s3105 = scalar_lea.vmem %s7, 80
    %v3106 = vld [vmem:[%s3105] sm:$0xf]
    %v3107 = vld [vmem:[%s3105 + $0x4] sm:$0xf]
    %v3108 = vld [vmem:[%s3105 + $0x8] sm:$0xf]
    %v3109 = vld [vmem:[%s3105 + $0xc] sm:$0xf]
    %v3112 = vunpack.c.l.b16 %v2666
    %v3113 = vunpack.c.l.b16 %v3017
    %v3114 = vunpack.c.l.b16 %v2669
    %v3115 = vunpack.c.l.b16 %v3018
    %v3116 = vpack.c.b16 %v3113, %v3112
    %v3117 = vpack.c.b16 %v3115, %v3114
    %v3122 = vunpack.c.l.b16 %v3106
    %v3123 = vunpack.c.l.b16 %v3107
    %v3124 = vunpack.c.l.b16 %v3108
    %v3125 = vunpack.c.l.b16 %v3109
    %v3126 = vpack.c.b16 %v3123, %v3122
    %v3127 = vpack.c.b16 %v3125, %v3124
    %v3131 = vsel %vm2776, %v3116, 0
    %v3134 = vsel %vm2776, %v3117, 0
    %3136 = vmatpush.bf16.msra.mxu0 0
    %3137 = vmatpush.bf16.msra.mxu0 0
    %3138 = vmatpush.bf16.msra.mxu0 0
    %3139 = vmatpush.bf16.msra.mxu0 0
    %3140 = vmatpush.bf16.msra.mxu0 0
    %3141 = vmatpush.bf16.msra.mxu0 0
    %3142 = vmatpush.bf16.msra.mxu0 %v3127
    %3143 = vmatpush.bf16.msra.mxu0 %v3126
    %3144 = vmatmul.bf16.gmra.mxu0 %v3131
    %v3145 = vpop.f32.mrf.mxu0
    %v3146 = vadd.f32 0.0, %v3145
    %v3147 = vpop.f32.mrf.mxu0
    %v3148 = vadd.f32 0.0, %v3147
    %3149 = vmatmul.bf16.gmra.mxu0 %v3134
    %v3150 = vpop.f32.mrf.mxu0
    %v3151 = vadd.f32 0.0, %v3150
    %v3152 = vpop.f32.mrf.mxu0
    %v3153 = vadd.f32 0.0, %v3152
    %3154 = vdwg.mxu0
    %v3155 = vadd.f32 %v3101, %v3146
    %v3156 = vadd.f32 %v3102, %v3148
    %v3157 = vadd.f32 %v3103, %v3151
    %v3158 = vadd.f32 %v3104, %v3153
    %v3159 = vld [vmem:[#allocation2 + $0x4] sm:$0xf]
    %v3160 = vld [vmem:[#allocation2 + $0x8] sm:$0xf]
    %v3161 = vld [vmem:[#allocation2 + $0xc] sm:$0x1]
    %v3162 = vld [vmem:[#allocation2 + $0x14] sm:$0xf]
    %v3163 = vld [vmem:[#allocation2 + $0x18] sm:$0xf]
    %v3164 = vld [vmem:[#allocation2 + $0x1c] sm:$0x1]
    %v3166 = vshrl.u32 %v3159, 16
    %v3168 = vrot.slane %v3166, 4
    %v3169 = vshll.u32 %v3159, 16
    %v3171 = vrot.slane %v3169, 5
    %v3172 = vor.u32 %v3168, %v3171
    %v3173 = vrot.slane %v3172, 4
    %v3175 = vshll.u32 %v3160, 16
    %v3177 = vrot.slane %v3175, 5
    %v3178 = vsel %vm528, %v3173, %v3177
    %v3179 = vshrl.u32 %v3160, 16
    %v3181 = vrot.slane %v3179, 4
    %v3182 = vor.u32 %v3181, %v3177
    %v3183 = vrot.slane %v3182, 4
    %v3185 = vshll.u32 %v3161, 16
    %v3187 = vrot.slane %v3185, 5
    %v3188 = vsel %vm528, %v3183, %v3187
    %v3190 = vshrl.u32 %v3162, 16
    %v3192 = vrot.slane %v3190, 4
    %v3193 = vshll.u32 %v3162, 16
    %v3195 = vrot.slane %v3193, 5
    %v3196 = vor.u32 %v3192, %v3195
    %v3197 = vrot.slane %v3196, 4
    %v3199 = vshll.u32 %v3163, 16
    %v3201 = vrot.slane %v3199, 5
    %v3202 = vsel %vm528, %v3197, %v3201
    %v3203 = vshrl.u32 %v3163, 16
    %v3205 = vrot.slane %v3203, 4
    %v3206 = vor.u32 %v3205, %v3201
    %v3207 = vrot.slane %v3206, 4
    %v3209 = vshll.u32 %v3164, 16
    %v3211 = vrot.slane %v3209, 5
    %v3212 = vsel %vm528, %v3207, %v3211
    %s3213 = scalar_lea.vmem %s7, 96
    %v3214 = vld [vmem:[%s3213] sm:$0xf]
    %v3215 = vld [vmem:[%s3213 + $0x4] sm:$0xf]
    %v3216 = vld [vmem:[%s3213 + $0x8] sm:$0xf]
    %v3217 = vld [vmem:[%s3213 + $0xc] sm:$0xf]
    %v3218 = vunpack.c.l.b16 %v3178
    %v3219 = vunpack.c.l.b16 %v3188
    %v3220 = vunpack.c.l.b16 %v3202
    %v3221 = vunpack.c.l.b16 %v3212
    %v3222 = vpack.c.b16 %v3219, %v3218
    %v3223 = vpack.c.b16 %v3221, %v3220
    %v3228 = vunpack.c.l.b16 %v3214
    %v3229 = vunpack.c.l.b16 %v3215
    %v3230 = vunpack.c.l.b16 %v3216
    %v3231 = vunpack.c.l.b16 %v3217
    %v3232 = vpack.c.b16 %v3229, %v3228
    %v3233 = vpack.c.b16 %v3231, %v3230
    %v3237 = vsel %vm2776, %v3222, 0
    %v3240 = vsel %vm2776, %v3223, 0
    %3242 = vmatpush.bf16.msra.mxu0 0
    %3243 = vmatpush.bf16.msra.mxu0 0
    %3244 = vmatpush.bf16.msra.mxu0 0
    %3245 = vmatpush.bf16.msra.mxu0 0
    %3246 = vmatpush.bf16.msra.mxu0 0
    %3247 = vmatpush.bf16.msra.mxu0 0
    %3248 = vmatpush.bf16.msra.mxu0 %v3233
    %3249 = vmatpush.bf16.msra.mxu0 %v3232
    %3250 = vmatmul.bf16.gmra.mxu0 %v3237
    %v3251 = vpop.f32.mrf.mxu0
    %v3252 = vadd.f32 0.0, %v3251
    %v3253 = vpop.f32.mrf.mxu0
    %v3254 = vadd.f32 0.0, %v3253
    %3255 = vmatmul.bf16.gmra.mxu0 %v3240
    %v3256 = vpop.f32.mrf.mxu0
    %v3257 = vadd.f32 0.0, %v3256
    %v3258 = vpop.f32.mrf.mxu0
    %v3259 = vadd.f32 0.0, %v3258
    %3260 = vdwg.mxu0
    %v3261 = vadd.f32 %v3155, %v3252
    %v3262 = vadd.f32 %v3156, %v3254
    %v3263 = vadd.f32 %v3157, %v3257
    %v3264 = vadd.f32 %v3158, %v3259
    %v3265 = vld [vmem:[#allocation2 + $0x4] sm:$0xe]
    %v3266 = vld [vmem:[#allocation2 + $0x14] sm:$0xe]
    %v3273 = vrot.slane %v3265, 5
    %v3274 = vrot.slane %v3273, 4
    %v3275 = vrot.slane %v3160, 5
    %v3276 = vsel %vm627, %v3274, %v3275
    %v3277 = vrot.slane %v3275, 4
    %v3278 = vrot.slane %v3161, 5
    %v3279 = vsel %vm627, %v3277, %v3278
    %v3280 = vrot.slane %v3266, 5
    %v3281 = vrot.slane %v3280, 4
    %v3282 = vrot.slane %v3163, 5
    %v3283 = vsel %vm627, %v3281, %v3282
    %v3284 = vrot.slane %v3282, 4
    %v3285 = vrot.slane %v3164, 5
    %v3286 = vsel %vm627, %v3284, %v3285
    %s3287 = scalar_lea.vmem %s7, 112
    %v3288 = vld [vmem:[%s3287] sm:$0xf]
    %v3289 = vld [vmem:[%s3287 + $0x4] sm:$0xf]
    %v3290 = vld [vmem:[%s3287 + $0x8] sm:$0xf]
    %v3291 = vld [vmem:[%s3287 + $0xc] sm:$0xf]
    %v3292 = vunpack.c.l.b16 %v3276
    %v3293 = vunpack.c.l.b16 %v3279
    %v3294 = vunpack.c.l.b16 %v3283
    %v3295 = vunpack.c.l.b16 %v3286
    %v3296 = vpack.c.b16 %v3293, %v3292
    %v3297 = vpack.c.b16 %v3295, %v3294
    %v3302 = vunpack.c.l.b16 %v3288
    %v3303 = vunpack.c.l.b16 %v3289
    %v3304 = vunpack.c.l.b16 %v3290
    %v3305 = vunpack.c.l.b16 %v3291
    %v3306 = vpack.c.b16 %v3303, %v3302
    %v3307 = vpack.c.b16 %v3305, %v3304
    %v3311 = vsel %vm2776, %v3296, 0
    %v3314 = vsel %vm2776, %v3297, 0
    %3316 = vmatpush.bf16.msra.mxu0 0
    %3317 = vmatpush.bf16.msra.mxu0 0
    %3318 = vmatpush.bf16.msra.mxu0 0
    %3319 = vmatpush.bf16.msra.mxu0 0
    %3320 = vmatpush.bf16.msra.mxu0 0
    %3321 = vmatpush.bf16.msra.mxu0 0
    %3322 = vmatpush.bf16.msra.mxu0 %v3307
    %3323 = vmatpush.bf16.msra.mxu0 %v3306
    %3324 = vmatmul.bf16.gmra.mxu0 %v3311
    %v3325 = vpop.f32.mrf.mxu0
    %v3326 = vadd.f32 0.0, %v3325
    %v3327 = vpop.f32.mrf.mxu0
    %v3328 = vadd.f32 0.0, %v3327
    %3329 = vmatmul.bf16.gmra.mxu0 %v3314
    %v3330 = vpop.f32.mrf.mxu0
    %v3331 = vadd.f32 0.0, %v3330
    %v3332 = vpop.f32.mrf.mxu0
    %v3333 = vadd.f32 0.0, %v3332
    %3334 = vdwg.mxu0
    %v3335 = vadd.f32 %v3261, %v3326
    %v3336 = vadd.f32 %v3262, %v3328
    %v3337 = vadd.f32 %v3263, %v3331
    %v3338 = vadd.f32 %v3264, %v3333
    %v3339 = vld [vmem:[#allocation2 + $0xc] sm:$0x3]
    %v3340 = vld [vmem:[#allocation2 + $0x1c] sm:$0x3]
    %v3342 = vshrl.u32 %v3265, 16
    %v3344 = vrot.slane %v3342, 5
    %v3345 = vshll.u32 %v3265, 16
    %v3347 = vrot.slane %v3345, 6
    %v3348 = vor.u32 %v3344, %v3347
    %v3349 = vrot.slane %v3348, 4
    %v3350 = vrot.slane %v3179, 5
    %v3351 = vrot.slane %v3175, 6
    %v3352 = vor.u32 %v3350, %v3351
    %v3353 = vsel %vm90, %v3349, %v3352
    %v3354 = vrot.slane %v3352, 4
    %v3356 = vshrl.u32 %v3339, 16
    %v3358 = vrot.slane %v3356, 5
    %v3359 = vshll.u32 %v3339, 16
    %v3361 = vrot.slane %v3359, 6
    %v3362 = vor.u32 %v3358, %v3361
    %v3363 = vsel %vm90, %v3354, %v3362
    %v3365 = vshrl.u32 %v3266, 16
    %v3367 = vrot.slane %v3365, 5
    %v3368 = vshll.u32 %v3266, 16
    %v3370 = vrot.slane %v3368, 6
    %v3371 = vor.u32 %v3367, %v3370
    %v3372 = vrot.slane %v3371, 4
    %v3373 = vrot.slane %v3203, 5
    %v3374 = vrot.slane %v3199, 6
    %v3375 = vor.u32 %v3373, %v3374
    %v3376 = vsel %vm90, %v3372, %v3375
    %v3377 = vrot.slane %v3375, 4
    %v3379 = vshrl.u32 %v3340, 16
    %v3381 = vrot.slane %v3379, 5
    %v3382 = vshll.u32 %v3340, 16
    %v3384 = vrot.slane %v3382, 6
    %v3385 = vor.u32 %v3381, %v3384
    %v3386 = vsel %vm90, %v3377, %v3385
    %s3387 = scalar_lea.vmem %s7, 128
    %v3388 = vld [vmem:[%s3387] sm:$0xf]
    %v3389 = vld [vmem:[%s3387 + $0x4] sm:$0xf]
    %v3390 = vld [vmem:[%s3387 + $0x8] sm:$0xf]
    %v3391 = vld [vmem:[%s3387 + $0xc] sm:$0xf]
    %v3392 = vunpack.c.l.b16 %v3353
    %v3393 = vunpack.c.l.b16 %v3363
    %v3394 = vunpack.c.l.b16 %v3376
    %v3395 = vunpack.c.l.b16 %v3386
    %v3396 = vpack.c.b16 %v3393, %v3392
    %v3397 = vpack.c.b16 %v3395, %v3394
    %v3402 = vunpack.c.l.b16 %v3388
    %v3403 = vunpack.c.l.b16 %v3389
    %v3404 = vunpack.c.l.b16 %v3390
    %v3405 = vunpack.c.l.b16 %v3391
    %v3406 = vpack.c.b16 %v3403, %v3402
    %v3407 = vpack.c.b16 %v3405, %v3404
    %v3411 = vsel %vm2776, %v3396, 0
    %v3414 = vsel %vm2776, %v3397, 0
    %3416 = vmatpush.bf16.msra.mxu0 0
    %3417 = vmatpush.bf16.msra.mxu0 0
    %3418 = vmatpush.bf16.msra.mxu0 0
    %3419 = vmatpush.bf16.msra.mxu0 0
    %3420 = vmatpush.bf16.msra.mxu0 0
    %3421 = vmatpush.bf16.msra.mxu0 0
    %3422 = vmatpush.bf16.msra.mxu0 %v3407
    %3423 = vmatpush.bf16.msra.mxu0 %v3406
    %3424 = vmatmul.bf16.gmra.mxu0 %v3411
    %v3425 = vpop.f32.mrf.mxu0
    %v3426 = vadd.f32 0.0, %v3425
    %v3427 = vpop.f32.mrf.mxu0
    %v3428 = vadd.f32 0.0, %v3427
    %3429 = vmatmul.bf16.gmra.mxu0 %v3414
    %v3430 = vpop.f32.mrf.mxu0
    %v3431 = vadd.f32 0.0, %v3430
    %v3432 = vpop.f32.mrf.mxu0
    %v3433 = vadd.f32 0.0, %v3432
    %3434 = vdwg.mxu0
    %v3435 = vadd.f32 %v3335, %v3426
    %v3436 = vadd.f32 %v3336, %v3428
    %v3437 = vadd.f32 %v3337, %v3431
    %v3438 = vadd.f32 %v3338, %v3433
    %v3439 = vld [vmem:[#allocation2 + $0x4] sm:$0xc]
    %v3440 = vld [vmem:[#allocation2 + $0x14] sm:$0xc]
    %v3445 = vrot.slane %v3439, 6
    %v3446 = vrot.slane %v3445, 4
    %v3447 = vrot.slane %v3160, 6
    %v3448 = vsel %vm158, %v3446, %v3447
    %v3449 = vrot.slane %v3447, 4
    %v3450 = vrot.slane %v3339, 6
    %v3451 = vsel %vm158, %v3449, %v3450
    %v3452 = vrot.slane %v3440, 6
    %v3453 = vrot.slane %v3452, 4
    %v3454 = vrot.slane %v3163, 6
    %v3455 = vsel %vm158, %v3453, %v3454
    %v3456 = vrot.slane %v3454, 4
    %v3457 = vrot.slane %v3340, 6
    %v3458 = vsel %vm158, %v3456, %v3457
    %s3459 = scalar_lea.vmem %s7, 144
    %v3460 = vld [vmem:[%s3459] sm:$0xf]
    %v3461 = vld [vmem:[%s3459 + $0x4] sm:$0xf]
    %v3462 = vld [vmem:[%s3459 + $0x8] sm:$0xf]
    %v3463 = vld [vmem:[%s3459 + $0xc] sm:$0xf]
    %v3464 = vunpack.c.l.b16 %v3448
    %v3465 = vunpack.c.l.b16 %v3451
    %v3466 = vunpack.c.l.b16 %v3455
    %v3467 = vunpack.c.l.b16 %v3458
    %v3468 = vpack.c.b16 %v3465, %v3464
    %v3469 = vpack.c.b16 %v3467, %v3466
    %v3474 = vunpack.c.l.b16 %v3460
    %v3475 = vunpack.c.l.b16 %v3461
    %v3476 = vunpack.c.l.b16 %v3462
    %v3477 = vunpack.c.l.b16 %v3463
    %v3478 = vpack.c.b16 %v3475, %v3474
    %v3479 = vpack.c.b16 %v3477, %v3476
    %v3483 = vsel %vm2776, %v3468, 0
    %v3486 = vsel %vm2776, %v3469, 0
    %3488 = vmatpush.bf16.msra.mxu0 0
    %3489 = vmatpush.bf16.msra.mxu0 0
    %3490 = vmatpush.bf16.msra.mxu0 0
    %3491 = vmatpush.bf16.msra.mxu0 0
    %3492 = vmatpush.bf16.msra.mxu0 0
    %3493 = vmatpush.bf16.msra.mxu0 0
    %3494 = vmatpush.bf16.msra.mxu0 %v3479
    %3495 = vmatpush.bf16.msra.mxu0 %v3478
    %3496 = vmatmul.bf16.gmra.mxu0 %v3483
    %v3497 = vpop.f32.mrf.mxu0
    %v3498 = vadd.f32 0.0, %v3497
    %v3499 = vpop.f32.mrf.mxu0
    %v3500 = vadd.f32 0.0, %v3499
    %3501 = vmatmul.bf16.gmra.mxu0 %v3486
    %v3502 = vpop.f32.mrf.mxu0
    %v3503 = vadd.f32 0.0, %v3502
    %v3504 = vpop.f32.mrf.mxu0
    %v3505 = vadd.f32 0.0, %v3504
    %3506 = vdwg.mxu0
    %v3507 = vadd.f32 %v3435, %v3498
    %v3508 = vadd.f32 %v3436, %v3500
    %v3509 = vadd.f32 %v3437, %v3503
    %v3510 = vadd.f32 %v3438, %v3505
    %v3511 = vld [vmem:[#allocation2 + $0xc] sm:$0x7]
    %v3512 = vld [vmem:[#allocation2 + $0x1c] sm:$0x7]
    %v3514 = vshrl.u32 %v3439, 16
    %v3516 = vrot.slane %v3514, 6
    %v3517 = vshll.u32 %v3439, 16
    %v3519 = vrot.slane %v3517, 7
    %v3520 = vor.u32 %v3516, %v3519
    %v3521 = vrot.slane %v3520, 4
    %v3522 = vrot.slane %v3179, 6
    %v3523 = vrot.slane %v3175, 7
    %v3524 = vor.u32 %v3522, %v3523
    %v3525 = vsel %vm249, %v3521, %v3524
    %v3526 = vrot.slane %v3524, 4
    %v3528 = vshrl.u32 %v3511, 16
    %v3530 = vrot.slane %v3528, 6
    %v3531 = vshll.u32 %v3511, 16
    %v3533 = vrot.slane %v3531, 7
    %v3534 = vor.u32 %v3530, %v3533
    %v3535 = vsel %vm249, %v3526, %v3534
    %v3537 = vshrl.u32 %v3440, 16
    %v3539 = vrot.slane %v3537, 6
    %v3540 = vshll.u32 %v3440, 16
    %v3542 = vrot.slane %v3540, 7
    %v3543 = vor.u32 %v3539, %v3542
    %v3544 = vrot.slane %v3543, 4
    %v3545 = vrot.slane %v3203, 6
    %v3546 = vrot.slane %v3199, 7
    %v3547 = vor.u32 %v3545, %v3546
    %v3548 = vsel %vm249, %v3544, %v3547
    %v3549 = vrot.slane %v3547, 4
    %v3551 = vshrl.u32 %v3512, 16
    %v3553 = vrot.slane %v3551, 6
    %v3554 = vshll.u32 %v3512, 16
    %v3556 = vrot.slane %v3554, 7
    %v3557 = vor.u32 %v3553, %v3556
    %v3558 = vsel %vm249, %v3549, %v3557
    %s3559 = scalar_lea.vmem %s7, 160
    %v3560 = vld [vmem:[%s3559] sm:$0xf]
    %v3561 = vld [vmem:[%s3559 + $0x4] sm:$0xf]
    %v3562 = vld [vmem:[%s3559 + $0x8] sm:$0xf]
    %v3563 = vld [vmem:[%s3559 + $0xc] sm:$0xf]
    %v3564 = vunpack.c.l.b16 %v3525
    %v3565 = vunpack.c.l.b16 %v3535
    %v3566 = vunpack.c.l.b16 %v3548
    %v3567 = vunpack.c.l.b16 %v3558
    %v3568 = vpack.c.b16 %v3565, %v3564
    %v3569 = vpack.c.b16 %v3567, %v3566
    %v3574 = vunpack.c.l.b16 %v3560
    %v3575 = vunpack.c.l.b16 %v3561
    %v3576 = vunpack.c.l.b16 %v3562
    %v3577 = vunpack.c.l.b16 %v3563
    %v3578 = vpack.c.b16 %v3575, %v3574
    %v3579 = vpack.c.b16 %v3577, %v3576
    %v3583 = vsel %vm2776, %v3568, 0
    %v3586 = vsel %vm2776, %v3569, 0
    %3588 = vmatpush.bf16.msra.mxu0 0
    %3589 = vmatpush.bf16.msra.mxu0 0
    %3590 = vmatpush.bf16.msra.mxu0 0
    %3591 = vmatpush.bf16.msra.mxu0 0
    %3592 = vmatpush.bf16.msra.mxu0 0
    %3593 = vmatpush.bf16.msra.mxu0 0
    %3594 = vmatpush.bf16.msra.mxu0 %v3579
    %3595 = vmatpush.bf16.msra.mxu0 %v3578
    %3596 = vmatmul.bf16.gmra.mxu0 %v3583
    %v3597 = vpop.f32.mrf.mxu0
    %v3598 = vadd.f32 0.0, %v3597
    %v3599 = vpop.f32.mrf.mxu0
    %v3600 = vadd.f32 0.0, %v3599
    %3601 = vmatmul.bf16.gmra.mxu0 %v3586
    %v3602 = vpop.f32.mrf.mxu0
    %v3603 = vadd.f32 0.0, %v3602
    %v3604 = vpop.f32.mrf.mxu0
    %v3605 = vadd.f32 0.0, %v3604
    %3606 = vdwg.mxu0
    %v3607 = vadd.f32 %v3507, %v3598
    %v3608 = vadd.f32 %v3508, %v3600
    %v3609 = vadd.f32 %v3509, %v3603
    %v3610 = vadd.f32 %v3510, %v3605
    %v3611 = vld [vmem:[%s8] sm:$0x1]
    %v3613 = vperm.slane %v3611, 0
    %v3615 = vadd.f32 %v3607, %v3613
    %v3616 = vadd.f32 %v3608, %v3613
    %v3617 = vadd.f32 %v3609, %v3613
    %v3618 = vadd.f32 %v3610, %v3613
    %v3619 = vmul.f32 %v3615, 0.01
    %v3620 = vmul.f32 %v3616, 0.01
    %v3621 = vmul.f32 %v3617, 0.01
    %v3622 = vmul.f32 %v3618, 0.01
    %v3623 = vmax.f32 %v3615, %v3619
    %v3624 = vmax.f32 %v3616, %v3620
    %v3625 = vmax.f32 %v3617, %v3621
    %v3626 = vmax.f32 %v3618, %v3622
    %v3627 = vpack.c.bf16 %v3623, %v3623
    %v3628 = vpack.c.bf16 %v3624, %v3624
    %v3629 = vpack.c.bf16 %v3625, %v3625
    %v3630 = vpack.c.bf16 %v3626, %v3626
    %3631 = vst.msk [vmem:[#allocation2 + $0x4] sm:$0xf] %vm1778, %v3627
    %3632 = vst.msk [vmem:[#allocation2 + $0x8] sm:$0xf] %vm1778, %v3628
    %3633 = vst.msk [vmem:[#allocation2 + $0x14] sm:$0xf] %vm1778, %v3629
    %3634 = vst.msk [vmem:[#allocation2 + $0x18] sm:$0xf] %vm1778, %v3630
    %v3635 = vld [vmem:[#allocation2] sm:$0xe]
    %v3636 = vld [vmem:[#allocation2 + $0x4] sm:$0xf]
    %v3637 = vld [vmem:[#allocation2 + $0x8] sm:$0x3]
    %v3638 = vld [vmem:[#allocation2 + $0x10] sm:$0xe]
    %v3639 = vld [vmem:[#allocation2 + $0x14] sm:$0xf]
    %v3640 = vld [vmem:[#allocation2 + $0x18] sm:$0x3]
    %v3642 = vshrl.u32 %v3635, 16
    %v3644 = vrot.slane %v3642, 5
    %v3645 = vshll.u32 %v3635, 16
    %v3647 = vrot.slane %v3645, 6
    %v3648 = vor.u32 %v3644, %v3647
    %v3649 = vrot.slane %v3648, 4
    %v3651 = vshrl.u32 %v3636, 16
    %v3653 = vrot.slane %v3651, 5
    %v3654 = vshll.u32 %v3636, 16
    %v3656 = vrot.slane %v3654, 6
    %v3657 = vor.u32 %v3653, %v3656
    %v3658 = vsel %vm90, %v3649, %v3657
    %v3659 = vrot.slane %v3657, 4
    %v3661 = vshrl.u32 %v3637, 16
    %v3663 = vrot.slane %v3661, 5
    %v3664 = vshll.u32 %v3637, 16
    %v3666 = vrot.slane %v3664, 6
    %v3667 = vor.u32 %v3663, %v3666
    %v3668 = vsel %vm90, %v3659, %v3667
    %v3670 = vshrl.u32 %v3638, 16
    %v3672 = vrot.slane %v3670, 5
    %v3673 = vshll.u32 %v3638, 16
    %v3675 = vrot.slane %v3673, 6
    %v3676 = vor.u32 %v3672, %v3675
    %v3677 = vrot.slane %v3676, 4
    %v3679 = vshrl.u32 %v3639, 16
    %v3681 = vrot.slane %v3679, 5
    %v3682 = vshll.u32 %v3639, 16
    %v3684 = vrot.slane %v3682, 6
    %v3685 = vor.u32 %v3681, %v3684
    %v3686 = vsel %vm90, %v3677, %v3685
    %v3687 = vrot.slane %v3685, 4
    %v3689 = vshrl.u32 %v3640, 16
    %v3691 = vrot.slane %v3689, 5
    %v3692 = vshll.u32 %v3640, 16
    %v3694 = vrot.slane %v3692, 6
    %v3695 = vor.u32 %v3691, %v3694
    %v3696 = vsel %vm90, %v3687, %v3695
    %v3697 = vld [vmem:[%s9] sm:$0xf]
    %v3698 = vld [vmem:[%s9 + $0x4] sm:$0xf]
    %v3699 = vld [vmem:[#allocation2] sm:$0xc]
    %v3700 = vld [vmem:[#allocation2 + $0x10] sm:$0xc]
    %v3707 = vrot.slane %v3699, 6
    %v3708 = vrot.slane %v3707, 4
    %v3709 = vrot.slane %v3636, 6
    %v3710 = vsel %vm158, %v3708, %v3709
    %v3711 = vrot.slane %v3709, 4
    %v3712 = vrot.slane %v3637, 6
    %v3713 = vsel %vm158, %v3711, %v3712
    %v3714 = vrot.slane %v3700, 6
    %v3715 = vrot.slane %v3714, 4
    %v3716 = vrot.slane %v3639, 6
    %v3717 = vsel %vm158, %v3715, %v3716
    %v3718 = vrot.slane %v3716, 4
    %v3719 = vrot.slane %v3640, 6
    %v3720 = vsel %vm158, %v3718, %v3719
    %s3721 = scalar_lea.vmem %s9, 8
    %v3722 = vld [vmem:[%s3721] sm:$0xf]
    %v3723 = vld [vmem:[%s3721 + $0x4] sm:$0xf]
    %v3724 = vunpack.c.l.b16 %v3710
    %v3725 = vunpack.c.l.b16 %v3713
    %v3726 = vunpack.c.l.b16 %v3717
    %v3727 = vunpack.c.l.b16 %v3720
    %v3728 = vpack.c.b16 %v3725, %v3724
    %v3729 = vpack.c.b16 %v3727, %v3726
    %v3732 = vunpack.c.l.b16 %v3722
    %v3733 = vunpack.c.l.b16 %v3723
    %v3734 = vpack.c.b16 %v3733, %v3732
    %v3737 = vsel %vm1884, %v3728, 0
    %v3740 = vsel %vm1884, %v3729, 0
    %3742 = vmatpush.bf16.msra.mxu0 0
    %3743 = vmatpush.bf16.msra.mxu0 0
    %3744 = vmatpush.bf16.msra.mxu0 0
    %3745 = vmatpush.bf16.msra.mxu0 0
    %3746 = vmatpush.bf16.msra.mxu0 0
    %3747 = vmatpush.bf16.msra.mxu0 0
    %3748 = vmatpush.bf16.msra.mxu0 0
    %3749 = vmatpush.bf16.msra.mxu0 %v3734
    %3750 = vmatmul.bf16.gmra.mxu0 %v3737
    %v3751 = vpop.f32.mrf.mxu0
    %v3752 = vadd.f32 0.0, %v3751
    %v3753 = vpop.f32.mrf.mxu0
    %v3754 = vadd.f32 0.0, %v3753
    %3755 = vmatmul.bf16.gmra.mxu0 %v3740
    %v3756 = vpop.f32.mrf.mxu0
    %v3757 = vadd.f32 0.0, %v3756
    %v3758 = vpop.f32.mrf.mxu0
    %v3759 = vadd.f32 0.0, %v3758
    %3760 = vdwg.mxu0
    %v3761 = vunpack.c.l.b16 %v3658
    %v3762 = vunpack.c.l.b16 %v3668
    %v3763 = vunpack.c.l.b16 %v3686
    %v3764 = vunpack.c.l.b16 %v3696
    %v3765 = vpack.c.b16 %v3762, %v3761
    %v3766 = vpack.c.b16 %v3764, %v3763
    %v3769 = vunpack.c.l.b16 %v3697
    %v3770 = vunpack.c.l.b16 %v3698
    %v3771 = vpack.c.b16 %v3770, %v3769
    %v3774 = vsel %vm1884, %v3765, 0
    %v3777 = vsel %vm1884, %v3766, 0
    %3779 = vmatpush.bf16.msra.mxu0 0
    %3780 = vmatpush.bf16.msra.mxu0 0
    %3781 = vmatpush.bf16.msra.mxu0 0
    %3782 = vmatpush.bf16.msra.mxu0 0
    %3783 = vmatpush.bf16.msra.mxu0 0
    %3784 = vmatpush.bf16.msra.mxu0 0
    %3785 = vmatpush.bf16.msra.mxu0 0
    %3786 = vmatpush.bf16.msra.mxu0 %v3771
    %3787 = vmatmul.bf16.gmra.mxu0 %v3774
    %v3788 = vpop.f32.mrf.mxu0
    %v3789 = vadd.f32 %v3752, %v3788
    %v3790 = vpop.f32.mrf.mxu0
    %v3791 = vadd.f32 %v3754, %v3790
    %3792 = vmatmul.bf16.gmra.mxu0 %v3777
    %v3793 = vpop.f32.mrf.mxu0
    %v3794 = vadd.f32 %v3757, %v3793
    %v3795 = vpop.f32.mrf.mxu0
    %v3796 = vadd.f32 %v3759, %v3795
    %3797 = vdwg.mxu0
    %v3798 = vld [vmem:[#allocation2 + $0x8] sm:$0x7]
    %v3799 = vld [vmem:[#allocation2 + $0x18] sm:$0x7]
    %v3801 = vshrl.u32 %v3699, 16
    %v3803 = vrot.slane %v3801, 6
    %v3804 = vshll.u32 %v3699, 16
    %v3806 = vrot.slane %v3804, 7
    %v3807 = vor.u32 %v3803, %v3806
    %v3808 = vrot.slane %v3807, 4
    %v3809 = vrot.slane %v3651, 6
    %v3810 = vrot.slane %v3654, 7
    %v3811 = vor.u32 %v3809, %v3810
    %v3812 = vsel %vm249, %v3808, %v3811
    %v3813 = vrot.slane %v3811, 4
    %v3815 = vshrl.u32 %v3798, 16
    %v3817 = vrot.slane %v3815, 6
    %v3818 = vshll.u32 %v3798, 16
    %v3820 = vrot.slane %v3818, 7
    %v3821 = vor.u32 %v3817, %v3820
    %v3822 = vsel %vm249, %v3813, %v3821
    %v3824 = vshrl.u32 %v3700, 16
    %v3826 = vrot.slane %v3824, 6
    %v3827 = vshll.u32 %v3700, 16
    %v3829 = vrot.slane %v3827, 7
    %v3830 = vor.u32 %v3826, %v3829
    %v3831 = vrot.slane %v3830, 4
    %v3832 = vrot.slane %v3679, 6
    %v3833 = vrot.slane %v3682, 7
    %v3834 = vor.u32 %v3832, %v3833
    %v3835 = vsel %vm249, %v3831, %v3834
    %v3836 = vrot.slane %v3834, 4
    %v3838 = vshrl.u32 %v3799, 16
    %v3840 = vrot.slane %v3838, 6
    %v3841 = vshll.u32 %v3799, 16
    %v3843 = vrot.slane %v3841, 7
    %v3844 = vor.u32 %v3840, %v3843
    %v3845 = vsel %vm249, %v3836, %v3844
    %s3846 = scalar_lea.vmem %s9, 16
    %v3847 = vld [vmem:[%s3846] sm:$0xf]
    %v3848 = vld [vmem:[%s3846 + $0x4] sm:$0xf]
    %v3849 = vunpack.c.l.b16 %v3812
    %v3850 = vunpack.c.l.b16 %v3822
    %v3851 = vunpack.c.l.b16 %v3835
    %v3852 = vunpack.c.l.b16 %v3845
    %v3853 = vpack.c.b16 %v3850, %v3849
    %v3854 = vpack.c.b16 %v3852, %v3851
    %v3857 = vunpack.c.l.b16 %v3847
    %v3858 = vunpack.c.l.b16 %v3848
    %v3859 = vpack.c.b16 %v3858, %v3857
    %v3862 = vsel %vm1884, %v3853, 0
    %v3865 = vsel %vm1884, %v3854, 0
    %3867 = vmatpush.bf16.msra.mxu0 0
    %3868 = vmatpush.bf16.msra.mxu0 0
    %3869 = vmatpush.bf16.msra.mxu0 0
    %3870 = vmatpush.bf16.msra.mxu0 0
    %3871 = vmatpush.bf16.msra.mxu0 0
    %3872 = vmatpush.bf16.msra.mxu0 0
    %3873 = vmatpush.bf16.msra.mxu0 0
    %3874 = vmatpush.bf16.msra.mxu0 %v3859
    %3875 = vmatmul.bf16.gmra.mxu0 %v3862
    %v3876 = vpop.f32.mrf.mxu0
    %v3877 = vadd.f32 0.0, %v3876
    %v3878 = vpop.f32.mrf.mxu0
    %v3879 = vadd.f32 0.0, %v3878
    %3880 = vmatmul.bf16.gmra.mxu0 %v3865
    %v3881 = vpop.f32.mrf.mxu0
    %v3882 = vadd.f32 0.0, %v3881
    %v3883 = vpop.f32.mrf.mxu0
    %v3884 = vadd.f32 0.0, %v3883
    %3885 = vdwg.mxu0
    %v3886 = vadd.f32 %v3789, %v3877
    %v3887 = vadd.f32 %v3791, %v3879
    %v3888 = vadd.f32 %v3794, %v3882
    %v3889 = vadd.f32 %v3796, %v3884
    %v3890 = vld [vmem:[#allocation2] sm:$0x8]
    %v3891 = vld [vmem:[#allocation2 + $0x10] sm:$0x8]
    %v3896 = vrot.slane %v3890, 7
    %v3897 = vrot.slane %v3896, 4
    %v3898 = vrot.slane %v3636, 7
    %v3899 = vsel %vm344, %v3897, %v3898
    %v3900 = vrot.slane %v3898, 4
    %v3901 = vrot.slane %v3798, 7
    %v3902 = vsel %vm344, %v3900, %v3901
    %v3903 = vrot.slane %v3891, 7
    %v3904 = vrot.slane %v3903, 4
    %v3905 = vrot.slane %v3639, 7
    %v3906 = vsel %vm344, %v3904, %v3905
    %v3907 = vrot.slane %v3905, 4
    %v3908 = vrot.slane %v3799, 7
    %v3909 = vsel %vm344, %v3907, %v3908
    %s3910 = scalar_lea.vmem %s9, 24
    %v3911 = vld [vmem:[%s3910] sm:$0xf]
    %v3912 = vld [vmem:[%s3910 + $0x4] sm:$0xf]
    %v3913 = vunpack.c.l.b16 %v3899
    %v3914 = vunpack.c.l.b16 %v3902
    %v3915 = vunpack.c.l.b16 %v3906
    %v3916 = vunpack.c.l.b16 %v3909
    %v3917 = vpack.c.b16 %v3914, %v3913
    %v3918 = vpack.c.b16 %v3916, %v3915
    %v3921 = vunpack.c.l.b16 %v3911
    %v3922 = vunpack.c.l.b16 %v3912
    %v3923 = vpack.c.b16 %v3922, %v3921
    %v3926 = vsel %vm1884, %v3917, 0
    %v3929 = vsel %vm1884, %v3918, 0
    %3931 = vmatpush.bf16.msra.mxu0 0
    %3932 = vmatpush.bf16.msra.mxu0 0
    %3933 = vmatpush.bf16.msra.mxu0 0
    %3934 = vmatpush.bf16.msra.mxu0 0
    %3935 = vmatpush.bf16.msra.mxu0 0
    %3936 = vmatpush.bf16.msra.mxu0 0
    %3937 = vmatpush.bf16.msra.mxu0 0
    %3938 = vmatpush.bf16.msra.mxu0 %v3923
    %3939 = vmatmul.bf16.gmra.mxu0 %v3926
    %v3940 = vpop.f32.mrf.mxu0
    %v3941 = vadd.f32 0.0, %v3940
    %v3942 = vpop.f32.mrf.mxu0
    %v3943 = vadd.f32 0.0, %v3942
    %3944 = vmatmul.bf16.gmra.mxu0 %v3929
    %v3945 = vpop.f32.mrf.mxu0
    %v3946 = vadd.f32 0.0, %v3945
    %v3947 = vpop.f32.mrf.mxu0
    %v3948 = vadd.f32 0.0, %v3947
    %3949 = vdwg.mxu0
    %v3950 = vadd.f32 %v3886, %v3941
    %v3951 = vadd.f32 %v3887, %v3943
    %v3952 = vadd.f32 %v3888, %v3946
    %v3953 = vadd.f32 %v3889, %v3948
    %v3954 = vld [vmem:[#allocation2 + $0x8] sm:$0xf]
    %v3955 = vld [vmem:[#allocation2 + $0x18] sm:$0xf]
    %v3957 = vshrl.u32 %v3890, 16
    %v3959 = vrot.slane %v3957, 7
    %v3960 = vrot.slane %v3959, 4
    %v3961 = vrot.slane %v3651, 7
    %v3962 = vor.u32 %v3961, %v3654
    %v3963 = vsel %vm403, %v3960, %v3962
    %v3964 = vrot.slane %v3961, 4
    %v3966 = vshrl.u32 %v3954, 16
    %v3968 = vrot.slane %v3966, 7
    %v3969 = vshll.u32 %v3954, 16
    %v3971 = vor.u32 %v3968, %v3969
    %v3972 = vsel %vm403, %v3964, %v3971
    %v3974 = vshrl.u32 %v3891, 16
    %v3976 = vrot.slane %v3974, 7
    %v3977 = vrot.slane %v3976, 4
    %v3978 = vrot.slane %v3679, 7
    %v3979 = vor.u32 %v3978, %v3682
    %v3980 = vsel %vm403, %v3977, %v3979
    %v3981 = vrot.slane %v3978, 4
    %v3983 = vshrl.u32 %v3955, 16
    %v3985 = vrot.slane %v3983, 7
    %v3986 = vshll.u32 %v3955, 16
    %v3988 = vor.u32 %v3985, %v3986
    %v3989 = vsel %vm403, %v3981, %v3988
    %s3990 = scalar_lea.vmem %s9, 32
    %v3991 = vld [vmem:[%s3990] sm:$0xf]
    %v3992 = vld [vmem:[%s3990 + $0x4] sm:$0xf]
    %v3993 = vunpack.c.l.b16 %v3963
    %v3994 = vunpack.c.l.b16 %v3972
    %v3995 = vunpack.c.l.b16 %v3980
    %v3996 = vunpack.c.l.b16 %v3989
    %v3997 = vpack.c.b16 %v3994, %v3993
    %v3998 = vpack.c.b16 %v3996, %v3995
    %v4001 = vunpack.c.l.b16 %v3991
    %v4002 = vunpack.c.l.b16 %v3992
    %v4003 = vpack.c.b16 %v4002, %v4001
    %v4006 = vsel %vm1884, %v3997, 0
    %v4009 = vsel %vm1884, %v3998, 0
    %4011 = vmatpush.bf16.msra.mxu0 0
    %4012 = vmatpush.bf16.msra.mxu0 0
    %4013 = vmatpush.bf16.msra.mxu0 0
    %4014 = vmatpush.bf16.msra.mxu0 0
    %4015 = vmatpush.bf16.msra.mxu0 0
    %4016 = vmatpush.bf16.msra.mxu0 0
    %4017 = vmatpush.bf16.msra.mxu0 0
    %4018 = vmatpush.bf16.msra.mxu0 %v4003
    %4019 = vmatmul.bf16.gmra.mxu0 %v4006
    %v4020 = vpop.f32.mrf.mxu0
    %v4021 = vadd.f32 0.0, %v4020
    %v4022 = vpop.f32.mrf.mxu0
    %v4023 = vadd.f32 0.0, %v4022
    %4024 = vmatmul.bf16.gmra.mxu0 %v4009
    %v4025 = vpop.f32.mrf.mxu0
    %v4026 = vadd.f32 0.0, %v4025
    %v4027 = vpop.f32.mrf.mxu0
    %v4028 = vadd.f32 0.0, %v4027
    %4029 = vdwg.mxu0
    %v4030 = vadd.f32 %v3950, %v4021
    %v4031 = vadd.f32 %v3951, %v4023
    %v4032 = vadd.f32 %v3952, %v4026
    %v4033 = vadd.f32 %v3953, %v4028
    %s4034 = scalar_lea.vmem %s9, 40
    %v4035 = vld [vmem:[%s4034] sm:$0xf]
    %v4036 = vld [vmem:[%s4034 + $0x4] sm:$0xf]
    %v4039 = vunpack.c.l.b16 %v3636
    %v4040 = vunpack.c.l.b16 %v3954
    %v4041 = vunpack.c.l.b16 %v3639
    %v4042 = vunpack.c.l.b16 %v3955
    %v4043 = vpack.c.b16 %v4040, %v4039
    %v4044 = vpack.c.b16 %v4042, %v4041
    %v4047 = vunpack.c.l.b16 %v4035
    %v4048 = vunpack.c.l.b16 %v4036
    %v4049 = vpack.c.b16 %v4048, %v4047
    %v4052 = vsel %vm1884, %v4043, 0
    %v4055 = vsel %vm1884, %v4044, 0
    %4057 = vmatpush.bf16.msra.mxu0 0
    %4058 = vmatpush.bf16.msra.mxu0 0
    %4059 = vmatpush.bf16.msra.mxu0 0
    %4060 = vmatpush.bf16.msra.mxu0 0
    %4061 = vmatpush.bf16.msra.mxu0 0
    %4062 = vmatpush.bf16.msra.mxu0 0
    %4063 = vmatpush.bf16.msra.mxu0 0
    %4064 = vmatpush.bf16.msra.mxu0 %v4049
    %4065 = vmatmul.bf16.gmra.mxu0 %v4052
    %v4066 = vpop.f32.mrf.mxu0
    %v4067 = vadd.f32 0.0, %v4066
    %v4068 = vpop.f32.mrf.mxu0
    %v4069 = vadd.f32 0.0, %v4068
    %4070 = vmatmul.bf16.gmra.mxu0 %v4055
    %v4071 = vpop.f32.mrf.mxu0
    %v4072 = vadd.f32 0.0, %v4071
    %v4073 = vpop.f32.mrf.mxu0
    %v4074 = vadd.f32 0.0, %v4073
    %4075 = vdwg.mxu0
    %v4076 = vadd.f32 %v4030, %v4067
    %v4077 = vadd.f32 %v4031, %v4069
    %v4078 = vadd.f32 %v4032, %v4072
    %v4079 = vadd.f32 %v4033, %v4074
    %v4080 = vld [vmem:[#allocation2 + $0x4] sm:$0xf]
    %v4081 = vld [vmem:[#allocation2 + $0x8] sm:$0xf]
    %v4082 = vld [vmem:[#allocation2 + $0xc] sm:$0x1]
    %v4083 = vld [vmem:[#allocation2 + $0x14] sm:$0xf]
    %v4084 = vld [vmem:[#allocation2 + $0x18] sm:$0xf]
    %v4085 = vld [vmem:[#allocation2 + $0x1c] sm:$0x1]
    %v4087 = vshrl.u32 %v4080, 16
    %v4089 = vrot.slane %v4087, 4
    %v4090 = vshll.u32 %v4080, 16
    %v4092 = vrot.slane %v4090, 5
    %v4093 = vor.u32 %v4089, %v4092
    %v4094 = vrot.slane %v4093, 4
    %v4096 = vshll.u32 %v4081, 16
    %v4098 = vrot.slane %v4096, 5
    %v4099 = vsel %vm528, %v4094, %v4098
    %v4100 = vshrl.u32 %v4081, 16
    %v4102 = vrot.slane %v4100, 4
    %v4103 = vor.u32 %v4102, %v4098
    %v4104 = vrot.slane %v4103, 4
    %v4106 = vshll.u32 %v4082, 16
    %v4108 = vrot.slane %v4106, 5
    %v4109 = vsel %vm528, %v4104, %v4108
    %v4111 = vshrl.u32 %v4083, 16
    %v4113 = vrot.slane %v4111, 4
    %v4114 = vshll.u32 %v4083, 16
    %v4116 = vrot.slane %v4114, 5
    %v4117 = vor.u32 %v4113, %v4116
    %v4118 = vrot.slane %v4117, 4
    %v4120 = vshll.u32 %v4084, 16
    %v4122 = vrot.slane %v4120, 5
    %v4123 = vsel %vm528, %v4118, %v4122
    %v4124 = vshrl.u32 %v4084, 16
    %v4126 = vrot.slane %v4124, 4
    %v4127 = vor.u32 %v4126, %v4122
    %v4128 = vrot.slane %v4127, 4
    %v4130 = vshll.u32 %v4085, 16
    %v4132 = vrot.slane %v4130, 5
    %v4133 = vsel %vm528, %v4128, %v4132
    %s4134 = scalar_lea.vmem %s9, 48
    %v4135 = vld [vmem:[%s4134] sm:$0xf]
    %v4136 = vld [vmem:[%s4134 + $0x4] sm:$0xf]
    %v4137 = vunpack.c.l.b16 %v4099
    %v4138 = vunpack.c.l.b16 %v4109
    %v4139 = vunpack.c.l.b16 %v4123
    %v4140 = vunpack.c.l.b16 %v4133
    %v4141 = vpack.c.b16 %v4138, %v4137
    %v4142 = vpack.c.b16 %v4140, %v4139
    %v4145 = vunpack.c.l.b16 %v4135
    %v4146 = vunpack.c.l.b16 %v4136
    %v4147 = vpack.c.b16 %v4146, %v4145
    %v4150 = vsel %vm1884, %v4141, 0
    %v4153 = vsel %vm1884, %v4142, 0
    %4155 = vmatpush.bf16.msra.mxu0 0
    %4156 = vmatpush.bf16.msra.mxu0 0
    %4157 = vmatpush.bf16.msra.mxu0 0
    %4158 = vmatpush.bf16.msra.mxu0 0
    %4159 = vmatpush.bf16.msra.mxu0 0
    %4160 = vmatpush.bf16.msra.mxu0 0
    %4161 = vmatpush.bf16.msra.mxu0 0
    %4162 = vmatpush.bf16.msra.mxu0 %v4147
    %4163 = vmatmul.bf16.gmra.mxu0 %v4150
    %v4164 = vpop.f32.mrf.mxu0
    %v4165 = vadd.f32 0.0, %v4164
    %v4166 = vpop.f32.mrf.mxu0
    %v4167 = vadd.f32 0.0, %v4166
    %4168 = vmatmul.bf16.gmra.mxu0 %v4153
    %v4169 = vpop.f32.mrf.mxu0
    %v4170 = vadd.f32 0.0, %v4169
    %v4171 = vpop.f32.mrf.mxu0
    %v4172 = vadd.f32 0.0, %v4171
    %4173 = vdwg.mxu0
    %v4174 = vadd.f32 %v4076, %v4165
    %v4175 = vadd.f32 %v4077, %v4167
    %v4176 = vadd.f32 %v4078, %v4170
    %v4177 = vadd.f32 %v4079, %v4172
    %v4178 = vld [vmem:[#allocation2 + $0x4] sm:$0xe]
    %v4179 = vld [vmem:[#allocation2 + $0x14] sm:$0xe]
    %v4186 = vrot.slane %v4178, 5
    %v4187 = vrot.slane %v4186, 4
    %v4188 = vrot.slane %v4081, 5
    %v4189 = vsel %vm627, %v4187, %v4188
    %v4190 = vrot.slane %v4188, 4
    %v4191 = vrot.slane %v4082, 5
    %v4192 = vsel %vm627, %v4190, %v4191
    %v4193 = vrot.slane %v4179, 5
    %v4194 = vrot.slane %v4193, 4
    %v4195 = vrot.slane %v4084, 5
    %v4196 = vsel %vm627, %v4194, %v4195
    %v4197 = vrot.slane %v4195, 4
    %v4198 = vrot.slane %v4085, 5
    %v4199 = vsel %vm627, %v4197, %v4198
    %s4200 = scalar_lea.vmem %s9, 56
    %v4201 = vld [vmem:[%s4200] sm:$0xf]
    %v4202 = vld [vmem:[%s4200 + $0x4] sm:$0xf]
    %v4203 = vunpack.c.l.b16 %v4189
    %v4204 = vunpack.c.l.b16 %v4192
    %v4205 = vunpack.c.l.b16 %v4196
    %v4206 = vunpack.c.l.b16 %v4199
    %v4207 = vpack.c.b16 %v4204, %v4203
    %v4208 = vpack.c.b16 %v4206, %v4205
    %v4211 = vunpack.c.l.b16 %v4201
    %v4212 = vunpack.c.l.b16 %v4202
    %v4213 = vpack.c.b16 %v4212, %v4211
    %v4216 = vsel %vm1884, %v4207, 0
    %v4219 = vsel %vm1884, %v4208, 0
    %4221 = vmatpush.bf16.msra.mxu0 0
    %4222 = vmatpush.bf16.msra.mxu0 0
    %4223 = vmatpush.bf16.msra.mxu0 0
    %4224 = vmatpush.bf16.msra.mxu0 0
    %4225 = vmatpush.bf16.msra.mxu0 0
    %4226 = vmatpush.bf16.msra.mxu0 0
    %4227 = vmatpush.bf16.msra.mxu0 0
    %4228 = vmatpush.bf16.msra.mxu0 %v4213
    %4229 = vmatmul.bf16.gmra.mxu0 %v4216
    %v4230 = vpop.f32.mrf.mxu0
    %v4231 = vadd.f32 0.0, %v4230
    %v4232 = vpop.f32.mrf.mxu0
    %v4233 = vadd.f32 0.0, %v4232
    %4234 = vmatmul.bf16.gmra.mxu0 %v4219
    %v4235 = vpop.f32.mrf.mxu0
    %v4236 = vadd.f32 0.0, %v4235
    %v4237 = vpop.f32.mrf.mxu0
    %v4238 = vadd.f32 0.0, %v4237
    %4239 = vdwg.mxu0
    %v4240 = vadd.f32 %v4174, %v4231
    %v4241 = vadd.f32 %v4175, %v4233
    %v4242 = vadd.f32 %v4176, %v4236
    %v4243 = vadd.f32 %v4177, %v4238
    %v4244 = vld [vmem:[#allocation2 + $0xc] sm:$0x3]
    %v4245 = vld [vmem:[#allocation2 + $0x1c] sm:$0x3]
    %v4247 = vshrl.u32 %v4178, 16
    %v4249 = vrot.slane %v4247, 5
    %v4250 = vshll.u32 %v4178, 16
    %v4252 = vrot.slane %v4250, 6
    %v4253 = vor.u32 %v4249, %v4252
    %v4254 = vrot.slane %v4253, 4
    %v4255 = vrot.slane %v4100, 5
    %v4256 = vrot.slane %v4096, 6
    %v4257 = vor.u32 %v4255, %v4256
    %v4258 = vsel %vm90, %v4254, %v4257
    %v4259 = vrot.slane %v4257, 4
    %v4261 = vshrl.u32 %v4244, 16
    %v4263 = vrot.slane %v4261, 5
    %v4264 = vshll.u32 %v4244, 16
    %v4266 = vrot.slane %v4264, 6
    %v4267 = vor.u32 %v4263, %v4266
    %v4268 = vsel %vm90, %v4259, %v4267
    %v4270 = vshrl.u32 %v4179, 16
    %v4272 = vrot.slane %v4270, 5
    %v4273 = vshll.u32 %v4179, 16
    %v4275 = vrot.slane %v4273, 6
    %v4276 = vor.u32 %v4272, %v4275
    %v4277 = vrot.slane %v4276, 4
    %v4278 = vrot.slane %v4124, 5
    %v4279 = vrot.slane %v4120, 6
    %v4280 = vor.u32 %v4278, %v4279
    %v4281 = vsel %vm90, %v4277, %v4280
    %v4282 = vrot.slane %v4280, 4
    %v4284 = vshrl.u32 %v4245, 16
    %v4286 = vrot.slane %v4284, 5
    %v4287 = vshll.u32 %v4245, 16
    %v4289 = vrot.slane %v4287, 6
    %v4290 = vor.u32 %v4286, %v4289
    %v4291 = vsel %vm90, %v4282, %v4290
    %s4292 = scalar_lea.vmem %s9, 64
    %v4293 = vld [vmem:[%s4292] sm:$0xf]
    %v4294 = vld [vmem:[%s4292 + $0x4] sm:$0xf]
    %v4295 = vunpack.c.l.b16 %v4258
    %v4296 = vunpack.c.l.b16 %v4268
    %v4297 = vunpack.c.l.b16 %v4281
    %v4298 = vunpack.c.l.b16 %v4291
    %v4299 = vpack.c.b16 %v4296, %v4295
    %v4300 = vpack.c.b16 %v4298, %v4297
    %v4303 = vunpack.c.l.b16 %v4293
    %v4304 = vunpack.c.l.b16 %v4294
    %v4305 = vpack.c.b16 %v4304, %v4303
    %v4308 = vsel %vm1884, %v4299, 0
    %v4311 = vsel %vm1884, %v4300, 0
    %4313 = vmatpush.bf16.msra.mxu0 0
    %4314 = vmatpush.bf16.msra.mxu0 0
    %4315 = vmatpush.bf16.msra.mxu0 0
    %4316 = vmatpush.bf16.msra.mxu0 0
    %4317 = vmatpush.bf16.msra.mxu0 0
    %4318 = vmatpush.bf16.msra.mxu0 0
    %4319 = vmatpush.bf16.msra.mxu0 0
    %4320 = vmatpush.bf16.msra.mxu0 %v4305
    %4321 = vmatmul.bf16.gmra.mxu0 %v4308
    %v4322 = vpop.f32.mrf.mxu0
    %v4323 = vadd.f32 0.0, %v4322
    %v4324 = vpop.f32.mrf.mxu0
    %v4325 = vadd.f32 0.0, %v4324
    %4326 = vmatmul.bf16.gmra.mxu0 %v4311
    %v4327 = vpop.f32.mrf.mxu0
    %v4328 = vadd.f32 0.0, %v4327
    %v4329 = vpop.f32.mrf.mxu0
    %v4330 = vadd.f32 0.0, %v4329
    %4331 = vdwg.mxu0
    %v4332 = vadd.f32 %v4240, %v4323
    %v4333 = vadd.f32 %v4241, %v4325
    %v4334 = vadd.f32 %v4242, %v4328
    %v4335 = vadd.f32 %v4243, %v4330
    %v4336 = vld [vmem:[#allocation2 + $0x4] sm:$0xc]
    %v4337 = vld [vmem:[#allocation2 + $0x14] sm:$0xc]
    %v4342 = vrot.slane %v4336, 6
    %v4343 = vrot.slane %v4342, 4
    %v4344 = vrot.slane %v4081, 6
    %v4345 = vsel %vm158, %v4343, %v4344
    %v4346 = vrot.slane %v4344, 4
    %v4347 = vrot.slane %v4244, 6
    %v4348 = vsel %vm158, %v4346, %v4347
    %v4349 = vrot.slane %v4337, 6
    %v4350 = vrot.slane %v4349, 4
    %v4351 = vrot.slane %v4084, 6
    %v4352 = vsel %vm158, %v4350, %v4351
    %v4353 = vrot.slane %v4351, 4
    %v4354 = vrot.slane %v4245, 6
    %v4355 = vsel %vm158, %v4353, %v4354
    %s4356 = scalar_lea.vmem %s9, 72
    %v4357 = vld [vmem:[%s4356] sm:$0xf]
    %v4358 = vld [vmem:[%s4356 + $0x4] sm:$0xf]
    %v4359 = vunpack.c.l.b16 %v4345
    %v4360 = vunpack.c.l.b16 %v4348
    %v4361 = vunpack.c.l.b16 %v4352
    %v4362 = vunpack.c.l.b16 %v4355
    %v4363 = vpack.c.b16 %v4360, %v4359
    %v4364 = vpack.c.b16 %v4362, %v4361
    %v4367 = vunpack.c.l.b16 %v4357
    %v4368 = vunpack.c.l.b16 %v4358
    %v4369 = vpack.c.b16 %v4368, %v4367
    %v4372 = vsel %vm1884, %v4363, 0
    %v4375 = vsel %vm1884, %v4364, 0
    %4377 = vmatpush.bf16.msra.mxu0 0
    %4378 = vmatpush.bf16.msra.mxu0 0
    %4379 = vmatpush.bf16.msra.mxu0 0
    %4380 = vmatpush.bf16.msra.mxu0 0
    %4381 = vmatpush.bf16.msra.mxu0 0
    %4382 = vmatpush.bf16.msra.mxu0 0
    %4383 = vmatpush.bf16.msra.mxu0 0
    %4384 = vmatpush.bf16.msra.mxu0 %v4369
    %4385 = vmatmul.bf16.gmra.mxu0 %v4372
    %v4386 = vpop.f32.mrf.mxu0
    %v4387 = vadd.f32 0.0, %v4386
    %v4388 = vpop.f32.mrf.mxu0
    %v4389 = vadd.f32 0.0, %v4388
    %4390 = vmatmul.bf16.gmra.mxu0 %v4375
    %v4391 = vpop.f32.mrf.mxu0
    %v4392 = vadd.f32 0.0, %v4391
    %v4393 = vpop.f32.mrf.mxu0
    %v4394 = vadd.f32 0.0, %v4393
    %4395 = vdwg.mxu0
    %v4396 = vadd.f32 %v4332, %v4387
    %v4397 = vadd.f32 %v4333, %v4389
    %v4398 = vadd.f32 %v4334, %v4392
    %v4399 = vadd.f32 %v4335, %v4394
    %v4400 = vld [vmem:[#allocation2 + $0xc] sm:$0x7]
    %v4401 = vld [vmem:[#allocation2 + $0x1c] sm:$0x7]
    %v4403 = vshrl.u32 %v4336, 16
    %v4405 = vrot.slane %v4403, 6
    %v4406 = vshll.u32 %v4336, 16
    %v4408 = vrot.slane %v4406, 7
    %v4409 = vor.u32 %v4405, %v4408
    %v4410 = vrot.slane %v4409, 4
    %v4411 = vrot.slane %v4100, 6
    %v4412 = vrot.slane %v4096, 7
    %v4413 = vor.u32 %v4411, %v4412
    %v4414 = vsel %vm249, %v4410, %v4413
    %v4415 = vrot.slane %v4413, 4
    %v4417 = vshrl.u32 %v4400, 16
    %v4419 = vrot.slane %v4417, 6
    %v4420 = vshll.u32 %v4400, 16
    %v4422 = vrot.slane %v4420, 7
    %v4423 = vor.u32 %v4419, %v4422
    %v4424 = vsel %vm249, %v4415, %v4423
    %v4426 = vshrl.u32 %v4337, 16
    %v4428 = vrot.slane %v4426, 6
    %v4429 = vshll.u32 %v4337, 16
    %v4431 = vrot.slane %v4429, 7
    %v4432 = vor.u32 %v4428, %v4431
    %v4433 = vrot.slane %v4432, 4
    %v4434 = vrot.slane %v4124, 6
    %v4435 = vrot.slane %v4120, 7
    %v4436 = vor.u32 %v4434, %v4435
    %v4437 = vsel %vm249, %v4433, %v4436
    %v4438 = vrot.slane %v4436, 4
    %v4440 = vshrl.u32 %v4401, 16
    %v4442 = vrot.slane %v4440, 6
    %v4443 = vshll.u32 %v4401, 16
    %v4445 = vrot.slane %v4443, 7
    %v4446 = vor.u32 %v4442, %v4445
    %v4447 = vsel %vm249, %v4438, %v4446
    %s4448 = scalar_lea.vmem %s9, 80
    %v4449 = vld [vmem:[%s4448] sm:$0xf]
    %v4450 = vld [vmem:[%s4448 + $0x4] sm:$0xf]
    %v4451 = vunpack.c.l.b16 %v4414
    %v4452 = vunpack.c.l.b16 %v4424
    %v4453 = vunpack.c.l.b16 %v4437
    %v4454 = vunpack.c.l.b16 %v4447
    %v4455 = vpack.c.b16 %v4452, %v4451
    %v4456 = vpack.c.b16 %v4454, %v4453
    %v4459 = vunpack.c.l.b16 %v4449
    %v4460 = vunpack.c.l.b16 %v4450
    %v4461 = vpack.c.b16 %v4460, %v4459
    %v4464 = vsel %vm1884, %v4455, 0
    %v4467 = vsel %vm1884, %v4456, 0
    %4469 = vmatpush.bf16.msra.mxu0 0
    %4470 = vmatpush.bf16.msra.mxu0 0
    %4471 = vmatpush.bf16.msra.mxu0 0
    %4472 = vmatpush.bf16.msra.mxu0 0
    %4473 = vmatpush.bf16.msra.mxu0 0
    %4474 = vmatpush.bf16.msra.mxu0 0
    %4475 = vmatpush.bf16.msra.mxu0 0
    %4476 = vmatpush.bf16.msra.mxu0 %v4461
    %4477 = vmatmul.bf16.gmra.mxu0 %v4464
    %v4478 = vpop.f32.mrf.mxu0
    %v4479 = vadd.f32 0.0, %v4478
    %v4480 = vpop.f32.mrf.mxu0
    %v4481 = vadd.f32 0.0, %v4480
    %4482 = vmatmul.bf16.gmra.mxu0 %v4467
    %v4483 = vpop.f32.mrf.mxu0
    %v4484 = vadd.f32 0.0, %v4483
    %v4485 = vpop.f32.mrf.mxu0
    %v4486 = vadd.f32 0.0, %v4485
    %4487 = vdwg.mxu0
    %v4488 = vadd.f32 %v4396, %v4479
    %v4489 = vadd.f32 %v4397, %v4481
    %v4490 = vadd.f32 %v4398, %v4484
    %v4491 = vadd.f32 %v4399, %v4486
    %v4492 = vld [vmem:[%s10] sm:$0x1]
    %v4494 = vperm.slane %v4492, 0
    %v4496 = vadd.f32 %v4488, %v4494
    %v4497 = vadd.f32 %v4489, %v4494
    %v4498 = vadd.f32 %v4490, %v4494
    %v4499 = vadd.f32 %v4491, %v4494
    %v4500 = vmul.f32 %v4496, 0.01
    %v4501 = vmul.f32 %v4497, 0.01
    %v4502 = vmul.f32 %v4498, 0.01
    %v4503 = vmul.f32 %v4499, 0.01
    %v4504 = vmax.f32 %v4496, %v4500
    %v4505 = vmax.f32 %v4497, %v4501
    %v4506 = vmax.f32 %v4498, %v4502
    %v4507 = vmax.f32 %v4499, %v4503
    %v4508 = vpack.c.bf16 %v4504, %v4504
    %v4509 = vpack.c.bf16 %v4505, %v4505
    %v4510 = vpack.c.bf16 %v4506, %v4506
    %v4511 = vpack.c.bf16 %v4507, %v4507
    %4512 = vst.msk [vmem:[#allocation2 + $0x4] sm:$0xf] %vm938, %v4508
    %4513 = vst.msk [vmem:[#allocation2 + $0x8] sm:$0xf] %vm938, %v4509
    %4514 = vst.msk [vmem:[#allocation2 + $0x14] sm:$0xf] %vm938, %v4510
    %4515 = vst.msk [vmem:[#allocation2 + $0x18] sm:$0xf] %vm938, %v4511
    %v4516 = vld [vmem:[#allocation2] sm:$0xe]
    %v4517 = vld [vmem:[#allocation2 + $0x4] sm:$0xf]
    %v4518 = vld [vmem:[#allocation2 + $0x8] sm:$0x3]
    %v4519 = vld [vmem:[#allocation2 + $0x10] sm:$0xe]
    %v4520 = vld [vmem:[#allocation2 + $0x14] sm:$0xf]
    %v4521 = vld [vmem:[#allocation2 + $0x18] sm:$0x3]
    %v4523 = vshrl.u32 %v4516, 16
    %v4525 = vrot.slane %v4523, 5
    %v4526 = vshll.u32 %v4516, 16
    %v4528 = vrot.slane %v4526, 6
    %v4529 = vor.u32 %v4525, %v4528
    %v4530 = vrot.slane %v4529, 4
    %v4532 = vshrl.u32 %v4517, 16
    %v4534 = vrot.slane %v4532, 5
    %v4535 = vshll.u32 %v4517, 16
    %v4537 = vrot.slane %v4535, 6
    %v4538 = vor.u32 %v4534, %v4537
    %v4539 = vsel %vm90, %v4530, %v4538
    %v4540 = vrot.slane %v4538, 4
    %v4542 = vshrl.u32 %v4518, 16
    %v4544 = vrot.slane %v4542, 5
    %v4545 = vshll.u32 %v4518, 16
    %v4547 = vrot.slane %v4545, 6
    %v4548 = vor.u32 %v4544, %v4547
    %v4549 = vsel %vm90, %v4540, %v4548
    %v4551 = vshrl.u32 %v4519, 16
    %v4553 = vrot.slane %v4551, 5
    %v4554 = vshll.u32 %v4519, 16
    %v4556 = vrot.slane %v4554, 6
    %v4557 = vor.u32 %v4553, %v4556
    %v4558 = vrot.slane %v4557, 4
    %v4560 = vshrl.u32 %v4520, 16
    %v4562 = vrot.slane %v4560, 5
    %v4563 = vshll.u32 %v4520, 16
    %v4565 = vrot.slane %v4563, 6
    %v4566 = vor.u32 %v4562, %v4565
    %v4567 = vsel %vm90, %v4558, %v4566
    %v4568 = vrot.slane %v4566, 4
    %v4570 = vshrl.u32 %v4521, 16
    %v4572 = vrot.slane %v4570, 5
    %v4573 = vshll.u32 %v4521, 16
    %v4575 = vrot.slane %v4573, 6
    %v4576 = vor.u32 %v4572, %v4575
    %v4577 = vsel %vm90, %v4568, %v4576
    %v4578 = vld [vmem:[%s11] sm:$0xf]
    %v4579 = vld [vmem:[#allocation2] sm:$0xc]
    %v4580 = vld [vmem:[#allocation2 + $0x10] sm:$0xc]
    %v4587 = vrot.slane %v4579, 6
    %v4588 = vrot.slane %v4587, 4
    %v4589 = vrot.slane %v4517, 6
    %v4590 = vsel %vm158, %v4588, %v4589
    %v4591 = vrot.slane %v4589, 4
    %v4592 = vrot.slane %v4518, 6
    %v4593 = vsel %vm158, %v4591, %v4592
    %v4594 = vrot.slane %v4580, 6
    %v4595 = vrot.slane %v4594, 4
    %v4596 = vrot.slane %v4520, 6
    %v4597 = vsel %vm158, %v4595, %v4596
    %v4598 = vrot.slane %v4596, 4
    %v4599 = vrot.slane %v4521, 6
    %v4600 = vsel %vm158, %v4598, %v4599
    %s4601 = scalar_lea.vmem %s11, 4
    %v4602 = vld [vmem:[%s4601] sm:$0xf]
    %v4603 = vunpack.c.l.b16 %v4590
    %v4604 = vunpack.c.l.b16 %v4593
    %v4605 = vunpack.c.l.b16 %v4597
    %v4606 = vunpack.c.l.b16 %v4600
    %v4607 = vpack.c.b16 %v4604, %v4603
    %v4608 = vpack.c.b16 %v4606, %v4605
    %v4610 = vsel %vm1036, %v4607, 0
    %v4613 = vsel %vm1036, %v4608, 0
    %v4616 = vsel %vm1043, %v4602, 0
    %4618 = vmatpush.bf16.msra.mxu0 0
    %4619 = vmatpush.bf16.msra.mxu0 0
    %4620 = vmatpush.bf16.msra.mxu0 0
    %4621 = vmatpush.bf16.msra.mxu0 0
    %4622 = vmatpush.bf16.msra.mxu0 0
    %4623 = vmatpush.bf16.msra.mxu0 0
    %4624 = vmatpush.bf16.msra.mxu0 0
    %4625 = vmatpush.bf16.msra.mxu0 %v4616
    %4626 = vmatmul.bf16.gmra.mxu0 %v4610
    %v4627 = vpop.f32.mrf.mxu0
    %v4628 = vadd.f32 0.0, %v4627
    %v4629 = vpop.f32.mrf.mxu0
    %v4630 = vadd.f32 0.0, %v4629
    %4631 = vmatmul.bf16.gmra.mxu0 %v4613
    %v4632 = vpop.f32.mrf.mxu0
    %v4633 = vadd.f32 0.0, %v4632
    %v4634 = vpop.f32.mrf.mxu0
    %v4635 = vadd.f32 0.0, %v4634
    %4636 = vdwg.mxu0
    %v4637 = vunpack.c.l.b16 %v4539
    %v4638 = vunpack.c.l.b16 %v4549
    %v4639 = vunpack.c.l.b16 %v4567
    %v4640 = vunpack.c.l.b16 %v4577
    %v4641 = vpack.c.b16 %v4638, %v4637
    %v4642 = vpack.c.b16 %v4640, %v4639
    %v4644 = vsel %vm1036, %v4641, 0
    %v4647 = vsel %vm1036, %v4642, 0
    %v4650 = vsel %vm1043, %v4578, 0
    %4652 = vmatpush.bf16.msra.mxu0 0
    %4653 = vmatpush.bf16.msra.mxu0 0
    %4654 = vmatpush.bf16.msra.mxu0 0
    %4655 = vmatpush.bf16.msra.mxu0 0
    %4656 = vmatpush.bf16.msra.mxu0 0
    %4657 = vmatpush.bf16.msra.mxu0 0
    %4658 = vmatpush.bf16.msra.mxu0 0
    %4659 = vmatpush.bf16.msra.mxu0 %v4650
    %4660 = vmatmul.bf16.gmra.mxu0 %v4644
    %v4661 = vpop.f32.mrf.mxu0
    %v4662 = vadd.f32 %v4628, %v4661
    %v4663 = vpop.f32.mrf.mxu0
    %v4664 = vadd.f32 %v4630, %v4663
    %4665 = vmatmul.bf16.gmra.mxu0 %v4647
    %v4666 = vpop.f32.mrf.mxu0
    %v4667 = vadd.f32 %v4633, %v4666
    %v4668 = vpop.f32.mrf.mxu0
    %v4669 = vadd.f32 %v4635, %v4668
    %4670 = vdwg.mxu0
    %v4671 = vld [vmem:[#allocation2 + $0x8] sm:$0x7]
    %v4672 = vld [vmem:[#allocation2 + $0x18] sm:$0x7]
    %v4674 = vshrl.u32 %v4579, 16
    %v4676 = vrot.slane %v4674, 6
    %v4677 = vshll.u32 %v4579, 16
    %v4679 = vrot.slane %v4677, 7
    %v4680 = vor.u32 %v4676, %v4679
    %v4681 = vrot.slane %v4680, 4
    %v4682 = vrot.slane %v4532, 6
    %v4683 = vrot.slane %v4535, 7
    %v4684 = vor.u32 %v4682, %v4683
    %v4685 = vsel %vm249, %v4681, %v4684
    %v4686 = vrot.slane %v4684, 4
    %v4688 = vshrl.u32 %v4671, 16
    %v4690 = vrot.slane %v4688, 6
    %v4691 = vshll.u32 %v4671, 16
    %v4693 = vrot.slane %v4691, 7
    %v4694 = vor.u32 %v4690, %v4693
    %v4695 = vsel %vm249, %v4686, %v4694
    %v4697 = vshrl.u32 %v4580, 16
    %v4699 = vrot.slane %v4697, 6
    %v4700 = vshll.u32 %v4580, 16
    %v4702 = vrot.slane %v4700, 7
    %v4703 = vor.u32 %v4699, %v4702
    %v4704 = vrot.slane %v4703, 4
    %v4705 = vrot.slane %v4560, 6
    %v4706 = vrot.slane %v4563, 7
    %v4707 = vor.u32 %v4705, %v4706
    %v4708 = vsel %vm249, %v4704, %v4707
    %v4709 = vrot.slane %v4707, 4
    %v4711 = vshrl.u32 %v4672, 16
    %v4713 = vrot.slane %v4711, 6
    %v4714 = vshll.u32 %v4672, 16
    %v4716 = vrot.slane %v4714, 7
    %v4717 = vor.u32 %v4713, %v4716
    %v4718 = vsel %vm249, %v4709, %v4717
    %s4719 = scalar_lea.vmem %s11, 8
    %v4720 = vld [vmem:[%s4719] sm:$0xf]
    %v4721 = vunpack.c.l.b16 %v4685
    %v4722 = vunpack.c.l.b16 %v4695
    %v4723 = vunpack.c.l.b16 %v4708
    %v4724 = vunpack.c.l.b16 %v4718
    %v4725 = vpack.c.b16 %v4722, %v4721
    %v4726 = vpack.c.b16 %v4724, %v4723
    %v4728 = vsel %vm1036, %v4725, 0
    %v4731 = vsel %vm1036, %v4726, 0
    %v4734 = vsel %vm1043, %v4720, 0
    %4736 = vmatpush.bf16.msra.mxu0 0
    %4737 = vmatpush.bf16.msra.mxu0 0
    %4738 = vmatpush.bf16.msra.mxu0 0
    %4739 = vmatpush.bf16.msra.mxu0 0
    %4740 = vmatpush.bf16.msra.mxu0 0
    %4741 = vmatpush.bf16.msra.mxu0 0
    %4742 = vmatpush.bf16.msra.mxu0 0
    %4743 = vmatpush.bf16.msra.mxu0 %v4734
    %4744 = vmatmul.bf16.gmra.mxu0 %v4728
    %v4745 = vpop.f32.mrf.mxu0
    %v4746 = vadd.f32 0.0, %v4745
    %v4747 = vpop.f32.mrf.mxu0
    %v4748 = vadd.f32 0.0, %v4747
    %4749 = vmatmul.bf16.gmra.mxu0 %v4731
    %v4750 = vpop.f32.mrf.mxu0
    %v4751 = vadd.f32 0.0, %v4750
    %v4752 = vpop.f32.mrf.mxu0
    %v4753 = vadd.f32 0.0, %v4752
    %4754 = vdwg.mxu0
    %v4755 = vadd.f32 %v4662, %v4746
    %v4756 = vadd.f32 %v4664, %v4748
    %v4757 = vadd.f32 %v4667, %v4751
    %v4758 = vadd.f32 %v4669, %v4753
    %v4759 = vld [vmem:[#allocation2] sm:$0x8]
    %v4760 = vld [vmem:[#allocation2 + $0x10] sm:$0x8]
    %v4765 = vrot.slane %v4759, 7
    %v4766 = vrot.slane %v4765, 4
    %v4767 = vrot.slane %v4517, 7
    %v4768 = vsel %vm344, %v4766, %v4767
    %v4769 = vrot.slane %v4767, 4
    %v4770 = vrot.slane %v4671, 7
    %v4771 = vsel %vm344, %v4769, %v4770
    %v4772 = vrot.slane %v4760, 7
    %v4773 = vrot.slane %v4772, 4
    %v4774 = vrot.slane %v4520, 7
    %v4775 = vsel %vm344, %v4773, %v4774
    %v4776 = vrot.slane %v4774, 4
    %v4777 = vrot.slane %v4672, 7
    %v4778 = vsel %vm344, %v4776, %v4777
    %s4779 = scalar_lea.vmem %s11, 12
    %v4780 = vld [vmem:[%s4779] sm:$0xf]
    %v4781 = vunpack.c.l.b16 %v4768
    %v4782 = vunpack.c.l.b16 %v4771
    %v4783 = vunpack.c.l.b16 %v4775
    %v4784 = vunpack.c.l.b16 %v4778
    %v4785 = vpack.c.b16 %v4782, %v4781
    %v4786 = vpack.c.b16 %v4784, %v4783
    %v4788 = vsel %vm1036, %v4785, 0
    %v4791 = vsel %vm1036, %v4786, 0
    %v4794 = vsel %vm1043, %v4780, 0
    %4796 = vmatpush.bf16.msra.mxu0 0
    %4797 = vmatpush.bf16.msra.mxu0 0
    %4798 = vmatpush.bf16.msra.mxu0 0
    %4799 = vmatpush.bf16.msra.mxu0 0
    %4800 = vmatpush.bf16.msra.mxu0 0
    %4801 = vmatpush.bf16.msra.mxu0 0
    %4802 = vmatpush.bf16.msra.mxu0 0
    %4803 = vmatpush.bf16.msra.mxu0 %v4794
    %4804 = vmatmul.bf16.gmra.mxu0 %v4788
    %v4805 = vpop.f32.mrf.mxu0
    %v4806 = vadd.f32 0.0, %v4805
    %v4807 = vpop.f32.mrf.mxu0
    %v4808 = vadd.f32 0.0, %v4807
    %4809 = vmatmul.bf16.gmra.mxu0 %v4791
    %v4810 = vpop.f32.mrf.mxu0
    %v4811 = vadd.f32 0.0, %v4810
    %v4812 = vpop.f32.mrf.mxu0
    %v4813 = vadd.f32 0.0, %v4812
    %4814 = vdwg.mxu0
    %v4815 = vadd.f32 %v4755, %v4806
    %v4816 = vadd.f32 %v4756, %v4808
    %v4817 = vadd.f32 %v4757, %v4811
    %v4818 = vadd.f32 %v4758, %v4813
    %v4819 = vld [vmem:[#allocation2 + $0x8] sm:$0xf]
    %v4820 = vld [vmem:[#allocation2 + $0x18] sm:$0xf]
    %v4822 = vshrl.u32 %v4759, 16
    %v4824 = vrot.slane %v4822, 7
    %v4825 = vrot.slane %v4824, 4
    %v4826 = vrot.slane %v4532, 7
    %v4827 = vor.u32 %v4826, %v4535
    %v4828 = vsel %vm403, %v4825, %v4827
    %v4829 = vrot.slane %v4826, 4
    %v4831 = vshrl.u32 %v4819, 16
    %v4833 = vrot.slane %v4831, 7
    %v4834 = vshll.u32 %v4819, 16
    %v4836 = vor.u32 %v4833, %v4834
    %v4837 = vsel %vm403, %v4829, %v4836
    %v4839 = vshrl.u32 %v4760, 16
    %v4841 = vrot.slane %v4839, 7
    %v4842 = vrot.slane %v4841, 4
    %v4843 = vrot.slane %v4560, 7
    %v4844 = vor.u32 %v4843, %v4563
    %v4845 = vsel %vm403, %v4842, %v4844
    %v4846 = vrot.slane %v4843, 4
    %v4848 = vshrl.u32 %v4820, 16
    %v4850 = vrot.slane %v4848, 7
    %v4851 = vshll.u32 %v4820, 16
    %v4853 = vor.u32 %v4850, %v4851
    %v4854 = vsel %vm403, %v4846, %v4853
    %s4855 = scalar_lea.vmem %s11, 16
    %v4856 = vld [vmem:[%s4855] sm:$0xf]
    %v4857 = vunpack.c.l.b16 %v4828
    %v4858 = vunpack.c.l.b16 %v4837
    %v4859 = vunpack.c.l.b16 %v4845
    %v4860 = vunpack.c.l.b16 %v4854
    %v4861 = vpack.c.b16 %v4858, %v4857
    %v4862 = vpack.c.b16 %v4860, %v4859
    %v4864 = vsel %vm1036, %v4861, 0
    %v4867 = vsel %vm1036, %v4862, 0
    %v4870 = vsel %vm1043, %v4856, 0
    %4872 = vmatpush.bf16.msra.mxu0 0
    %4873 = vmatpush.bf16.msra.mxu0 0
    %4874 = vmatpush.bf16.msra.mxu0 0
    %4875 = vmatpush.bf16.msra.mxu0 0
    %4876 = vmatpush.bf16.msra.mxu0 0
    %4877 = vmatpush.bf16.msra.mxu0 0
    %4878 = vmatpush.bf16.msra.mxu0 0
    %4879 = vmatpush.bf16.msra.mxu0 %v4870
    %4880 = vmatmul.bf16.gmra.mxu0 %v4864
    %v4881 = vpop.f32.mrf.mxu0
    %v4882 = vadd.f32 0.0, %v4881
    %v4883 = vpop.f32.mrf.mxu0
    %v4884 = vadd.f32 0.0, %v4883
    %4885 = vmatmul.bf16.gmra.mxu0 %v4867
    %v4886 = vpop.f32.mrf.mxu0
    %v4887 = vadd.f32 0.0, %v4886
    %v4888 = vpop.f32.mrf.mxu0
    %v4889 = vadd.f32 0.0, %v4888
    %4890 = vdwg.mxu0
    %v4891 = vadd.f32 %v4815, %v4882
    %v4892 = vadd.f32 %v4816, %v4884
    %v4893 = vadd.f32 %v4817, %v4887
    %v4894 = vadd.f32 %v4818, %v4889
    %s4895 = scalar_lea.vmem %s11, 20
    %v4896 = vld [vmem:[%s4895] sm:$0xf]
    %v4899 = vunpack.c.l.b16 %v4517
    %v4900 = vunpack.c.l.b16 %v4819
    %v4901 = vunpack.c.l.b16 %v4520
    %v4902 = vunpack.c.l.b16 %v4820
    %v4903 = vpack.c.b16 %v4900, %v4899
    %v4904 = vpack.c.b16 %v4902, %v4901
    %v4906 = vsel %vm1036, %v4903, 0
    %v4909 = vsel %vm1036, %v4904, 0
    %v4912 = vsel %vm1043, %v4896, 0
    %4914 = vmatpush.bf16.msra.mxu0 0
    %4915 = vmatpush.bf16.msra.mxu0 0
    %4916 = vmatpush.bf16.msra.mxu0 0
    %4917 = vmatpush.bf16.msra.mxu0 0
    %4918 = vmatpush.bf16.msra.mxu0 0
    %4919 = vmatpush.bf16.msra.mxu0 0
    %4920 = vmatpush.bf16.msra.mxu0 0
    %4921 = vmatpush.bf16.msra.mxu0 %v4912
    %4922 = vmatmul.bf16.gmra.mxu0 %v4906
    %v4923 = vpop.f32.mrf.mxu0
    %v4924 = vadd.f32 0.0, %v4923
    %v4925 = vpop.f32.mrf.mxu0
    %v4926 = vadd.f32 0.0, %v4925
    %4927 = vmatmul.bf16.gmra.mxu0 %v4909
    %v4928 = vpop.f32.mrf.mxu0
    %v4929 = vadd.f32 0.0, %v4928
    %v4930 = vpop.f32.mrf.mxu0
    %v4931 = vadd.f32 0.0, %v4930
    %4932 = vdwg.mxu0
    %v4933 = vadd.f32 %v4891, %v4924
    %v4934 = vadd.f32 %v4892, %v4926
    %v4935 = vadd.f32 %v4893, %v4929
    %v4936 = vadd.f32 %v4894, %v4931
    %v4937 = vld [vmem:[#allocation2 + $0x4] sm:$0xf]
    %v4938 = vld [vmem:[#allocation2 + $0x8] sm:$0xf]
    %v4939 = vld [vmem:[#allocation2 + $0xc] sm:$0x1]
    %v4940 = vld [vmem:[#allocation2 + $0x14] sm:$0xf]
    %v4941 = vld [vmem:[#allocation2 + $0x18] sm:$0xf]
    %v4942 = vld [vmem:[#allocation2 + $0x1c] sm:$0x1]
    %v4944 = vshrl.u32 %v4937, 16
    %v4946 = vrot.slane %v4944, 4
    %v4947 = vshll.u32 %v4937, 16
    %v4949 = vrot.slane %v4947, 5
    %v4950 = vor.u32 %v4946, %v4949
    %v4951 = vrot.slane %v4950, 4
    %v4953 = vshll.u32 %v4938, 16
    %v4955 = vrot.slane %v4953, 5
    %v4956 = vsel %vm528, %v4951, %v4955
    %v4957 = vshrl.u32 %v4938, 16
    %v4959 = vrot.slane %v4957, 4
    %v4960 = vor.u32 %v4959, %v4955
    %v4961 = vrot.slane %v4960, 4
    %v4963 = vshll.u32 %v4939, 16
    %v4965 = vrot.slane %v4963, 5
    %v4966 = vsel %vm528, %v4961, %v4965
    %v4968 = vshrl.u32 %v4940, 16
    %v4970 = vrot.slane %v4968, 4
    %v4971 = vshll.u32 %v4940, 16
    %v4973 = vrot.slane %v4971, 5
    %v4974 = vor.u32 %v4970, %v4973
    %v4975 = vrot.slane %v4974, 4
    %v4977 = vshll.u32 %v4941, 16
    %v4979 = vrot.slane %v4977, 5
    %v4980 = vsel %vm528, %v4975, %v4979
    %v4981 = vshrl.u32 %v4941, 16
    %v4983 = vrot.slane %v4981, 4
    %v4984 = vor.u32 %v4983, %v4979
    %v4985 = vrot.slane %v4984, 4
    %v4987 = vshll.u32 %v4942, 16
    %v4989 = vrot.slane %v4987, 5
    %v4990 = vsel %vm528, %v4985, %v4989
    %s4991 = scalar_lea.vmem %s11, 24
    %v4992 = vld [vmem:[%s4991] sm:$0xf]
    %v4993 = vunpack.c.l.b16 %v4956
    %v4994 = vunpack.c.l.b16 %v4966
    %v4995 = vunpack.c.l.b16 %v4980
    %v4996 = vunpack.c.l.b16 %v4990
    %v4997 = vpack.c.b16 %v4994, %v4993
    %v4998 = vpack.c.b16 %v4996, %v4995
    %v5000 = vsel %vm1036, %v4997, 0
    %v5003 = vsel %vm1036, %v4998, 0
    %v5006 = vsel %vm1043, %v4992, 0
    %5008 = vmatpush.bf16.msra.mxu0 0
    %5009 = vmatpush.bf16.msra.mxu0 0
    %5010 = vmatpush.bf16.msra.mxu0 0
    %5011 = vmatpush.bf16.msra.mxu0 0
    %5012 = vmatpush.bf16.msra.mxu0 0
    %5013 = vmatpush.bf16.msra.mxu0 0
    %5014 = vmatpush.bf16.msra.mxu0 0
    %5015 = vmatpush.bf16.msra.mxu0 %v5006
    %5016 = vmatmul.bf16.gmra.mxu0 %v5000
    %v5017 = vpop.f32.mrf.mxu0
    %v5018 = vadd.f32 0.0, %v5017
    %v5019 = vpop.f32.mrf.mxu0
    %v5020 = vadd.f32 0.0, %v5019
    %5021 = vmatmul.bf16.gmra.mxu0 %v5003
    %v5022 = vpop.f32.mrf.mxu0
    %v5023 = vadd.f32 0.0, %v5022
    %v5024 = vpop.f32.mrf.mxu0
    %v5025 = vadd.f32 0.0, %v5024
    %5026 = vdwg.mxu0
    %v5027 = vadd.f32 %v4933, %v5018
    %v5028 = vadd.f32 %v4934, %v5020
    %v5029 = vadd.f32 %v4935, %v5023
    %v5030 = vadd.f32 %v4936, %v5025
    %v5031 = vld [vmem:[#allocation2 + $0x4] sm:$0xe]
    %v5032 = vld [vmem:[#allocation2 + $0x14] sm:$0xe]
    %v5039 = vrot.slane %v5031, 5
    %v5040 = vrot.slane %v5039, 4
    %v5041 = vrot.slane %v4938, 5
    %v5042 = vsel %vm627, %v5040, %v5041
    %v5043 = vrot.slane %v5041, 4
    %v5044 = vrot.slane %v4939, 5
    %v5045 = vsel %vm627, %v5043, %v5044
    %v5046 = vrot.slane %v5032, 5
    %v5047 = vrot.slane %v5046, 4
    %v5048 = vrot.slane %v4941, 5
    %v5049 = vsel %vm627, %v5047, %v5048
    %v5050 = vrot.slane %v5048, 4
    %v5051 = vrot.slane %v4942, 5
    %v5052 = vsel %vm627, %v5050, %v5051
    %s5053 = scalar_lea.vmem %s11, 28
    %v5054 = vld [vmem:[%s5053] sm:$0xf]
    %v5055 = vunpack.c.l.b16 %v5042
    %v5056 = vunpack.c.l.b16 %v5045
    %v5057 = vunpack.c.l.b16 %v5049
    %v5058 = vunpack.c.l.b16 %v5052
    %v5059 = vpack.c.b16 %v5056, %v5055
    %v5060 = vpack.c.b16 %v5058, %v5057
    %v5062 = vsel %vm1036, %v5059, 0
    %v5065 = vsel %vm1036, %v5060, 0
    %v5068 = vsel %vm1043, %v5054, 0
    %5070 = vmatpush.bf16.msra.mxu0 0
    %5071 = vmatpush.bf16.msra.mxu0 0
    %5072 = vmatpush.bf16.msra.mxu0 0
    %5073 = vmatpush.bf16.msra.mxu0 0
    %5074 = vmatpush.bf16.msra.mxu0 0
    %5075 = vmatpush.bf16.msra.mxu0 0
    %5076 = vmatpush.bf16.msra.mxu0 0
    %5077 = vmatpush.bf16.msra.mxu0 %v5068
    %5078 = vmatmul.bf16.gmra.mxu0 %v5062
    %v5079 = vpop.f32.mrf.mxu0
    %v5080 = vadd.f32 0.0, %v5079
    %v5081 = vpop.f32.mrf.mxu0
    %v5082 = vadd.f32 0.0, %v5081
    %5083 = vmatmul.bf16.gmra.mxu0 %v5065
    %v5084 = vpop.f32.mrf.mxu0
    %v5085 = vadd.f32 0.0, %v5084
    %v5086 = vpop.f32.mrf.mxu0
    %v5087 = vadd.f32 0.0, %v5086
    %5088 = vdwg.mxu0
    %v5089 = vadd.f32 %v5027, %v5080
    %v5090 = vadd.f32 %v5028, %v5082
    %v5091 = vadd.f32 %v5029, %v5085
    %v5092 = vadd.f32 %v5030, %v5087
    %v5093 = vld [vmem:[#allocation2 + $0xc] sm:$0x3]
    %v5094 = vld [vmem:[#allocation2 + $0x1c] sm:$0x3]
    %v5096 = vshrl.u32 %v5031, 16
    %v5098 = vrot.slane %v5096, 5
    %v5099 = vshll.u32 %v5031, 16
    %v5101 = vrot.slane %v5099, 6
    %v5102 = vor.u32 %v5098, %v5101
    %v5103 = vrot.slane %v5102, 4
    %v5104 = vrot.slane %v4957, 5
    %v5105 = vrot.slane %v4953, 6
    %v5106 = vor.u32 %v5104, %v5105
    %v5107 = vsel %vm90, %v5103, %v5106
    %v5108 = vrot.slane %v5106, 4
    %v5110 = vshrl.u32 %v5093, 16
    %v5112 = vrot.slane %v5110, 5
    %v5113 = vshll.u32 %v5093, 16
    %v5115 = vrot.slane %v5113, 6
    %v5116 = vor.u32 %v5112, %v5115
    %v5117 = vsel %vm90, %v5108, %v5116
    %v5119 = vshrl.u32 %v5032, 16
    %v5121 = vrot.slane %v5119, 5
    %v5122 = vshll.u32 %v5032, 16
    %v5124 = vrot.slane %v5122, 6
    %v5125 = vor.u32 %v5121, %v5124
    %v5126 = vrot.slane %v5125, 4
    %v5127 = vrot.slane %v4981, 5
    %v5128 = vrot.slane %v4977, 6
    %v5129 = vor.u32 %v5127, %v5128
    %v5130 = vsel %vm90, %v5126, %v5129
    %v5131 = vrot.slane %v5129, 4
    %v5133 = vshrl.u32 %v5094, 16
    %v5135 = vrot.slane %v5133, 5
    %v5136 = vshll.u32 %v5094, 16
    %v5138 = vrot.slane %v5136, 6
    %v5139 = vor.u32 %v5135, %v5138
    %v5140 = vsel %vm90, %v5131, %v5139
    %s5141 = scalar_lea.vmem %s11, 32
    %v5142 = vld [vmem:[%s5141] sm:$0xf]
    %v5143 = vunpack.c.l.b16 %v5107
    %v5144 = vunpack.c.l.b16 %v5117
    %v5145 = vunpack.c.l.b16 %v5130
    %v5146 = vunpack.c.l.b16 %v5140
    %v5147 = vpack.c.b16 %v5144, %v5143
    %v5148 = vpack.c.b16 %v5146, %v5145
    %v5150 = vsel %vm1036, %v5147, 0
    %v5153 = vsel %vm1036, %v5148, 0
    %v5156 = vsel %vm1043, %v5142, 0
    %5158 = vmatpush.bf16.msra.mxu0 0
    %5159 = vmatpush.bf16.msra.mxu0 0
    %5160 = vmatpush.bf16.msra.mxu0 0
    %5161 = vmatpush.bf16.msra.mxu0 0
    %5162 = vmatpush.bf16.msra.mxu0 0
    %5163 = vmatpush.bf16.msra.mxu0 0
    %5164 = vmatpush.bf16.msra.mxu0 0
    %5165 = vmatpush.bf16.msra.mxu0 %v5156
    %5166 = vmatmul.bf16.gmra.mxu0 %v5150
    %v5167 = vpop.f32.mrf.mxu0
    %v5168 = vadd.f32 0.0, %v5167
    %v5169 = vpop.f32.mrf.mxu0
    %v5170 = vadd.f32 0.0, %v5169
    %5171 = vmatmul.bf16.gmra.mxu0 %v5153
    %v5172 = vpop.f32.mrf.mxu0
    %v5173 = vadd.f32 0.0, %v5172
    %v5174 = vpop.f32.mrf.mxu0
    %v5175 = vadd.f32 0.0, %v5174
    %5176 = vdwg.mxu0
    %v5177 = vadd.f32 %v5089, %v5168
    %v5178 = vadd.f32 %v5090, %v5170
    %v5179 = vadd.f32 %v5091, %v5173
    %v5180 = vadd.f32 %v5092, %v5175
    %v5181 = vld [vmem:[#allocation2 + $0x4] sm:$0xc]
    %v5182 = vld [vmem:[#allocation2 + $0x14] sm:$0xc]
    %v5187 = vrot.slane %v5181, 6
    %v5188 = vrot.slane %v5187, 4
    %v5189 = vrot.slane %v4938, 6
    %v5190 = vsel %vm158, %v5188, %v5189
    %v5191 = vrot.slane %v5189, 4
    %v5192 = vrot.slane %v5093, 6
    %v5193 = vsel %vm158, %v5191, %v5192
    %v5194 = vrot.slane %v5182, 6
    %v5195 = vrot.slane %v5194, 4
    %v5196 = vrot.slane %v4941, 6
    %v5197 = vsel %vm158, %v5195, %v5196
    %v5198 = vrot.slane %v5196, 4
    %v5199 = vrot.slane %v5094, 6
    %v5200 = vsel %vm158, %v5198, %v5199
    %s5201 = scalar_lea.vmem %s11, 36
    %v5202 = vld [vmem:[%s5201] sm:$0xf]
    %v5203 = vunpack.c.l.b16 %v5190
    %v5204 = vunpack.c.l.b16 %v5193
    %v5205 = vunpack.c.l.b16 %v5197
    %v5206 = vunpack.c.l.b16 %v5200
    %v5207 = vpack.c.b16 %v5204, %v5203
    %v5208 = vpack.c.b16 %v5206, %v5205
    %v5210 = vsel %vm1036, %v5207, 0
    %v5213 = vsel %vm1036, %v5208, 0
    %v5216 = vsel %vm1043, %v5202, 0
    %5218 = vmatpush.bf16.msra.mxu0 0
    %5219 = vmatpush.bf16.msra.mxu0 0
    %5220 = vmatpush.bf16.msra.mxu0 0
    %5221 = vmatpush.bf16.msra.mxu0 0
    %5222 = vmatpush.bf16.msra.mxu0 0
    %5223 = vmatpush.bf16.msra.mxu0 0
    %5224 = vmatpush.bf16.msra.mxu0 0
    %5225 = vmatpush.bf16.msra.mxu0 %v5216
    %5226 = vmatmul.bf16.gmra.mxu0 %v5210
    %v5227 = vpop.f32.mrf.mxu0
    %v5228 = vadd.f32 0.0, %v5227
    %v5229 = vpop.f32.mrf.mxu0
    %v5230 = vadd.f32 0.0, %v5229
    %5231 = vmatmul.bf16.gmra.mxu0 %v5213
    %v5232 = vpop.f32.mrf.mxu0
    %v5233 = vadd.f32 0.0, %v5232
    %v5234 = vpop.f32.mrf.mxu0
    %v5235 = vadd.f32 0.0, %v5234
    %5236 = vdwg.mxu0
    %v5237 = vadd.f32 %v5177, %v5228
    %v5238 = vadd.f32 %v5178, %v5230
    %v5239 = vadd.f32 %v5179, %v5233
    %v5240 = vadd.f32 %v5180, %v5235
    %v5241 = vld [vmem:[#allocation2 + $0xc] sm:$0x7]
    %v5242 = vld [vmem:[#allocation2 + $0x1c] sm:$0x7]
    %v5244 = vshrl.u32 %v5181, 16
    %v5246 = vrot.slane %v5244, 6
    %v5247 = vshll.u32 %v5181, 16
    %v5249 = vrot.slane %v5247, 7
    %v5250 = vor.u32 %v5246, %v5249
    %v5251 = vrot.slane %v5250, 4
    %v5252 = vrot.slane %v4957, 6
    %v5253 = vrot.slane %v4953, 7
    %v5254 = vor.u32 %v5252, %v5253
    %v5255 = vsel %vm249, %v5251, %v5254
    %v5256 = vrot.slane %v5254, 4
    %v5258 = vshrl.u32 %v5241, 16
    %v5260 = vrot.slane %v5258, 6
    %v5261 = vshll.u32 %v5241, 16
    %v5263 = vrot.slane %v5261, 7
    %v5264 = vor.u32 %v5260, %v5263
    %v5265 = vsel %vm249, %v5256, %v5264
    %v5267 = vshrl.u32 %v5182, 16
    %v5269 = vrot.slane %v5267, 6
    %v5270 = vshll.u32 %v5182, 16
    %v5272 = vrot.slane %v5270, 7
    %v5273 = vor.u32 %v5269, %v5272
    %v5274 = vrot.slane %v5273, 4
    %v5275 = vrot.slane %v4981, 6
    %v5276 = vrot.slane %v4977, 7
    %v5277 = vor.u32 %v5275, %v5276
    %v5278 = vsel %vm249, %v5274, %v5277
    %v5279 = vrot.slane %v5277, 4
    %v5281 = vshrl.u32 %v5242, 16
    %v5283 = vrot.slane %v5281, 6
    %v5284 = vshll.u32 %v5242, 16
    %v5286 = vrot.slane %v5284, 7
    %v5287 = vor.u32 %v5283, %v5286
    %v5288 = vsel %vm249, %v5279, %v5287
    %s5289 = scalar_lea.vmem %s11, 40
    %v5290 = vld [vmem:[%s5289] sm:$0xf]
    %v5291 = vunpack.c.l.b16 %v5255
    %v5292 = vunpack.c.l.b16 %v5265
    %v5293 = vunpack.c.l.b16 %v5278
    %v5294 = vunpack.c.l.b16 %v5288
    %v5295 = vpack.c.b16 %v5292, %v5291
    %v5296 = vpack.c.b16 %v5294, %v5293
    %v5298 = vsel %vm1036, %v5295, 0
    %v5301 = vsel %vm1036, %v5296, 0
    %v5304 = vsel %vm1043, %v5290, 0
    %5306 = vmatpush.bf16.msra.mxu0 0
    %5307 = vmatpush.bf16.msra.mxu0 0
    %5308 = vmatpush.bf16.msra.mxu0 0
    %5309 = vmatpush.bf16.msra.mxu0 0
    %5310 = vmatpush.bf16.msra.mxu0 0
    %5311 = vmatpush.bf16.msra.mxu0 0
    %5312 = vmatpush.bf16.msra.mxu0 0
    %5313 = vmatpush.bf16.msra.mxu0 %v5304
    %5314 = vmatmul.bf16.gmra.mxu0 %v5298
    %v5315 = vpop.f32.mrf.mxu0
    %v5316 = vadd.f32 0.0, %v5315
    %v5317 = vpop.f32.mrf.mxu0
    %v5318 = vadd.f32 0.0, %v5317
    %5319 = vmatmul.bf16.gmra.mxu0 %v5301
    %v5320 = vpop.f32.mrf.mxu0
    %v5321 = vadd.f32 0.0, %v5320
    %v5322 = vpop.f32.mrf.mxu0
    %v5323 = vadd.f32 0.0, %v5322
    %5324 = vdwg.mxu0
    %v5325 = vadd.f32 %v5237, %v5316
    %v5326 = vadd.f32 %v5238, %v5318
    %v5327 = vadd.f32 %v5239, %v5321
    %v5328 = vadd.f32 %v5240, %v5323
    %v5329 = vld [vmem:[%s12] sm:$0x1]
    %v5331 = vperm.slane %v5329, 0
    %v5333 = vadd.f32 %v5325, %v5331
    %v5334 = vadd.f32 %v5326, %v5331
    %v5335 = vadd.f32 %v5327, %v5331
    %v5336 = vadd.f32 %v5328, %v5331
    %v5337 = vsel %vm181, %v5333, -inf
    %v5338 = vsel %vm181, %v5334, -inf
    %v5339 = vmax.f32 %v5337, %v5338
    %v5340 = vrot.slane %v5339, 4
    %v5341 = vmax.f32 %v5339, %v5340
    %v5342 = vrot.slane %v5341, 2
    %v5343 = vmax.f32 %v5341, %v5342
    %v5344 = vrot.slane %v5343, 1
    %v5345 = vmax.f32 %v5343, %v5344
    %v5346 = vsel %vm181, %v5335, -inf
    %v5347 = vsel %vm181, %v5336, -inf
    %v5348 = vmax.f32 %v5346, %v5347
    %v5349 = vrot.slane %v5348, 4
    %v5350 = vmax.f32 %v5348, %v5349
    %v5351 = vrot.slane %v5350, 2
    %v5352 = vmax.f32 %v5350, %v5351
    %v5353 = vrot.slane %v5352, 1
    %v5354 = vmax.f32 %v5352, %v5353
    %v5355 = vsub.f32 %v5333, %v5345
    %v5356 = vsub.f32 %v5334, %v5345
    %v5357 = vsub.f32 %v5335, %v5354
    %v5358 = vsub.f32 %v5336, %v5354
    %v5359 = vmul.f32 %v5355, 1.442695
    %v5360 = vpow.pop %v5359
    %v5361 = vmul.f32 %v5356, 1.442695
    %v5362 = vpow.pop %v5361
    %v5363 = vmul.f32 %v5357, 1.442695
    %v5364 = vpow.pop %v5363
    %v5365 = vmul.f32 %v5358, 1.442695
    %v5366 = vpow.pop %v5365
    %v5367 = vsel %vm181, %v5360, 0.0
    %v5368 = vsel %vm181, %v5362, 0.0
    %v5369 = vadd.f32 %v5367, %v5368
    %v5370 = vrot.slane %v5369, 4
    %v5371 = vadd.f32 %v5369, %v5370
    %v5372 = vrot.slane %v5371, 2
    %v5373 = vadd.f32 %v5371, %v5372
    %v5374 = vrot.slane %v5373, 1
    %v5375 = vadd.f32 %v5373, %v5374
    %v5376 = vsel %vm181, %v5364, 0.0
    %v5377 = vsel %vm181, %v5366, 0.0
    %v5378 = vadd.f32 %v5376, %v5377
    %v5379 = vrot.slane %v5378, 4
    %v5380 = vadd.f32 %v5378, %v5379
    %v5381 = vrot.slane %v5380, 2
    %v5382 = vadd.f32 %v5380, %v5381
    %v5383 = vrot.slane %v5382, 1
    %v5384 = vadd.f32 %v5382, %v5383
    %v5385 = vrcp.pop %v5375
    %v5386 = vmul.f32 %v5375, %v5385
    %v5387 = vsub.f32 1.0, %v5386
    %v5388 = vmul.f32 %v5385, %v5387
    %v5389 = vadd.f32 %v5385, %v5388
    %vm5390 = vweird.f32 %v5375
    %vm5391 = vweird.f32 %v5385
    %vm5392 = vmor %vm5390, %vm5391
    %v5393 = vsel %vm5392, %v5385, %v5389
    %v5394 = vand.u32 2147483647, %v5375
    %vm5395 = vcmp.eq.f32.partialorder %v5394, 8.507059e+37
    %v5396 = vand.u32 %v5375, 2147483648
    %v5397 = vor.u32 1.1754944e-38, %v5396
    %v5398 = vsel %vm5395, %v5397, %v5393
    %v5399 = vmul.f32 1.0, %v5398
    %v5400 = vrcp.pop %v5384
    %v5401 = vmul.f32 %v5384, %v5400
    %v5402 = vsub.f32 1.0, %v5401
    %v5403 = vmul.f32 %v5400, %v5402
    %v5404 = vadd.f32 %v5400, %v5403
    %vm5405 = vweird.f32 %v5384
    %vm5406 = vweird.f32 %v5400
    %vm5407 = vmor %vm5405, %vm5406
    %v5408 = vsel %vm5407, %v5400, %v5404
    %v5409 = vand.u32 2147483647, %v5384
    %vm5410 = vcmp.eq.f32.partialorder %v5409, 8.507059e+37
    %v5411 = vand.u32 %v5384, 2147483648
    %v5412 = vor.u32 1.1754944e-38, %v5411
    %v5413 = vsel %vm5410, %v5412, %v5408
    %v5414 = vmul.f32 1.0, %v5413
    %v5415 = vmul.f32 %v5360, %v5399
    %v5416 = vmul.f32 %v5362, %v5399
    %v5417 = vmul.f32 %v5364, %v5414
    %v5418 = vmul.f32 %v5366, %v5414
    %v5419 = vld [vmem:[%s0] sm:$0xf]
    %v5420 = vld [vmem:[%s0 + $0x4] sm:$0xf]
    %v5421 = vld [vmem:[%s0 + $0x8] sm:$0xf]
    %v5422 = vld [vmem:[%s0 + $0xc] sm:$0xf]
    %v5423 = vunpack.c.l.bf16 %v5419
    %v5424 = vunpack.c.l.bf16 %v5420
    %v5425 = vunpack.c.l.bf16 %v5421
    %v5426 = vunpack.c.l.bf16 %v5422
    %v5427 = vmul.f32 %v5415, %v5423
    %v5428 = vmul.f32 %v5416, %v5424
    %v5429 = vmul.f32 %v5417, %v5425
    %v5430 = vmul.f32 %v5418, %v5426
    %v5431 = vsel %vm181, %v5427, 0.0
    %v5432 = vsel %vm181, %v5428, 0.0
    %v5433 = vadd.f32 %v5431, %v5432
    %v5434 = vrot.slane %v5433, 4
    %v5435 = vadd.f32 %v5433, %v5434
    %v5436 = vrot.slane %v5435, 2
    %v5437 = vadd.f32 %v5435, %v5436
    %v5438 = vrot.slane %v5437, 1
    %v5439 = vadd.f32 %v5437, %v5438
    %v5440 = vsel %vm181, %v5429, 0.0
    %v5441 = vsel %vm181, %v5430, 0.0
    %v5442 = vadd.f32 %v5440, %v5441
    %v5443 = vrot.slane %v5442, 4
    %v5444 = vadd.f32 %v5442, %v5443
    %v5445 = vrot.slane %v5444, 2
    %v5446 = vadd.f32 %v5444, %v5445
    %v5447 = vrot.slane %v5446, 1
    %v5448 = vadd.f32 %v5446, %v5447
    %v5449 = vld [vmem:[%s13] sm:$0xf]
    %v5450 = vld [vmem:[%s14] sm:$0x1]
    %v5452 = vperm.slane %v5450, 0
    %vm5456 = vcmask 1041409
    %v5457 = vsel %vm5456, %v5448, %v5439
    %v5458 = vsel %vm181, %v5457, 0
    %v5461 = vsel %vm1043, %v5449, 0
    %5463 = vmatpush.msra.mxu0 0.0
    %5464 = vmatpush.msra.mxu0 0.0
    %5465 = vmatpush.msra.mxu0 0.0
    %5466 = vmatpush.msra.mxu0 0.0
    %5467 = vmatpush.msra.mxu0 0.0
    %5468 = vmatpush.msra.mxu0 0.0
    %5469 = vmatpush.msra.mxu0 0.0
    %5470 = vmatpush.msra.mxu0 0.0
    %5471 = vmatpush.msra.mxu0 0.0
    %5472 = vmatpush.msra.mxu0 0.0
    %5473 = vmatpush.msra.mxu0 0.0
    %5474 = vmatpush.msra.mxu0 0.0
    %5475 = vmatpush.msra.mxu0 0.0
    %5476 = vmatpush.msra.mxu0 0.0
    %5477 = vmatpush.msra.mxu0 0.0
    %5478 = vmatpush.msra.mxu0 %v5461
    %5479 = vmatmul.f32.gmra.mxu0 %v5458
    %v5480 = vpop.f32.mrf.mxu0
    %v5481 = vadd.f32 %v5452, %v5480
    %5482 = vdwg.mxu0
    %v5483 = vmul.f32 %v5481, 0.01
    %v5484 = vmax.f32 %v5481, %v5483
    %v5485 = vld [vmem:[%s15] sm:$0xff]
    %v5486 = vld [vmem:[%s15 + $0x8] sm:$0xff]
    %v5487 = vld [vmem:[%s15 + $0x10] sm:$0xff]
    %v5488 = vld [vmem:[%s15 + $0x18] sm:$0xff]
    %v5489 = vld [vmem:[%s16] sm:$0x1]
    %v5491 = vperm.slane %v5489, 0
    %v5494 = vsel %vm2776, %v5484, 0
    %5496 = vmatpush.msra.mxu0 0.0
    %5497 = vmatpush.msra.mxu0 0.0
    %5498 = vmatpush.msra.mxu0 0.0
    %5499 = vmatpush.msra.mxu0 0.0
    %5500 = vmatpush.msra.mxu0 0.0
    %5501 = vmatpush.msra.mxu0 0.0
    %5502 = vmatpush.msra.mxu0 0.0
    %5503 = vmatpush.msra.mxu0 0.0
    %5504 = vmatpush.msra.mxu0 0.0
    %5505 = vmatpush.msra.mxu0 0.0
    %5506 = vmatpush.msra.mxu0 0.0
    %5507 = vmatpush.msra.mxu0 0.0
    %5508 = vmatpush.msra.mxu0 %v5488
    %5509 = vmatpush.msra.mxu0 %v5487
    %5510 = vmatpush.msra.mxu0 %v5486
    %5511 = vmatpush.msra.mxu0 %v5485
    %5512 = vmatmul.f32.gmra.mxu0 %v5494
    %v5513 = vpop.f32.mrf.mxu0
    %v5514 = vadd.f32 %v5491, %v5513
    %5515 = vdwg.mxu0
    %v5516 = vmul.f32 %v5514, 0.01
    %v5517 = vmax.f32 %v5514, %v5516
    %v5518 = vld [vmem:[%s17] sm:$0xff]
    %v5519 = vld [vmem:[%s17 + $0x8] sm:$0xff]
    %v5520 = vld [vmem:[%s17 + $0x10] sm:$0xff]
    %v5521 = vld [vmem:[%s17 + $0x18] sm:$0xff]
    %v5522 = vld [vmem:[#allocation3] sm:$0x1]
    %v5524 = vperm.slane %v5522, 0
    %v5527 = vsel %vm2776, %v5517, 0
    %5529 = vmatpush.msra.mxu0 0.0
    %5530 = vmatpush.msra.mxu0 0.0
    %5531 = vmatpush.msra.mxu0 0.0
    %5532 = vmatpush.msra.mxu0 0.0
    %5533 = vmatpush.msra.mxu0 0.0
    %5534 = vmatpush.msra.mxu0 0.0
    %5535 = vmatpush.msra.mxu0 0.0
    %5536 = vmatpush.msra.mxu0 0.0
    %5537 = vmatpush.msra.mxu0 0.0
    %5538 = vmatpush.msra.mxu0 0.0
    %5539 = vmatpush.msra.mxu0 0.0
    %5540 = vmatpush.msra.mxu0 0.0
    %5541 = vmatpush.msra.mxu0 %v5521
    %5542 = vmatpush.msra.mxu0 %v5520
    %5543 = vmatpush.msra.mxu0 %v5519
    %5544 = vmatpush.msra.mxu0 %v5518
    %5545 = vmatmul.f32.gmra.mxu0 %v5527
    %v5546 = vpop.f32.mrf.mxu0
    %v5547 = vadd.f32 %v5524, %v5546
    %5548 = vdwg.mxu0
    %5550 = vxpose.xlu0.b32.start [1/16] %v5457, 128
    %5551 = vxpose.xlu0.b32.cont [2/16] 0.0, 128
    %5552 = vxpose.xlu0.b32.cont [3/16] 0.0, 128
    %5553 = vxpose.xlu0.b32.cont [4/16] 0.0, 128
    %5554 = vxpose.xlu0.b32.cont [5/16] 0.0, 128
    %5555 = vxpose.xlu0.b32.cont [6/16] 0.0, 128
    %5556 = vxpose.xlu0.b32.cont [7/16] 0.0, 128
    %5557 = vxpose.xlu0.b32.cont [8/16] 0.0, 128
    %5558 = vxpose.xlu0.b32.cont [9/16] 0.0, 128
    %5559 = vxpose.xlu0.b32.cont [10/16] 0.0, 128
    %5560 = vxpose.xlu0.b32.cont [11/16] 0.0, 128
    %5561 = vxpose.xlu0.b32.cont [12/16] 0.0, 128
    %5562 = vxpose.xlu0.b32.cont [13/16] 0.0, 128
    %5563 = vxpose.xlu0.b32.cont [14/16] 0.0, 128
    %5564 = vxpose.xlu0.b32.cont [15/16] 0.0, 128
    %5565 = vxpose.xlu0.b32.end [16/16] 0.0, 128
    %v5566 = vpop.trf.xlu0
    %v5567 = vpop.trf.xlu0
    %v5568 = vpop.trf.xlu0
    %v5569 = vpop.trf.xlu0
    %v5570 = vpop.trf.xlu0
    %v5571 = vpop.trf.xlu0
    %v5572 = vpop.trf.xlu0
    %v5573 = vpop.trf.xlu0
    %v5574 = vpop.trf.xlu0
    %v5575 = vpop.trf.xlu0
    %v5576 = vpop.trf.xlu0
    %v5577 = vpop.trf.xlu0
    %v5578 = vpop.trf.xlu0
    %v5579 = vpop.trf.xlu0
    %v5580 = vpop.trf.xlu0
    %v5581 = vpop.trf.xlu0
    %vm5582 = vcmask 11264
    %5583 = vst.msk [vmem:[%s19] sm:$0xf] %vm5582, %v5566
    %5584 = vxpose.xlu0.b32.start [1/16] %v5547, 128
    %5585 = vxpose.xlu0.b32.cont [2/16] 0.0, 128
    %5586 = vxpose.xlu0.b32.cont [3/16] 0.0, 128
    %5587 = vxpose.xlu0.b32.cont [4/16] 0.0, 128
    %5588 = vxpose.xlu0.b32.cont [5/16] 0.0, 128
    %5589 = vxpose.xlu0.b32.cont [6/16] 0.0, 128
    %5590 = vxpose.xlu0.b32.cont [7/16] 0.0, 128
    %5591 = vxpose.xlu0.b32.cont [8/16] 0.0, 128
    %5592 = vxpose.xlu0.b32.cont [9/16] 0.0, 128
    %5593 = vxpose.xlu0.b32.cont [10/16] 0.0, 128
    %5594 = vxpose.xlu0.b32.cont [11/16] 0.0, 128
    %5595 = vxpose.xlu0.b32.cont [12/16] 0.0, 128
    %5596 = vxpose.xlu0.b32.cont [13/16] 0.0, 128
    %5597 = vxpose.xlu0.b32.cont [14/16] 0.0, 128
    %5598 = vxpose.xlu0.b32.cont [15/16] 0.0, 128
    %5599 = vxpose.xlu0.b32.end [16/16] 0.0, 128
    %v5600 = vpop.trf.xlu0
    %v5601 = vpop.trf.xlu0
    %v5602 = vpop.trf.xlu0
    %v5603 = vpop.trf.xlu0
    %v5604 = vpop.trf.xlu0
    %v5605 = vpop.trf.xlu0
    %v5606 = vpop.trf.xlu0
    %v5607 = vpop.trf.xlu0
    %v5608 = vpop.trf.xlu0
    %v5609 = vpop.trf.xlu0
    %v5610 = vpop.trf.xlu0
    %v5611 = vpop.trf.xlu0
    %v5612 = vpop.trf.xlu0
    %v5613 = vpop.trf.xlu0
    %v5614 = vpop.trf.xlu0
    %v5615 = vpop.trf.xlu0
    %vm5616 = vcmask 8192
    %5617 = vst.msk [vmem:[#allocation4] sm:$0x1] %vm5616, %v5600
    // Predicated region
    $region78: #{tpu_custom_call.1} parent=1 // pred_check
      _
    $region79: #{tpu_custom_call.1} parent=1 // pred_check_branch
      %5619 = sbr.rel (0) target = $region81
    $region80: #{tpu_custom_call.1} parent=1 // pred_region
      _
    $region81: #{tpu_custom_call.1} parent=1 // pred_fallthru
      _
    // Predicated region
    $region82: #{tpu_custom_call.1} parent=1 // pred_check
      _
    $region83: #{tpu_custom_call.1} parent=1 // pred_check_branch
      %5621 = sbr.rel (0) target = $region85
    $region84: #{tpu_custom_call.1} parent=1 // pred_region
      %5623 = vsyncadd [#allocation5], 0
      %s5625 = sshll.u32 [#allocation4], 4
      %s5626 = int_to_ptr.vmem [resolvable:$true] %s5625
      %s5627 = sshll.u32 %s20, 4
      %s5628 = int_to_ptr.hbm [resolvable:$true] %s5627
      %5630 = dma.vmem_to_hbm [thread:$0]  %s5626, 16, %s5628, [#allocation5]
    $region85: #{tpu_custom_call.1} parent=1 // pred_fallthru
      _
    // Predicated region
    $region86: #{tpu_custom_call.1} parent=1 // pred_check
      _
    $region87: #{tpu_custom_call.1} parent=1 // pred_check_branch
      %5632 = sbr.rel (0) target = $region89
    $region88: #{tpu_custom_call.1} parent=1 // pred_region
      _
    $region89: #{tpu_custom_call.1} parent=1 // pred_fallthru
      _
    // Predicated region
    $region90: #{tpu_custom_call.1} parent=1 // pred_check
      _
    $region91: #{tpu_custom_call.1} parent=1 // pred_check_branch
      %5634 = sbr.rel (0) target = $region93
    $region92: #{tpu_custom_call.1} parent=1 // pred_region
      %5636 = dma.done [#allocation5], 16
    $region93: #{tpu_custom_call.1} parent=1 // pred_fallthru
      _
    %5637 = vsyncpa [#allocation5], 1

</llo_original>
